<compile_context>
chip_gen: v6e
topology: v6e:2x2x1
jax: 0.10.0
libtpu: 0.0.40
codegen_flags: <defaults>
</compile_context>

<pallas_src>
import jax
import jax.numpy as jnp
from jax.experimental import pallas as pl
from jax.experimental.pallas import tpu as pltpu

_INV_SQRT2 = 0.7071067811865476
_BN_EPS = 1e-5
_LANE = 128


def _round_up(x, m):
    return (x + m - 1) // m * m


def _gelu_exact(x):
    # nn.GELU() default: 0.5 * x * (1 + erf(x / sqrt(2)))
    return 0.5 * x * (1.0 + jax.lax.erf(x * _INV_SQRT2))


# ---------------------------------------------------------------- kernels ----
def _conv3x3_gelu_stats_kernel(x_ref, w_ref, scale_ref, shift_ref,
                               y_ref, stats_ref, xpad_ref):
    """Per image: y = gelu(conv3x3(scale*x + shift)), plus partial BN stats.

    x_ref     : (H, W, Cp)   bf16 unpadded input tile
    w_ref     : (9*Cp, Cp)   bf16 resident conv weights, (tap, cin)-major rows
    scale_ref : (1, Cp)      f32  fused per-channel affine of the previous BN
    shift_ref : (1, Cp)      f32  (identity for conv1)
    y_ref     : (H, W, Cp)   bf16 unpadded output tile (single full store)
    stats_ref : (2, Cp)      f32  [sum(y), sum((y - mean_img)^2)] per image
    xpad_ref  : (H+2, W+2, Cp) bf16 VMEM scratch carrying the 1-pixel zero halo
    """
    h, w, cp = x_ref.shape
    hp, wp = h + 2, w + 2

    # Fused affine in f32, result written into the scratch interior.  The halo
    # strips are re-zeroed every step (tiny VMEM stores; safe under megacore
    # grid splitting, unlike a program_id==0 one-time init).
    xf = x_ref[...].astype(jnp.float32)
    sc = scale_ref[...].reshape(1, 1, cp)
    sh = shift_ref[...].reshape(1, 1, cp)

    zrow = jnp.zeros((1, wp, cp), jnp.bfloat16)
    zcol = jnp.zeros((hp, 1, cp), jnp.bfloat16)
    xpad_ref[0:1, :, :] = zrow
    xpad_ref[hp - 1:hp, :, :] = zrow
    xpad_ref[:, 0:1, :] = zcol
    xpad_ref[:, wp - 1:wp, :] = zcol
    xpad_ref[1:h + 1, 1:w + 1, :] = (xf * sc + sh).astype(jnp.bfloat16)

    xin = xpad_ref[...]

    # 3x3 conv as ONE big-K matmul: (H*W, 9*Cp) @ (9*Cp, Cp), bf16 on the MXU
    # with f32 accumulation (no per-tap accumulator read-modify-write).
    taps = [xin[dy:dy + h, dx:dx + w, :].reshape(h * w, cp)
            for dy in range(3) for dx in range(3)]
    lhs = jnp.concatenate(taps, axis=1)                       # (H*W, 9*Cp) bf16
    acc = jnp.dot(lhs, w_ref[...], preferred_element_type=jnp.float32)

    y = _gelu_exact(acc)                                      # (H*W, Cp) f32

    # Per-image BN partials, centred on the per-image mean (Welford-style
    # combine happens outside the kernel -> no catastrophic cancellation).
    s = jnp.sum(y, axis=0, keepdims=True)                     # (1, Cp)
    yc = y - s * (1.0 / (h * w))
    ssq = jnp.sum(yc * yc, axis=0, keepdims=True)
    stats_ref[...] = jnp.concatenate([s, ssq], axis=0)

    # Single, unpadded, lane-dense bf16 store (no halo ever written to HBM).
    y_ref[...] = y.reshape(h, w, cp).astype(y_ref.dtype)


def _bn_residual_kernel(y_ref, scale_ref, shift_ref, id_ref, o_ref):
    """out = y * scale + shift + identity (final BN affine + residual add)."""
    _, _, cp = o_ref.shape
    sc = scale_ref[...].reshape(1, 1, cp)
    sh = shift_ref[...].reshape(1, 1, cp)
    o_ref[...] = y_ref[...].astype(jnp.float32) * sc + sh + id_ref[...]


# ------------------------------------------------------- VMEM budget helpers -
def _conv_vmem_bytes(h, w, cp):
    bf, f4 = 2, 4
    stream = h * w * cp * bf * 2 * 2                 # in + out tiles, 2x buffered
    resident = 9 * cp * cp * bf * 2 + 6 * cp * f4 * 2   # weights + affine + stats
    scratch = (h + 2) * (w + 2) * cp * bf
    lhs = h * w * 9 * cp * bf                        # fused-K matmul operand
    f32_tmp = 4 * h * w * cp * f4                    # acc / gelu / centred temps
    est = stream + resident + scratch + lhs + f32_tmp
    return max(min(2 * est + (8 << 20), 64 << 20), 16 << 20)


def _residual_vmem_bytes(h, w, cp):
    est = h * w * cp * (2 + 4 + 4) * 2 + 4 * cp * 4 * 2
    return max(min(2 * est + (8 << 20), 64 << 20), 16 << 20)


# ------------------------------------------------------------ pallas calls ---
def _conv_stage(x, w9, scale, shift):
    n, h, w, cp = x.shape
    return pl.pallas_call(
        _conv3x3_gelu_stats_kernel,
        grid=(n,),
        in_specs=[
            pl.BlockSpec((None, h, w, cp), lambda i: (i, 0, 0, 0)),
            pl.BlockSpec((9 * cp, cp), lambda i: (0, 0)),      # resident weights
            pl.BlockSpec((1, cp), lambda i: (0, 0)),           # resident scale
            pl.BlockSpec((1, cp), lambda i: (0, 0)),           # resident shift
        ],
        out_specs=[
            pl.BlockSpec((None, h, w, cp), lambda i: (i, 0, 0, 0)),
            pl.BlockSpec((None, 2, cp), lambda i: (i, 0, 0)),
        ],
        out_shape=[
            jax.ShapeDtypeStruct((n, h, w, cp), jnp.bfloat16),
            jax.ShapeDtypeStruct((n, 2, cp), jnp.float32),
        ],
        scratch_shapes=[pltpu.VMEM((h + 2, w + 2, cp), jnp.bfloat16)],
        compiler_params=pltpu.CompilerParams(
            dimension_semantics=("parallel",),
            vmem_limit_bytes=_conv_vmem_bytes(h, w, cp)),
    )(x, w9, scale, shift)


def _bn_residual(y, scale, shift, identity):
    n, h, w, cp = y.shape
    return pl.pallas_call(
        _bn_residual_kernel,
        grid=(n,),
        in_specs=[
            pl.BlockSpec((None, h, w, cp), lambda i: (i, 0, 0, 0)),
            pl.BlockSpec((1, cp), lambda i: (0, 0)),
            pl.BlockSpec((1, cp), lambda i: (0, 0)),
            pl.BlockSpec((None, h, w, cp), lambda i: (i, 0, 0, 0)),
        ],
        out_specs=pl.BlockSpec((None, h, w, cp), lambda i: (i, 0, 0, 0)),
        out_shape=jax.ShapeDtypeStruct((n, h, w, cp), jnp.float32),
        compiler_params=pltpu.CompilerParams(
            dimension_semantics=("parallel",),
            vmem_limit_bytes=_residual_vmem_bytes(h, w, cp)),
    )(y, scale, shift, identity)


# ---------------------------------------------------------------- JAX glue ---
def _prep_conv_w(w_oihw, cp):
    co, ci, kh, kw = w_oihw.shape
    wt = jnp.transpose(w_oihw, (2, 3, 1, 0))                  # (3, 3, Cin, Cout)
    wt = jnp.pad(wt, ((0, 0), (0, 0), (0, cp - ci), (0, cp - co)))
    return wt.reshape(kh * kw * cp, cp).astype(jnp.bfloat16)  # (9*Cp, Cp)


def _pad_vec(v, cp):
    return jnp.pad(v.astype(jnp.float32), (0, cp - v.shape[0]))


def _bn_scale_shift(stats, gamma_p, beta_p, pix_per_img):
    # stats: (n, 2, Cp) with [:,0]=sum(y), [:,1]=sum((y - mean_img)^2) per image.
    n = stats.shape[0]
    cnt_i = jnp.float32(pix_per_img)
    mean_i = stats[:, 0, :] / cnt_i                           # (n, Cp)
    mean = jnp.mean(mean_i, axis=0)                           # (Cp,)
    m2 = (jnp.sum(stats[:, 1, :], axis=0)
          + cnt_i * jnp.sum(jnp.square(mean_i - mean), axis=0))
    var = jnp.maximum(m2 / (cnt_i * n), 0.0)                  # biased variance
    scale = gamma_p * jax.lax.rsqrt(var + _BN_EPS)
    shift = beta_p - mean * scale
    return scale.reshape(1, -1), shift.reshape(1, -1)


def basic_block_forward(x_nchw, params):
    n, c, h, w = x_nchw.shape
    cp = _round_up(c, _LANE)

    x_nhwc = jnp.transpose(x_nchw, (0, 2, 3, 1)).astype(jnp.float32)
    x_cp = jnp.pad(x_nhwc, ((0, 0), (0, 0), (0, 0), (0, cp - c)))  # f32 identity
    x_bf = x_cp.astype(jnp.bfloat16)                               # conv1 input

    w1 = _prep_conv_w(params["conv1_w"], cp)
    w2 = _prep_conv_w(params["conv2_w"], cp)
    g1, b1 = _pad_vec(params["bn1_gamma"], cp), _pad_vec(params["bn1_beta"], cp)
    g2, b2 = _pad_vec(params["bn2_gamma"], cp), _pad_vec(params["bn2_beta"], cp)

    one = jnp.ones((1, cp), jnp.float32)
    zero = jnp.zeros((1, cp), jnp.float32)

    # stage 1: y1 = gelu(conv1(x)) + per-image centred BN1 partials
    y1, stats1 = _conv_stage(x_bf, w1, one, zero)
    scale1, shift1 = _bn_scale_shift(stats1, g1, b1, h * w)

    # stage 2: conv2 consumes bn1(y1); the bn1 affine is fused into the kernel
    y2, stats2 = _conv_stage(y1, w2, scale1, shift1)
    scale2, shift2 = _bn_scale_shift(stats2, g2, b2, h * w)

    # final: out = bn2(y2) + identity
    out_p = _bn_residual(y2, scale2, shift2, x_cp)
    return jnp.transpose(out_p[..., :c], (0, 3, 1, 2))             # back to NCHW


# --------------------------------------------------------- pure-JAX reference
def _reference(x_nchw, params):
    def conv(x, w):
        return jax.lax.conv_general_dilated(
            x, w, window_strides=(1, 1), padding=((1, 1), (1, 1)),
            dimension_numbers=("NCHW", "OIHW", "NCHW"),
            precision=jax.lax.Precision.HIGHEST)

    def bn(x, gamma, beta):
        mean = jnp.mean(x, axis=(0, 2, 3), keepdims=True)
        var = jnp.mean(jnp.square(x - mean), axis=(0, 2, 3), keepdims=True)
        return ((x - mean) * jax.lax.rsqrt(var + _BN_EPS)
                * gamma.reshape(1, -1, 1, 1) + beta.reshape(1, -1, 1, 1))

    out = conv(x_nchw, params["conv1_w"])
    out = jax.nn.gelu(out, approximate=False)
    out = bn(out, params["bn1_gamma"], params["bn1_beta"])
    out = conv(out, params["conv2_w"])
    out = jax.nn.gelu(out, approximate=False)
    out = bn(out, params["bn2_gamma"], params["bn2_beta"])
    return out + x_nchw


# -------------------------------------------------------------------- main ---
if __name__ == "__main__":
    # Small shapes: N=2, inplanes=planes=4, H=W=16 (no downsample => in==out ch).
    N, C, H, W = 2, 4, 16, 16

    key = jax.random.PRNGKey(0)
    kx, k1, k2 = jax.random.split(key, 3)

    x = jax.random.normal(kx, (N, C, H, W), dtype=jnp.float32)
    params = {
        "conv1_w": 0.1 * jax.random.normal(k1, (C, C, 3, 3), dtype=jnp.float32),
        "conv2_w": 0.1 * jax.random.normal(k2, (C, C, 3, 3), dtype=jnp.float32),
        "bn1_gamma": jnp.ones((C,), jnp.float32),   # PyTorch BatchNorm2d defaults
        "bn1_beta": jnp.zeros((C,), jnp.float32),
        "bn2_gamma": jnp.ones((C,), jnp.float32),
        "bn2_beta": jnp.zeros((C,), jnp.float32),
    }

    out = jax.block_until_ready(jax.jit(basic_block_forward)(x, params))
    ref = jax.block_until_ready(_reference(x, params))

    assert out.shape == (N, C, H, W), out.shape
    # Kernel runs bf16 MXU matmuls with f32 accumulation and stores bf16
    # inter-stage activations; tolerance sized for that vs the f32 reference.
    assert jnp.allclose(out, ref, rtol=5e-2, atol=8e-2), float(
        jnp.max(jnp.abs(out - ref)))

    print("KERNEL_OK")
</pallas_src>

<mosaic_0001>
module attributes {stable_mosaic.version = 11 : i64} {
  func.func @_conv3x3_gelu_stats_kernel(%arg0: i32, %arg1: memref<1x16x16x128xbf16, #tpu.memory_space<vmem>>, %arg2: memref<1152x128xbf16, #tpu.memory_space<vmem>>, %arg3: memref<1x128xf32, #tpu.memory_space<vmem>>, %arg4: memref<1x128xf32, #tpu.memory_space<vmem>>, %arg5: memref<1x16x16x128xbf16, #tpu.memory_space<vmem>>, %arg6: memref<1x2x128xf32, #tpu.memory_space<vmem>>, %arg7: memref<18x18x128xbf16, #tpu.memory_space<vmem>>) attributes {dimension_semantics = [#tpu.dimension_semantics<parallel>], iteration_bounds = array<i64: 2>, scalar_prefetch = 0 : i64, scratch_operands = 1 : i64, tpu.core_type = #tpu.core_type<tc>, window_params = [{transform_indices = @transform_0, window_bounds = array<i64: 1, 16, 16, 128>}, {pipeline_mode = #tpu.pipeline_mode<synchronous>, transform_indices = @transform_1, window_bounds = array<i64: 1152, 128>}, {pipeline_mode = #tpu.pipeline_mode<synchronous>, transform_indices = @transform_2, window_bounds = array<i64: 1, 128>}, {pipeline_mode = #tpu.pipeline_mode<synchronous>, transform_indices = @transform_3, window_bounds = array<i64: 1, 128>}, {transform_indices = @transform_4, window_bounds = array<i64: 1, 16, 16, 128>}, {transform_indices = @transform_5, window_bounds = array<i64: 1, 2, 128>}]} {
    %c0 = arith.constant 0 : index
    %c0_0 = arith.constant 0 : index
    %c0_1 = arith.constant 0 : index
    %c0_2 = arith.constant 0 : index
    %0 = vector.load %arg1[%c0, %c0_0, %c0_1, %c0_2] : memref<1x16x16x128xbf16, #tpu.memory_space<vmem>>, vector<1x16x16x128xbf16>
    %1 = vector.shape_cast %0 : vector<1x16x16x128xbf16> to vector<16x16x128xbf16>
    %2 = arith.extf %1 : vector<16x16x128xbf16> to vector<16x16x128xf32>
    %c0_3 = arith.constant 0 : index
    %c0_4 = arith.constant 0 : index
    %3 = vector.load %arg3[%c0_3, %c0_4] : memref<1x128xf32, #tpu.memory_space<vmem>>, vector<1x128xf32>
    %4 = vector.shape_cast %3 : vector<1x128xf32> to vector<1x1x128xf32>
    %c0_5 = arith.constant 0 : index
    %c0_6 = arith.constant 0 : index
    %5 = vector.load %arg4[%c0_5, %c0_6] : memref<1x128xf32, #tpu.memory_space<vmem>>, vector<1x128xf32>
    %6 = vector.shape_cast %5 : vector<1x128xf32> to vector<1x1x128xf32>
    %cst = arith.constant 0.000000e+00 : bf16
    %7 = vector.broadcast %cst : bf16 to vector<1x18x128xbf16>
    %cst_7 = arith.constant 0.000000e+00 : bf16
    %8 = vector.broadcast %cst_7 : bf16 to vector<18x1x128xbf16>
    %c0_8 = arith.constant 0 : index
    %c0_9 = arith.constant 0 : index
    %c0_10 = arith.constant 0 : index
    %9 = vector.load %arg7[%c0_8, %c0_9, %c0_10] : memref<18x18x128xbf16, #tpu.memory_space<vmem>>, vector<1x18x128xbf16>
    tpu.vector_store %arg7[%c0_8, %c0_9, %c0_10], %7 {strides = array<i32>} : memref<18x18x128xbf16, #tpu.memory_space<vmem>>, vector<1x18x128xbf16>,
    %c17 = arith.constant 17 : index
    %c0_11 = arith.constant 0 : index
    %c0_12 = arith.constant 0 : index
    %10 = vector.load %arg7[%c17, %c0_11, %c0_12] : memref<18x18x128xbf16, #tpu.memory_space<vmem>>, vector<1x18x128xbf16>
    tpu.vector_store %arg7[%c17, %c0_11, %c0_12], %7 {strides = array<i32>} : memref<18x18x128xbf16, #tpu.memory_space<vmem>>, vector<1x18x128xbf16>,
    %c0_13 = arith.constant 0 : index
    %c0_14 = arith.constant 0 : index
    %c0_15 = arith.constant 0 : index
    %11 = vector.load %arg7[%c0_13, %c0_14, %c0_15] : memref<18x18x128xbf16, #tpu.memory_space<vmem>>, vector<18x1x128xbf16>
    tpu.vector_store %arg7[%c0_13, %c0_14, %c0_15], %8 {strides = array<i32>} : memref<18x18x128xbf16, #tpu.memory_space<vmem>>, vector<18x1x128xbf16>,
    %c0_16 = arith.constant 0 : index
    %c17_17 = arith.constant 17 : index
    %c0_18 = arith.constant 0 : index
    %12 = vector.load %arg7[%c0_16, %c17_17, %c0_18] : memref<18x18x128xbf16, #tpu.memory_space<vmem>>, vector<18x1x128xbf16>
    tpu.vector_store %arg7[%c0_16, %c17_17, %c0_18], %8 {strides = array<i32>} : memref<18x18x128xbf16, #tpu.memory_space<vmem>>, vector<18x1x128xbf16>,
    %13 = vector.broadcast %4 : vector<1x1x128xf32> to vector<16x16x128xf32>
    %14 = arith.mulf %2, %13 : vector<16x16x128xf32>
    %15 = vector.broadcast %6 : vector<1x1x128xf32> to vector<16x16x128xf32>
    %16 = arith.addf %14, %15 : vector<16x16x128xf32>
    %17 = arith.truncf %16 : vector<16x16x128xf32> to vector<16x16x128xbf16>
    %c1 = arith.constant 1 : index
    %c1_19 = arith.constant 1 : index
    %c0_20 = arith.constant 0 : index
    %18 = vector.load %arg7[%c1, %c1_19, %c0_20] : memref<18x18x128xbf16, #tpu.memory_space<vmem>>, vector<16x16x128xbf16>
    tpu.vector_store %arg7[%c1, %c1_19, %c0_20], %17 {strides = array<i32>} : memref<18x18x128xbf16, #tpu.memory_space<vmem>>, vector<16x16x128xbf16>,
    %c0_21 = arith.constant 0 : index
    %c0_22 = arith.constant 0 : index
    %c0_23 = arith.constant 0 : index
    %19 = vector.load %arg7[%c0_21, %c0_22, %c0_23] : memref<18x18x128xbf16, #tpu.memory_space<vmem>>, vector<18x18x128xbf16>
    %20 = vector.extract_strided_slice %19 {offsets = [0, 0, 0], sizes = [16, 16, 128], strides = [1, 1, 1]} : vector<18x18x128xbf16> to vector<16x16x128xbf16>
    %21 = vector.shape_cast %20 : vector<16x16x128xbf16> to vector<256x128xbf16>
    %22 = vector.extract_strided_slice %19 {offsets = [0, 1, 0], sizes = [16, 16, 128], strides = [1, 1, 1]} : vector<18x18x128xbf16> to vector<16x16x128xbf16>
    %23 = vector.shape_cast %22 : vector<16x16x128xbf16> to vector<256x128xbf16>
    %24 = vector.extract_strided_slice %19 {offsets = [0, 2, 0], sizes = [16, 16, 128], strides = [1, 1, 1]} : vector<18x18x128xbf16> to vector<16x16x128xbf16>
    %25 = vector.shape_cast %24 : vector<16x16x128xbf16> to vector<256x128xbf16>
    %26 = vector.extract_strided_slice %19 {offsets = [1, 0, 0], sizes = [16, 16, 128], strides = [1, 1, 1]} : vector<18x18x128xbf16> to vector<16x16x128xbf16>
    %27 = vector.shape_cast %26 : vector<16x16x128xbf16> to vector<256x128xbf16>
    %28 = vector.extract_strided_slice %19 {offsets = [1, 1, 0], sizes = [16, 16, 128], strides = [1, 1, 1]} : vector<18x18x128xbf16> to vector<16x16x128xbf16>
    %29 = vector.shape_cast %28 : vector<16x16x128xbf16> to vector<256x128xbf16>
    %30 = vector.extract_strided_slice %19 {offsets = [1, 2, 0], sizes = [16, 16, 128], strides = [1, 1, 1]} : vector<18x18x128xbf16> to vector<16x16x128xbf16>
    %31 = vector.shape_cast %30 : vector<16x16x128xbf16> to vector<256x128xbf16>
    %32 = vector.extract_strided_slice %19 {offsets = [2, 0, 0], sizes = [16, 16, 128], strides = [1, 1, 1]} : vector<18x18x128xbf16> to vector<16x16x128xbf16>
    %33 = vector.shape_cast %32 : vector<16x16x128xbf16> to vector<256x128xbf16>
    %34 = vector.extract_strided_slice %19 {offsets = [2, 1, 0], sizes = [16, 16, 128], strides = [1, 1, 1]} : vector<18x18x128xbf16> to vector<16x16x128xbf16>
    %35 = vector.shape_cast %34 : vector<16x16x128xbf16> to vector<256x128xbf16>
    %36 = vector.extract_strided_slice %19 {offsets = [2, 2, 0], sizes = [16, 16, 128], strides = [1, 1, 1]} : vector<18x18x128xbf16> to vector<16x16x128xbf16>
    %37 = vector.shape_cast %36 : vector<16x16x128xbf16> to vector<256x128xbf16>
    %38 = tpu.concatenate %21, %23, %25, %27, %29, %31, %33, %35, %37 in 1 : vector<256x128xbf16>, vector<256x128xbf16>, vector<256x128xbf16>, vector<256x128xbf16>, vector<256x128xbf16>, vector<256x128xbf16>, vector<256x128xbf16>, vector<256x128xbf16>, vector<256x128xbf16> -> vector<256x1152xbf16>
    %c0_24 = arith.constant 0 : index
    %c0_25 = arith.constant 0 : index
    %39 = vector.load %arg2[%c0_24, %c0_25] : memref<1152x128xbf16, #tpu.memory_space<vmem>>, vector<1152x128xbf16>
    %cst_26 = arith.constant dense<0.000000e+00> : vector<256x128xf32>
    %40 = tpu.matmul %38, %39, %cst_26 {dimension_numbers = #tpu.dot_dimension_numbers<[1], [0], [0], [1], [0, 0, 1, 1], [], []>} : vector<256x1152xbf16>, vector<1152x128xbf16>, vector<256x128xf32> -> vector<256x128xf32>
    %cst_27 = arith.constant 5.000000e-01 : f32
    %41 = vector.broadcast %cst_27 : f32 to vector<256x128xf32>
    %42 = arith.mulf %41, %40 : vector<256x128xf32>
    %cst_28 = arith.constant 0.707106769 : f32
    %43 = vector.broadcast %cst_28 : f32 to vector<256x128xf32>
    %44 = arith.mulf %40, %43 : vector<256x128xf32>
    %45 = math.erf %44 : vector<256x128xf32>
    %cst_29 = arith.constant 1.000000e+00 : f32
    %46 = vector.broadcast %cst_29 : f32 to vector<256x128xf32>
    %47 = arith.addf %46, %45 : vector<256x128xf32>
    %48 = arith.mulf %42, %47 : vector<256x128xf32>
    %cst_30 = arith.constant dense<0.000000e+00> : vector<128xf32>
    %49 = vector.multi_reduction <add>, %48, %cst_30 [0] : vector<256x128xf32> to vector<128xf32>
    %50 = vector.shape_cast %49 : vector<128xf32> to vector<1x128xf32>
    %cst_31 = arith.constant 3.906250e-03 : f32
    %51 = vector.broadcast %cst_31 : f32 to vector<1x128xf32>
    %52 = arith.mulf %50, %51 : vector<1x128xf32>
    %53 = vector.broadcast %52 : vector<1x128xf32> to vector<256x128xf32>
    %54 = arith.subf %48, %53 : vector<256x128xf32>
    %55 = arith.mulf %54, %54 : vector<256x128xf32>
    %cst_32 = arith.constant dense<0.000000e+00> : vector<128xf32>
    %56 = vector.multi_reduction <add>, %55, %cst_32 [0] : vector<256x128xf32> to vector<128xf32>
    %57 = vector.shape_cast %56 : vector<128xf32> to vector<1x128xf32>
    %58 = tpu.concatenate %50, %57 in 0 : vector<1x128xf32>, vector<1x128xf32> -> vector<2x128xf32>
    %c0_33 = arith.constant 0 : index
    %c0_34 = arith.constant 0 : index
    %c0_35 = arith.constant 0 : index
    %59 = vector.load %arg6[%c0_33, %c0_34, %c0_35] : memref<1x2x128xf32, #tpu.memory_space<vmem>>, vector<1x2x128xf32>
    %60 = vector.shape_cast %59 : vector<1x2x128xf32> to vector<2x128xf32>
    %61 = vector.shape_cast %58 : vector<2x128xf32> to vector<1x2x128xf32>
    tpu.vector_store %arg6[%c0_33, %c0_34, %c0_35], %61 {strides = array<i32>} : memref<1x2x128xf32, #tpu.memory_space<vmem>>, vector<1x2x128xf32>,
    %62 = vector.shape_cast %48 : vector<256x128xf32> to vector<16x16x128xf32>
    %63 = arith.truncf %62 : vector<16x16x128xf32> to vector<16x16x128xbf16>
    %c0_36 = arith.constant 0 : index
    %c0_37 = arith.constant 0 : index
    %c0_38 = arith.constant 0 : index
    %c0_39 = arith.constant 0 : index
    %64 = vector.load %arg5[%c0_36, %c0_37, %c0_38, %c0_39] : memref<1x16x16x128xbf16, #tpu.memory_space<vmem>>, vector<1x16x16x128xbf16>
    %65 = vector.shape_cast %64 : vector<1x16x16x128xbf16> to vector<16x16x128xbf16>
    %66 = vector.shape_cast %63 : vector<16x16x128xbf16> to vector<1x16x16x128xbf16>
    tpu.vector_store %arg5[%c0_36, %c0_37, %c0_38, %c0_39], %66 {strides = array<i32>} : memref<1x16x16x128xbf16, #tpu.memory_space<vmem>>, vector<1x16x16x128xbf16>,
    return
  }
  func.func @transform_0(%arg0: i32) -> (i32, i32, i32, i32) {
    %c0_i32 = arith.constant 0 : i32
    %c0_i32_0 = arith.constant 0 : i32
    %c0_i32_1 = arith.constant 0 : i32
    %c0_i32_2 = arith.constant 0 : i32
    return %arg0, %c0_i32, %c0_i32_0, %c0_i32_1 : i32, i32, i32, i32
  }
  func.func @transform_1(%arg0: i32) -> (i32, i32) {
    %c0_i32 = arith.constant 0 : i32
    %c0_i32_0 = arith.constant 0 : i32
    %c0_i32_1 = arith.constant 0 : i32
    return %c0_i32, %c0_i32_0 : i32, i32
  }
  func.func @transform_2(%arg0: i32) -> (i32, i32) {
    %c0_i32 = arith.constant 0 : i32
    %c0_i32_0 = arith.constant 0 : i32
    %c0_i32_1 = arith.constant 0 : i32
    return %c0_i32, %c0_i32_0 : i32, i32
  }
  func.func @transform_3(%arg0: i32) -> (i32, i32) {
    %c0_i32 = arith.constant 0 : i32
    %c0_i32_0 = arith.constant 0 : i32
    %c0_i32_1 = arith.constant 0 : i32
    return %c0_i32, %c0_i32_0 : i32, i32
  }
  func.func @transform_4(%arg0: i32) -> (i32, i32, i32, i32) {
    %c0_i32 = arith.constant 0 : i32
    %c0_i32_0 = arith.constant 0 : i32
    %c0_i32_1 = arith.constant 0 : i32
    %c0_i32_2 = arith.constant 0 : i32
    return %arg0, %c0_i32, %c0_i32_0, %c0_i32_1 : i32, i32, i32, i32
  }
  func.func @transform_5(%arg0: i32) -> (i32, i32, i32) {
    %c0_i32 = arith.constant 0 : i32
    %c0_i32_0 = arith.constant 0 : i32
    %c0_i32_1 = arith.constant 0 : i32
    return %arg0, %c0_i32, %c0_i32_0 : i32, i32, i32
  }
}

module attributes {stable_mosaic.version = 11 : i64} {
  func.func @_bn_residual_kernel(%arg0: i32, %arg1: memref<1x16x16x128xbf16, #tpu.memory_space<vmem>>, %arg2: memref<1x128xf32, #tpu.memory_space<vmem>>, %arg3: memref<1x128xf32, #tpu.memory_space<vmem>>, %arg4: memref<1x16x16x128xf32, #tpu.memory_space<vmem>>, %arg5: memref<1x16x16x128xf32, #tpu.memory_space<vmem>>) attributes {dimension_semantics = [#tpu.dimension_semantics<parallel>], iteration_bounds = array<i64: 2>, scalar_prefetch = 0 : i64, scratch_operands = 0 : i64, tpu.core_type = #tpu.core_type<tc>, window_params = [{transform_indices = @transform_0, window_bounds = array<i64: 1, 16, 16, 128>}, {pipeline_mode = #tpu.pipeline_mode<synchronous>, transform_indices = @transform_1, window_bounds = array<i64: 1, 128>}, {pipeline_mode = #tpu.pipeline_mode<synchronous>, transform_indices = @transform_2, window_bounds = array<i64: 1, 128>}, {transform_indices = @transform_3, window_bounds = array<i64: 1, 16, 16, 128>}, {transform_indices = @transform_4, window_bounds = array<i64: 1, 16, 16, 128>}]} {
    %c0 = arith.constant 0 : index
    %c0_0 = arith.constant 0 : index
    %0 = vector.load %arg2[%c0, %c0_0] : memref<1x128xf32, #tpu.memory_space<vmem>>, vector<1x128xf32>
    %1 = vector.shape_cast %0 : vector<1x128xf32> to vector<1x1x128xf32>
    %c0_1 = arith.constant 0 : index
    %c0_2 = arith.constant 0 : index
    %2 = vector.load %arg3[%c0_1, %c0_2] : memref<1x128xf32, #tpu.memory_space<vmem>>, vector<1x128xf32>
    %3 = vector.shape_cast %2 : vector<1x128xf32> to vector<1x1x128xf32>
    %c0_3 = arith.constant 0 : index
    %c0_4 = arith.constant 0 : index
    %c0_5 = arith.constant 0 : index
    %c0_6 = arith.constant 0 : index
    %4 = vector.load %arg1[%c0_3, %c0_4, %c0_5, %c0_6] : memref<1x16x16x128xbf16, #tpu.memory_space<vmem>>, vector<1x16x16x128xbf16>
    %5 = vector.shape_cast %4 : vector<1x16x16x128xbf16> to vector<16x16x128xbf16>
    %6 = arith.extf %5 : vector<16x16x128xbf16> to vector<16x16x128xf32>
    %7 = vector.broadcast %1 : vector<1x1x128xf32> to vector<16x16x128xf32>
    %8 = arith.mulf %6, %7 : vector<16x16x128xf32>
    %9 = vector.broadcast %3 : vector<1x1x128xf32> to vector<16x16x128xf32>
    %10 = arith.addf %8, %9 : vector<16x16x128xf32>
    %c0_7 = arith.constant 0 : index
    %c0_8 = arith.constant 0 : index
    %c0_9 = arith.constant 0 : index
    %c0_10 = arith.constant 0 : index
    %11 = vector.load %arg4[%c0_7, %c0_8, %c0_9, %c0_10] : memref<1x16x16x128xf32, #tpu.memory_space<vmem>>, vector<1x16x16x128xf32>
    %12 = vector.shape_cast %11 : vector<1x16x16x128xf32> to vector<16x16x128xf32>
    %13 = arith.addf %10, %12 : vector<16x16x128xf32>
    %c0_11 = arith.constant 0 : index
    %c0_12 = arith.constant 0 : index
    %c0_13 = arith.constant 0 : index
    %c0_14 = arith.constant 0 : index
    %14 = vector.load %arg5[%c0_11, %c0_12, %c0_13, %c0_14] : memref<1x16x16x128xf32, #tpu.memory_space<vmem>>, vector<1x16x16x128xf32>
    %15 = vector.shape_cast %14 : vector<1x16x16x128xf32> to vector<16x16x128xf32>
    %16 = vector.shape_cast %13 : vector<16x16x128xf32> to vector<1x16x16x128xf32>
    tpu.vector_store %arg5[%c0_11, %c0_12, %c0_13, %c0_14], %16 {strides = array<i32>} : memref<1x16x16x128xf32, #tpu.memory_space<vmem>>, vector<1x16x16x128xf32>,
    return
  }
  func.func @transform_0(%arg0: i32) -> (i32, i32, i32, i32) {
    %c0_i32 = arith.constant 0 : i32
    %c0_i32_0 = arith.constant 0 : i32
    %c0_i32_1 = arith.constant 0 : i32
    %c0_i32_2 = arith.constant 0 : i32
    return %arg0, %c0_i32, %c0_i32_0, %c0_i32_1 : i32, i32, i32, i32
  }
  func.func @transform_1(%arg0: i32) -> (i32, i32) {
    %c0_i32 = arith.constant 0 : i32
    %c0_i32_0 = arith.constant 0 : i32
    %c0_i32_1 = arith.constant 0 : i32
    return %c0_i32, %c0_i32_0 : i32, i32
  }
  func.func @transform_2(%arg0: i32) -> (i32, i32) {
    %c0_i32 = arith.constant 0 : i32
    %c0_i32_0 = arith.constant 0 : i32
    %c0_i32_1 = arith.constant 0 : i32
    return %c0_i32, %c0_i32_0 : i32, i32
  }
  func.func @transform_3(%arg0: i32) -> (i32, i32, i32, i32) {
    %c0_i32 = arith.constant 0 : i32
    %c0_i32_0 = arith.constant 0 : i32
    %c0_i32_1 = arith.constant 0 : i32
    %c0_i32_2 = arith.constant 0 : i32
    return %arg0, %c0_i32, %c0_i32_0, %c0_i32_1 : i32, i32, i32, i32
  }
  func.func @transform_4(%arg0: i32) -> (i32, i32, i32, i32) {
    %c0_i32 = arith.constant 0 : i32
    %c0_i32_0 = arith.constant 0 : i32
    %c0_i32_1 = arith.constant 0 : i32
    %c0_i32_2 = arith.constant 0 : i32
    return %arg0, %c0_i32, %c0_i32_0, %c0_i32_1 : i32, i32, i32, i32
  }
}

</mosaic_0001>

<llo_original>
// kernel: basic_block_forward.5
$region0: #{basic_block_forward.5}
  #allocation0 [shape = 'u32[]', space=smem, size = 0x4, offset = 0x4, fixed_abs, tag = 'smem constant byte address 0x4 - core index']
  #allocation1 [shape = 'u32[144,128]{1,0:T(1,128)}', space=vmem, size = 0x12000, scoped, tag = 'internal scratch']
  %s0 = inlined_call_operand.vmem [shape: bf16[2,16,16,128], index: 0, kind: input, shape index: {}]
  %s1 = inlined_call_operand.vmem [shape: f32[1,128], index: 1, kind: input, shape index: {}]
  %s2 = inlined_call_operand.vmem [shape: f32[1,128], index: 2, kind: input, shape index: {}]
  %s3 = inlined_call_operand.vmem [shape: f32[2,16,16,128], index: 3, kind: input, shape index: {}]
  %s4 = inlined_call_operand.vmem [shape: f32[2,16,16,128], index: 4, kind: output, shape index: {}]
  %s5 = sld [smem:[#allocation0]]
  $region49: #{basic_block_forward.5} parent=0
    _
  %s7 = ssub.s32 1, %s5
  %s8 = scalar_select 0, %s7, %s5
  loop: start=0, step=1, limit=4
  $region2: #{basic_block_forward.5} parent=0 // loop_pre_header
    _
  $region3: #{basic_block_forward.5} parent=0 // loop_header
    %s10 = sphi 0, %s14
    %p11 = scmp.ge.s32.totalorder %s10, 4
    %s20 = sphi 0, %s22
    %s23 = sphi 0, %s20
    %s24 = sphi 0, %s23
    %s40 = sphi 0, %s24
    %s44 = sphi 0, %s44
    %s46 = sphi 0, %s44
    %s47 = sphi 0, %s46
    %s61 = sphi 0, %s47
    %s65 = sphi 0, %s65
    %s67 = sphi 0, %s65
    %s68 = sphi 0, %s67
    %s82 = sphi 0, %s68
    %s88 = sphi 0, %s90
    %s91 = sphi 0, %s88
    %s92 = sphi 0, %s91
    %s108 = sphi 0, %s92
    %s114 = sphi 0, %s116
    %s117 = sphi 0, %s114
    %s118 = sphi 0, %s117
    %s134 = sphi 0, %s118
  $region4: #{basic_block_forward.5} parent=0 // loop_header_branch
    %13 = sbr.rel (%p11) target = $region8
  $region5: #{basic_block_forward.5} parent=0 // loop_body
    %s15 = ssub.s32 %s10, 1
    %s16 = ssub.s32 %s10, 2
    %s17 = sadd.s32 %s10, 1
    %s18 = ssub.s32 %s10, %s17
    %p19 = scmp.eq.s32.totalorder %s18, 0
    %s21 = sadd.s32 %s20, 1
    %s22 = scalar_select %p19, %s20, %s21
    %p25 = pneg %p19
    %p26 = scmp.eq.s32.totalorder %s10, 1
    %p27 = por %p25, %p26
    %p28 = scmp.ne.s32.totalorder %s20, %s23
    %p29 = scmp.eq.s32.totalorder %s10, 0
    %p30 = por %p28, %p29
    %p31 = scmp.ne.s32.totalorder %s20, %s23
    %p32 = scmp.eq.s32.totalorder %s15, 1
    %p33 = por %p31, %p32
    %p34 = scmp.ne.s32.totalorder %s23, %s24
    %p35 = scmp.eq.s32.totalorder %s15, 0
    %p36 = por %p34, %p35
    %p37 = scmp.ne.s32.totalorder %s23, %s24
    %p38 = scmp.eq.s32.totalorder %s16, 1
    %p39 = por %p37, %p38
    %p41 = scmp.ne.s32.totalorder %s24, %s40
    %p42 = scmp.eq.s32.totalorder %s16, 0
    %p43 = por %p41, %p42
    %s45 = sadd.s32 %s44, 1
    %p48 = scmp.eq.s32.totalorder %s10, 1
    %p49 = scmp.ne.s32.totalorder %s44, %s46
    %p50 = scmp.eq.s32.totalorder %s10, 0
    %p51 = por %p49, %p50
    %p52 = scmp.ne.s32.totalorder %s44, %s46
    %p53 = scmp.eq.s32.totalorder %s15, 1
    %p54 = por %p52, %p53
    %p55 = scmp.ne.s32.totalorder %s46, %s47
    %p56 = scmp.eq.s32.totalorder %s15, 0
    %p57 = por %p55, %p56
    %p58 = scmp.ne.s32.totalorder %s46, %s47
    %p59 = scmp.eq.s32.totalorder %s16, 1
    %p60 = por %p58, %p59
    %p62 = scmp.ne.s32.totalorder %s47, %s61
    %p63 = scmp.eq.s32.totalorder %s16, 0
    %p64 = por %p62, %p63
    %s66 = sadd.s32 %s65, 1
    %p69 = scmp.eq.s32.totalorder %s10, 1
    %p70 = scmp.ne.s32.totalorder %s65, %s67
    %p71 = scmp.eq.s32.totalorder %s10, 0
    %p72 = por %p70, %p71
    %p73 = scmp.ne.s32.totalorder %s65, %s67
    %p74 = scmp.eq.s32.totalorder %s15, 1
    %p75 = por %p73, %p74
    %p76 = scmp.ne.s32.totalorder %s67, %s68
    %p77 = scmp.eq.s32.totalorder %s15, 0
    %p78 = por %p76, %p77
    %p79 = scmp.ne.s32.totalorder %s67, %s68
    %p80 = scmp.eq.s32.totalorder %s16, 1
    %p81 = por %p79, %p80
    %p83 = scmp.ne.s32.totalorder %s68, %s82
    %p84 = scmp.eq.s32.totalorder %s16, 0
    %p85 = por %p83, %p84
    %s86 = ssub.s32 %s10, %s17
    %p87 = scmp.eq.s32.totalorder %s86, 0
    %s89 = sadd.s32 %s88, 1
    %s90 = scalar_select %p87, %s88, %s89
    %p93 = pneg %p87
    %p94 = scmp.eq.s32.totalorder %s10, 1
    %p95 = por %p93, %p94
    %p96 = scmp.ne.s32.totalorder %s88, %s91
    %p97 = scmp.eq.s32.totalorder %s10, 0
    %p98 = por %p96, %p97
    %p99 = scmp.ne.s32.totalorder %s88, %s91
    %p100 = scmp.eq.s32.totalorder %s15, 1
    %p101 = por %p99, %p100
    %p102 = scmp.ne.s32.totalorder %s91, %s92
    %p103 = scmp.eq.s32.totalorder %s15, 0
    %p104 = por %p102, %p103
    %p105 = scmp.ne.s32.totalorder %s91, %s92
    %p106 = scmp.eq.s32.totalorder %s16, 1
    %p107 = por %p105, %p106
    %p109 = scmp.ne.s32.totalorder %s92, %s108
    %p110 = scmp.eq.s32.totalorder %s16, 0
    %p111 = por %p109, %p110
    %s112 = ssub.s32 %s10, %s17
    %p113 = scmp.eq.s32.totalorder %s112, 0
    %s115 = sadd.s32 %s114, 1
    %s116 = scalar_select %p113, %s114, %s115
    %p119 = pneg %p113
    %p120 = scmp.eq.s32.totalorder %s10, 1
    %p121 = por %p119, %p120
    %p122 = scmp.ne.s32.totalorder %s114, %s117
    %p123 = scmp.eq.s32.totalorder %s10, 0
    %p124 = por %p122, %p123
    %p125 = scmp.ne.s32.totalorder %s114, %s117
    %p126 = scmp.eq.s32.totalorder %s15, 1
    %p127 = por %p125, %p126
    %p128 = scmp.ne.s32.totalorder %s117, %s118
    %p129 = scmp.eq.s32.totalorder %s15, 0
    %p130 = por %p128, %p129
    %p131 = scmp.ne.s32.totalorder %s117, %s118
    %p132 = scmp.eq.s32.totalorder %s16, 1
    %p133 = por %p131, %p132
    %p135 = scmp.ne.s32.totalorder %s118, %s134
    %p136 = scmp.eq.s32.totalorder %s16, 0
    %p137 = por %p135, %p136
    %p138 = scmp.le.s32.totalorder 1, %s10
    %p139 = scmp.lt.s32.totalorder %s10, 3
    %p140 = pnand %p138, %p139
    %p141 = pneg %p140
    // Predicated region
    $region9: #{basic_block_forward.5} parent=5 // pred_check
      _
    $region10: #{basic_block_forward.5} parent=5 // pred_check_branch
      %143 = sbr.rel (%p140) target = $region12
    $region11: #{basic_block_forward.5} parent=5 // pred_region
      %s144 = ssub.s32 %s10, 1
      // Predicated region
      $region13: #{basic_block_forward.5} parent=11 // pred_check
        %p145 = pneg %p57
      $region14: #{basic_block_forward.5} parent=11 // pred_check_branch
        %147 = sbr.rel (%p145) target = $region16
      $region15: #{basic_block_forward.5} parent=11 // pred_region
        _
      $region16: #{basic_block_forward.5} parent=11 // pred_fallthru
        _
      // Predicated region
      $region17: #{basic_block_forward.5} parent=11 // pred_check
        %p148 = pneg %p78
      $region18: #{basic_block_forward.5} parent=11 // pred_check_branch
        %150 = sbr.rel (%p148) target = $region20
      $region19: #{basic_block_forward.5} parent=11 // pred_region
        _
      $region20: #{basic_block_forward.5} parent=11 // pred_fallthru
        _
    $region12: #{basic_block_forward.5} parent=5 // pred_fallthru
      _
    %p151 = scmp.lt.s32.totalorder %s10, 2
    // Predicated region
    $region21: #{basic_block_forward.5} parent=5 // pred_check
      %p152 = pneg %p151
    $region22: #{basic_block_forward.5} parent=5 // pred_check_branch
      %154 = sbr.rel (%p152) target = $region24
    $region23: #{basic_block_forward.5} parent=5 // pred_region
      // Predicated region
      $region25: #{basic_block_forward.5} parent=23 // pred_check
        %p155 = pneg %p30
      $region26: #{basic_block_forward.5} parent=23 // pred_check_branch
        %157 = sbr.rel (%p155) target = $region28
      $region27: #{basic_block_forward.5} parent=23 // pred_region
        %p158 = scmp.lt.s32.totalorder %s10, 1
        %s159 = scalar_select %p158, %s10, 1
        %s160 = smul.addr %s159, 32
        %s161 = smul.addr %s160, 4
        %s162 = scalar_lea.vmem %s0, %s161
      $region28: #{basic_block_forward.5} parent=23 // pred_fallthru
        _
      // Predicated region
      $region29: #{basic_block_forward.5} parent=23 // pred_check
        %p163 = pneg %p98
      $region30: #{basic_block_forward.5} parent=23 // pred_check_branch
        %165 = sbr.rel (%p163) target = $region32
      $region31: #{basic_block_forward.5} parent=23 // pred_region
        %p166 = scmp.lt.s32.totalorder %s10, 1
        %s167 = scalar_select %p166, %s10, 1
        %s168 = smul.addr %s167, 32
        %s169 = smul.addr %s168, 8
        %s170 = scalar_lea.vmem %s3, %s169
      $region32: #{basic_block_forward.5} parent=23 // pred_fallthru
        _
    $region24: #{basic_block_forward.5} parent=5 // pred_fallthru
      _
    %p171 = scmp.le.s32.totalorder 1, %s10
    %p172 = scmp.lt.s32.totalorder %s10, 3
    %p173 = pnand %p171, %p172
    %p174 = pneg %p173
    // Predicated region
    $region33: #{basic_block_forward.5} parent=5 // pred_check
      _
    $region34: #{basic_block_forward.5} parent=5 // pred_check_branch
      %176 = sbr.rel (%p173) target = $region36
    $region35: #{basic_block_forward.5} parent=5 // pred_region
      %s177 = ssub.s32 %s10, 1
      %p178 = scmp.lt.s32.totalorder %s15, 1
      %s179 = scalar_select %p178, %s15, 1
      %s180 = smul.addr %s179, 32
      %s181 = smul.addr %s180, 4
      %s182 = scalar_lea.vmem %s0, %s181
      %p183 = pneg %p36
      %p184 = pneg %p33
      %p185 = pneg %p57
      %p186 = pneg %p54
      %p187 = pneg %p78
      %p188 = pneg %p75
      %p189 = scmp.lt.s32.totalorder %s15, 1
      %s190 = scalar_select %p189, %s15, 1
      %s191 = smul.addr %s190, 32
      %s192 = smul.addr %s191, 8
      %s193 = scalar_lea.vmem %s3, %s192
      %p194 = pneg %p104
      %p195 = pneg %p101
      %p196 = pneg %p130
      %p197 = pneg %p127
      %p198 = scmp.lt.s32.totalorder %s15, 1
      %s199 = scalar_select %p198, %s15, 1
      %s200 = smul.addr %s199, 32
      %s201 = smul.addr %s200, 8
      %s202 = scalar_lea.vmem %s4, %s201
      %p203 = scmp.lt.s32.totalorder %s15, 1
      %s204 = scalar_select %p203, %s15, 1
      %s205 = smul.addr %s204, 32
      %s206 = smul.addr %s205, 4
      %s207 = scalar_lea.vmem %s0, %s206
      %p208 = scmp.lt.s32.totalorder %s15, 1
      %s209 = scalar_select %p208, %s15, 1
      %s210 = smul.addr %s209, 32
      %s211 = smul.addr %s210, 8
      %s212 = scalar_lea.vmem %s3, %s211
      %p213 = scmp.lt.s32.totalorder %s15, 1
      %s214 = scalar_select %p213, %s15, 1
      %s215 = smul.addr %s214, 32
      %s216 = smul.addr %s215, 8
      %s217 = scalar_lea.vmem %s4, %s216
      %v218 = vld [vmem:[%s1] sm:$0x1]
      %v219 = vld [vmem:[%s2] sm:$0x1]
      %v220 = vld [vmem:[%s207] sm:$0xf]
      %v221 = vld [vmem:[%s207 + $0x4] sm:$0xf]
      %v222 = vld [vmem:[%s207 + $0x8] sm:$0xf]
      %v223 = vld [vmem:[%s207 + $0xc] sm:$0xf]
      %v224 = vld [vmem:[%s207 + $0x10] sm:$0xf]
      %v225 = vld [vmem:[%s207 + $0x14] sm:$0xf]
      %v226 = vld [vmem:[%s207 + $0x18] sm:$0xf]
      %v227 = vld [vmem:[%s207 + $0x1c] sm:$0xf]
      %v228 = vld [vmem:[%s207 + $0x20] sm:$0xf]
      %v229 = vld [vmem:[%s207 + $0x24] sm:$0xf]
      %v230 = vld [vmem:[%s207 + $0x28] sm:$0xf]
      %v231 = vld [vmem:[%s207 + $0x2c] sm:$0xf]
      %v232 = vld [vmem:[%s207 + $0x30] sm:$0xf]
      %v233 = vld [vmem:[%s207 + $0x34] sm:$0xf]
      %v234 = vld [vmem:[%s207 + $0x38] sm:$0xf]
      %v235 = vld [vmem:[%s207 + $0x3c] sm:$0xf]
      %v236 = vld [vmem:[%s207 + $0x40] sm:$0xf]
      %v237 = vld [vmem:[%s207 + $0x44] sm:$0xf]
      %v238 = vld [vmem:[%s207 + $0x48] sm:$0xf]
      %v239 = vld [vmem:[%s207 + $0x4c] sm:$0xf]
      %v240 = vld [vmem:[%s207 + $0x50] sm:$0xf]
      %v241 = vld [vmem:[%s207 + $0x54] sm:$0xf]
      %v242 = vld [vmem:[%s207 + $0x58] sm:$0xf]
      %v243 = vld [vmem:[%s207 + $0x5c] sm:$0xf]
      %v244 = vld [vmem:[%s207 + $0x60] sm:$0xf]
      %v245 = vld [vmem:[%s207 + $0x64] sm:$0xf]
      %v246 = vld [vmem:[%s207 + $0x68] sm:$0xf]
      %v247 = vld [vmem:[%s207 + $0x6c] sm:$0xf]
      %v248 = vld [vmem:[%s207 + $0x70] sm:$0xf]
      %v249 = vld [vmem:[%s207 + $0x74] sm:$0xf]
      %v250 = vld [vmem:[%s207 + $0x78] sm:$0xf]
      %v251 = vld [vmem:[%s207 + $0x7c] sm:$0xf]
      %v252 = vunpack.c.l.bf16 %v220
      %v253 = vunpack.c.l.bf16 %v221
      %v254 = vunpack.c.l.bf16 %v222
      %v255 = vunpack.c.l.bf16 %v223
      %v256 = vunpack.c.l.bf16 %v224
      %v257 = vunpack.c.l.bf16 %v225
      %v258 = vunpack.c.l.bf16 %v226
      %v259 = vunpack.c.l.bf16 %v227
      %v260 = vunpack.c.l.bf16 %v228
      %v261 = vunpack.c.l.bf16 %v229
      %v262 = vunpack.c.l.bf16 %v230
      %v263 = vunpack.c.l.bf16 %v231
      %v264 = vunpack.c.l.bf16 %v232
      %v265 = vunpack.c.l.bf16 %v233
      %v266 = vunpack.c.l.bf16 %v234
      %v267 = vunpack.c.l.bf16 %v235
      %v268 = vunpack.c.l.bf16 %v236
      %v269 = vunpack.c.l.bf16 %v237
      %v270 = vunpack.c.l.bf16 %v238
      %v271 = vunpack.c.l.bf16 %v239
      %v272 = vunpack.c.l.bf16 %v240
      %v273 = vunpack.c.l.bf16 %v241
      %v274 = vunpack.c.l.bf16 %v242
      %v275 = vunpack.c.l.bf16 %v243
      %v276 = vunpack.c.l.bf16 %v244
      %v277 = vunpack.c.l.bf16 %v245
      %v278 = vunpack.c.l.bf16 %v246
      %v279 = vunpack.c.l.bf16 %v247
      %v280 = vunpack.c.l.bf16 %v248
      %v281 = vunpack.c.l.bf16 %v249
      %v282 = vunpack.c.l.bf16 %v250
      %v283 = vunpack.c.l.bf16 %v251
      %v285 = vlaneseq
      %v286 = vshrl.u32 %v285, 7
      %v287 = vsub.s32 0, %v286
      %v288 = vrot.slane %v218, %v287
      %v290 = vmul.f32 %v252, %v288
      %v291 = vmul.f32 %v253, %v288
      %v292 = vmul.f32 %v254, %v288
      %v293 = vmul.f32 %v255, %v288
      %v294 = vmul.f32 %v256, %v288
      %v295 = vmul.f32 %v257, %v288
      %v296 = vmul.f32 %v258, %v288
      %v297 = vmul.f32 %v259, %v288
      %v298 = vmul.f32 %v260, %v288
      %v299 = vmul.f32 %v261, %v288
      %v300 = vmul.f32 %v262, %v288
      %v301 = vmul.f32 %v263, %v288
      %v302 = vmul.f32 %v264, %v288
      %v303 = vmul.f32 %v265, %v288
      %v304 = vmul.f32 %v266, %v288
      %v305 = vmul.f32 %v267, %v288
      %v306 = vmul.f32 %v268, %v288
      %v307 = vmul.f32 %v269, %v288
      %v308 = vmul.f32 %v270, %v288
      %v309 = vmul.f32 %v271, %v288
      %v310 = vmul.f32 %v272, %v288
      %v311 = vmul.f32 %v273, %v288
      %v312 = vmul.f32 %v274, %v288
      %v313 = vmul.f32 %v275, %v288
      %v314 = vmul.f32 %v276, %v288
      %v315 = vmul.f32 %v277, %v288
      %v316 = vmul.f32 %v278, %v288
      %v317 = vmul.f32 %v279, %v288
      %v318 = vmul.f32 %v280, %v288
      %v319 = vmul.f32 %v281, %v288
      %v320 = vmul.f32 %v282, %v288
      %v321 = vmul.f32 %v283, %v288
      %v323 = vlaneseq
      %v324 = vshrl.u32 %v323, 7
      %v325 = vsub.s32 0, %v324
      %v326 = vrot.slane %v219, %v325
      %v328 = vadd.f32 %v290, %v326
      %v329 = vadd.f32 %v291, %v326
      %v330 = vadd.f32 %v292, %v326
      %v331 = vadd.f32 %v293, %v326
      %v332 = vadd.f32 %v294, %v326
      %v333 = vadd.f32 %v295, %v326
      %v334 = vadd.f32 %v296, %v326
      %v335 = vadd.f32 %v297, %v326
      %v336 = vadd.f32 %v298, %v326
      %v337 = vadd.f32 %v299, %v326
      %v338 = vadd.f32 %v300, %v326
      %v339 = vadd.f32 %v301, %v326
      %v340 = vadd.f32 %v302, %v326
      %v341 = vadd.f32 %v303, %v326
      %v342 = vadd.f32 %v304, %v326
      %v343 = vadd.f32 %v305, %v326
      %v344 = vadd.f32 %v306, %v326
      %v345 = vadd.f32 %v307, %v326
      %v346 = vadd.f32 %v308, %v326
      %v347 = vadd.f32 %v309, %v326
      %v348 = vadd.f32 %v310, %v326
      %v349 = vadd.f32 %v311, %v326
      %v350 = vadd.f32 %v312, %v326
      %v351 = vadd.f32 %v313, %v326
      %v352 = vadd.f32 %v314, %v326
      %v353 = vadd.f32 %v315, %v326
      %v354 = vadd.f32 %v316, %v326
      %v355 = vadd.f32 %v317, %v326
      %v356 = vadd.f32 %v318, %v326
      %v357 = vadd.f32 %v319, %v326
      %v358 = vadd.f32 %v320, %v326
      %v359 = vadd.f32 %v321, %v326
      %v360 = vld [vmem:[%s212] sm:$0xff]
      %v361 = vld [vmem:[%s212 + $0x8] sm:$0xff]
      %v362 = vld [vmem:[%s212 + $0x10] sm:$0xff]
      %v363 = vld [vmem:[%s212 + $0x18] sm:$0xff]
      %v364 = vld [vmem:[%s212 + $0x20] sm:$0xff]
      %v365 = vld [vmem:[%s212 + $0x28] sm:$0xff]
      %v366 = vld [vmem:[%s212 + $0x30] sm:$0xff]
      %v367 = vld [vmem:[%s212 + $0x38] sm:$0xff]
      %v368 = vld [vmem:[%s212 + $0x40] sm:$0xff]
      %v369 = vld [vmem:[%s212 + $0x48] sm:$0xff]
      %v370 = vld [vmem:[%s212 + $0x50] sm:$0xff]
      %v371 = vld [vmem:[%s212 + $0x58] sm:$0xff]
      %v372 = vld [vmem:[%s212 + $0x60] sm:$0xff]
      %v373 = vld [vmem:[%s212 + $0x68] sm:$0xff]
      %v374 = vld [vmem:[%s212 + $0x70] sm:$0xff]
      %v375 = vld [vmem:[%s212 + $0x78] sm:$0xff]
      %v376 = vld [vmem:[%s212 + $0x80] sm:$0xff]
      %v377 = vld [vmem:[%s212 + $0x88] sm:$0xff]
      %v378 = vld [vmem:[%s212 + $0x90] sm:$0xff]
      %v379 = vld [vmem:[%s212 + $0x98] sm:$0xff]
      %v380 = vld [vmem:[%s212 + $0xa0] sm:$0xff]
      %v381 = vld [vmem:[%s212 + $0xa8] sm:$0xff]
      %v382 = vld [vmem:[%s212 + $0xb0] sm:$0xff]
      %v383 = vld [vmem:[%s212 + $0xb8] sm:$0xff]
      %v384 = vld [vmem:[%s212 + $0xc0] sm:$0xff]
      %v385 = vld [vmem:[%s212 + $0xc8] sm:$0xff]
      %v386 = vld [vmem:[%s212 + $0xd0] sm:$0xff]
      %v387 = vld [vmem:[%s212 + $0xd8] sm:$0xff]
      %v388 = vld [vmem:[%s212 + $0xe0] sm:$0xff]
      %v389 = vld [vmem:[%s212 + $0xe8] sm:$0xff]
      %v390 = vld [vmem:[%s212 + $0xf0] sm:$0xff]
      %v391 = vld [vmem:[%s212 + $0xf8] sm:$0xff]
      %v392 = vadd.f32 %v328, %v360
      %v393 = vadd.f32 %v329, %v361
      %v394 = vadd.f32 %v330, %v362
      %v395 = vadd.f32 %v331, %v363
      %v396 = vadd.f32 %v332, %v364
      %v397 = vadd.f32 %v333, %v365
      %v398 = vadd.f32 %v334, %v366
      %v399 = vadd.f32 %v335, %v367
      %v400 = vadd.f32 %v336, %v368
      %v401 = vadd.f32 %v337, %v369
      %v402 = vadd.f32 %v338, %v370
      %v403 = vadd.f32 %v339, %v371
      %v404 = vadd.f32 %v340, %v372
      %v405 = vadd.f32 %v341, %v373
      %v406 = vadd.f32 %v342, %v374
      %v407 = vadd.f32 %v343, %v375
      %v408 = vadd.f32 %v344, %v376
      %v409 = vadd.f32 %v345, %v377
      %v410 = vadd.f32 %v346, %v378
      %v411 = vadd.f32 %v347, %v379
      %v412 = vadd.f32 %v348, %v380
      %v413 = vadd.f32 %v349, %v381
      %v414 = vadd.f32 %v350, %v382
      %v415 = vadd.f32 %v351, %v383
      %v416 = vadd.f32 %v352, %v384
      %v417 = vadd.f32 %v353, %v385
      %v418 = vadd.f32 %v354, %v386
      %v419 = vadd.f32 %v355, %v387
      %v420 = vadd.f32 %v356, %v388
      %v421 = vadd.f32 %v357, %v389
      %v422 = vadd.f32 %v358, %v390
      %v423 = vadd.f32 %v359, %v391
      %424 = vst [vmem:[%s217] sm:$0xff] %v392
      %425 = vst [vmem:[%s217 + $0x8] sm:$0xff] %v393
      %426 = vst [vmem:[%s217 + $0x10] sm:$0xff] %v394
      %427 = vst [vmem:[%s217 + $0x18] sm:$0xff] %v395
      %428 = vst [vmem:[%s217 + $0x20] sm:$0xff] %v396
      %429 = vst [vmem:[%s217 + $0x28] sm:$0xff] %v397
      %430 = vst [vmem:[%s217 + $0x30] sm:$0xff] %v398
      %431 = vst [vmem:[%s217 + $0x38] sm:$0xff] %v399
      %432 = vst [vmem:[%s217 + $0x40] sm:$0xff] %v400
      %433 = vst [vmem:[%s217 + $0x48] sm:$0xff] %v401
      %434 = vst [vmem:[%s217 + $0x50] sm:$0xff] %v402
      %435 = vst [vmem:[%s217 + $0x58] sm:$0xff] %v403
      %436 = vst [vmem:[%s217 + $0x60] sm:$0xff] %v404
      %437 = vst [vmem:[%s217 + $0x68] sm:$0xff] %v405
      %438 = vst [vmem:[%s217 + $0x70] sm:$0xff] %v406
      %439 = vst [vmem:[%s217 + $0x78] sm:$0xff] %v407
      %440 = vst [vmem:[%s217 + $0x80] sm:$0xff] %v408
      %441 = vst [vmem:[%s217 + $0x88] sm:$0xff] %v409
      %442 = vst [vmem:[%s217 + $0x90] sm:$0xff] %v410
      %443 = vst [vmem:[%s217 + $0x98] sm:$0xff] %v411
      %444 = vst [vmem:[%s217 + $0xa0] sm:$0xff] %v412
      %445 = vst [vmem:[%s217 + $0xa8] sm:$0xff] %v413
      %446 = vst [vmem:[%s217 + $0xb0] sm:$0xff] %v414
      %447 = vst [vmem:[%s217 + $0xb8] sm:$0xff] %v415
      %448 = vst [vmem:[%s217 + $0xc0] sm:$0xff] %v416
      %449 = vst [vmem:[%s217 + $0xc8] sm:$0xff] %v417
      %450 = vst [vmem:[%s217 + $0xd0] sm:$0xff] %v418
      %451 = vst [vmem:[%s217 + $0xd8] sm:$0xff] %v419
      %452 = vst [vmem:[%s217 + $0xe0] sm:$0xff] %v420
      %453 = vst [vmem:[%s217 + $0xe8] sm:$0xff] %v421
      %454 = vst [vmem:[%s217 + $0xf0] sm:$0xff] %v422
      %455 = vst [vmem:[%s217 + $0xf8] sm:$0xff] %v423
      %p456 = scmp.lt.s32.totalorder %s15, 1
      %s457 = scalar_select %p456, %s15, 1
      %s458 = smul.addr %s457, 32
      %s459 = smul.addr %s458, 8
      %s460 = scalar_lea.vmem %s4, %s459
      // Predicated region
      $region37: #{basic_block_forward.5} parent=35 // pred_check
        %p461 = pneg %p127
      $region38: #{basic_block_forward.5} parent=35 // pred_check_branch
        %463 = sbr.rel (%p461) target = $region40
      $region39: #{basic_block_forward.5} parent=35 // pred_region
        _
      $region40: #{basic_block_forward.5} parent=35 // pred_fallthru
        _
    $region36: #{basic_block_forward.5} parent=5 // pred_fallthru
      _
    %p464 = scmp.le.s32.totalorder 2, %s10
    // Predicated region
    $region41: #{basic_block_forward.5} parent=5 // pred_check
      %p465 = pneg %p464
    $region42: #{basic_block_forward.5} parent=5 // pred_check_branch
      %467 = sbr.rel (%p465) target = $region44
    $region43: #{basic_block_forward.5} parent=5 // pred_region
      %s468 = ssub.s32 %s10, 2
      // Predicated region
      $region45: #{basic_block_forward.5} parent=43 // pred_check
        %p469 = pneg %p133
      $region46: #{basic_block_forward.5} parent=43 // pred_check_branch
        %471 = sbr.rel (%p469) target = $region48
      $region47: #{basic_block_forward.5} parent=43 // pred_region
        %p472 = scmp.lt.s32.totalorder %s16, 1
        %s473 = scalar_select %p472, %s16, 1
        %s474 = smul.addr %s473, 32
        %s475 = smul.addr %s474, 8
        %s476 = scalar_lea.vmem %s4, %s475
      $region48: #{basic_block_forward.5} parent=43 // pred_fallthru
        _
    $region44: #{basic_block_forward.5} parent=5 // pred_fallthru
      _
  $region6: #{basic_block_forward.5} parent=0 // loop_footer
    %s14 = sadd.s32 1, %s10
  $region7: #{basic_block_forward.5} parent=0 // loop_footer_branch
    %9 = sbr.rel target = $region3
  $region8: #{basic_block_forward.5} parent=0 // loop_exit
    _

// kernel: basic_block_forward.3
$region0: #{basic_block_forward.3}
  #allocation0 [shape = 'u32[]', space=smem, size = 0x4, offset = 0x4, fixed_abs, tag = 'smem constant byte address 0x4 - core index']
  #allocation1 [shape = 'u32[144,128]{1,0:T(1,128)}', space=vmem, size = 0x12000, scoped, tag = 'internal scratch']
  #allocation2 [shape = 'bf16[18,18,128]{2,1,0:T(8,128)(2,1)}', space=vmem, size = 0x1b000, scoped, tag = 'scratch operand']
  %s0 = inlined_call_operand.vmem [shape: bf16[2,16,16,128], index: 0, kind: input, shape index: {}]
  %s1 = inlined_call_operand.vmem [shape: bf16[1152,128], index: 1, kind: input, shape index: {}]
  %s2 = inlined_call_operand.vmem [shape: f32[1,128], index: 2, kind: input, shape index: {}]
  %s3 = inlined_call_operand.vmem [shape: f32[1,128], index: 3, kind: input, shape index: {}]
  %s4 = inlined_call_operand.vmem [shape: bf16[2,16,16,128], index: 4, kind: output, shape index: {0}]
  %s5 = inlined_call_operand.vmem [shape: f32[2,2,128], index: 5, kind: output, shape index: {1}]
  %6 = xla_tuple %s4, %s5
  %s7 = sld [smem:[#allocation0]]
  $region57: #{basic_block_forward.3} parent=0
    _
  %s9 = ssub.s32 1, %s7
  %s10 = scalar_select 0, %s9, %s7
  loop: start=0, step=1, limit=4
  $region2: #{basic_block_forward.3} parent=0 // loop_pre_header
    _
  $region3: #{basic_block_forward.3} parent=0 // loop_header
    %s12 = sphi 0, %s16
    %p13 = scmp.ge.s32.totalorder %s12, 4
    %s22 = sphi 0, %s24
    %s25 = sphi 0, %s22
    %s26 = sphi 0, %s25
    %s42 = sphi 0, %s26
    %s46 = sphi 0, %s46
    %s48 = sphi 0, %s46
    %s49 = sphi 0, %s48
    %s63 = sphi 0, %s49
    %s67 = sphi 0, %s67
    %s69 = sphi 0, %s67
    %s70 = sphi 0, %s69
    %s84 = sphi 0, %s70
    %s88 = sphi 0, %s88
    %s90 = sphi 0, %s88
    %s91 = sphi 0, %s90
    %s105 = sphi 0, %s91
    %s111 = sphi 0, %s113
    %s114 = sphi 0, %s111
    %s115 = sphi 0, %s114
    %s131 = sphi 0, %s115
    %s137 = sphi 0, %s139
    %s140 = sphi 0, %s137
    %s141 = sphi 0, %s140
    %s157 = sphi 0, %s141
  $region4: #{basic_block_forward.3} parent=0 // loop_header_branch
    %15 = sbr.rel (%p13) target = $region8
  $region5: #{basic_block_forward.3} parent=0 // loop_body
    %s17 = ssub.s32 %s12, 1
    %s18 = ssub.s32 %s12, 2
    %s19 = sadd.s32 %s12, 1
    %s20 = ssub.s32 %s12, %s19
    %p21 = scmp.eq.s32.totalorder %s20, 0
    %s23 = sadd.s32 %s22, 1
    %s24 = scalar_select %p21, %s22, %s23
    %p27 = pneg %p21
    %p28 = scmp.eq.s32.totalorder %s12, 1
    %p29 = por %p27, %p28
    %p30 = scmp.ne.s32.totalorder %s22, %s25
    %p31 = scmp.eq.s32.totalorder %s12, 0
    %p32 = por %p30, %p31
    %p33 = scmp.ne.s32.totalorder %s22, %s25
    %p34 = scmp.eq.s32.totalorder %s17, 1
    %p35 = por %p33, %p34
    %p36 = scmp.ne.s32.totalorder %s25, %s26
    %p37 = scmp.eq.s32.totalorder %s17, 0
    %p38 = por %p36, %p37
    %p39 = scmp.ne.s32.totalorder %s25, %s26
    %p40 = scmp.eq.s32.totalorder %s18, 1
    %p41 = por %p39, %p40
    %p43 = scmp.ne.s32.totalorder %s26, %s42
    %p44 = scmp.eq.s32.totalorder %s18, 0
    %p45 = por %p43, %p44
    %s47 = sadd.s32 %s46, 1
    %p50 = scmp.eq.s32.totalorder %s12, 1
    %p51 = scmp.ne.s32.totalorder %s46, %s48
    %p52 = scmp.eq.s32.totalorder %s12, 0
    %p53 = por %p51, %p52
    %p54 = scmp.ne.s32.totalorder %s46, %s48
    %p55 = scmp.eq.s32.totalorder %s17, 1
    %p56 = por %p54, %p55
    %p57 = scmp.ne.s32.totalorder %s48, %s49
    %p58 = scmp.eq.s32.totalorder %s17, 0
    %p59 = por %p57, %p58
    %p60 = scmp.ne.s32.totalorder %s48, %s49
    %p61 = scmp.eq.s32.totalorder %s18, 1
    %p62 = por %p60, %p61
    %p64 = scmp.ne.s32.totalorder %s49, %s63
    %p65 = scmp.eq.s32.totalorder %s18, 0
    %p66 = por %p64, %p65
    %s68 = sadd.s32 %s67, 1
    %p71 = scmp.eq.s32.totalorder %s12, 1
    %p72 = scmp.ne.s32.totalorder %s67, %s69
    %p73 = scmp.eq.s32.totalorder %s12, 0
    %p74 = por %p72, %p73
    %p75 = scmp.ne.s32.totalorder %s67, %s69
    %p76 = scmp.eq.s32.totalorder %s17, 1
    %p77 = por %p75, %p76
    %p78 = scmp.ne.s32.totalorder %s69, %s70
    %p79 = scmp.eq.s32.totalorder %s17, 0
    %p80 = por %p78, %p79
    %p81 = scmp.ne.s32.totalorder %s69, %s70
    %p82 = scmp.eq.s32.totalorder %s18, 1
    %p83 = por %p81, %p82
    %p85 = scmp.ne.s32.totalorder %s70, %s84
    %p86 = scmp.eq.s32.totalorder %s18, 0
    %p87 = por %p85, %p86
    %s89 = sadd.s32 %s88, 1
    %p92 = scmp.eq.s32.totalorder %s12, 1
    %p93 = scmp.ne.s32.totalorder %s88, %s90
    %p94 = scmp.eq.s32.totalorder %s12, 0
    %p95 = por %p93, %p94
    %p96 = scmp.ne.s32.totalorder %s88, %s90
    %p97 = scmp.eq.s32.totalorder %s17, 1
    %p98 = por %p96, %p97
    %p99 = scmp.ne.s32.totalorder %s90, %s91
    %p100 = scmp.eq.s32.totalorder %s17, 0
    %p101 = por %p99, %p100
    %p102 = scmp.ne.s32.totalorder %s90, %s91
    %p103 = scmp.eq.s32.totalorder %s18, 1
    %p104 = por %p102, %p103
    %p106 = scmp.ne.s32.totalorder %s91, %s105
    %p107 = scmp.eq.s32.totalorder %s18, 0
    %p108 = por %p106, %p107
    %s109 = ssub.s32 %s12, %s19
    %p110 = scmp.eq.s32.totalorder %s109, 0
    %s112 = sadd.s32 %s111, 1
    %s113 = scalar_select %p110, %s111, %s112
    %p116 = pneg %p110
    %p117 = scmp.eq.s32.totalorder %s12, 1
    %p118 = por %p116, %p117
    %p119 = scmp.ne.s32.totalorder %s111, %s114
    %p120 = scmp.eq.s32.totalorder %s12, 0
    %p121 = por %p119, %p120
    %p122 = scmp.ne.s32.totalorder %s111, %s114
    %p123 = scmp.eq.s32.totalorder %s17, 1
    %p124 = por %p122, %p123
    %p125 = scmp.ne.s32.totalorder %s114, %s115
    %p126 = scmp.eq.s32.totalorder %s17, 0
    %p127 = por %p125, %p126
    %p128 = scmp.ne.s32.totalorder %s114, %s115
    %p129 = scmp.eq.s32.totalorder %s18, 1
    %p130 = por %p128, %p129
    %p132 = scmp.ne.s32.totalorder %s115, %s131
    %p133 = scmp.eq.s32.totalorder %s18, 0
    %p134 = por %p132, %p133
    %s135 = ssub.s32 %s12, %s19
    %p136 = scmp.eq.s32.totalorder %s135, 0
    %s138 = sadd.s32 %s137, 1
    %s139 = scalar_select %p136, %s137, %s138
    %p142 = pneg %p136
    %p143 = scmp.eq.s32.totalorder %s12, 1
    %p144 = por %p142, %p143
    %p145 = scmp.ne.s32.totalorder %s137, %s140
    %p146 = scmp.eq.s32.totalorder %s12, 0
    %p147 = por %p145, %p146
    %p148 = scmp.ne.s32.totalorder %s137, %s140
    %p149 = scmp.eq.s32.totalorder %s17, 1
    %p150 = por %p148, %p149
    %p151 = scmp.ne.s32.totalorder %s140, %s141
    %p152 = scmp.eq.s32.totalorder %s17, 0
    %p153 = por %p151, %p152
    %p154 = scmp.ne.s32.totalorder %s140, %s141
    %p155 = scmp.eq.s32.totalorder %s18, 1
    %p156 = por %p154, %p155
    %p158 = scmp.ne.s32.totalorder %s141, %s157
    %p159 = scmp.eq.s32.totalorder %s18, 0
    %p160 = por %p158, %p159
    %p161 = scmp.le.s32.totalorder 1, %s12
    %p162 = scmp.lt.s32.totalorder %s12, 3
    %p163 = pnand %p161, %p162
    %p164 = pneg %p163
    // Predicated region
    $region9: #{basic_block_forward.3} parent=5 // pred_check
      _
    $region10: #{basic_block_forward.3} parent=5 // pred_check_branch
      %166 = sbr.rel (%p163) target = $region12
    $region11: #{basic_block_forward.3} parent=5 // pred_region
      %s167 = ssub.s32 %s12, 1
      // Predicated region
      $region13: #{basic_block_forward.3} parent=11 // pred_check
        %p168 = pneg %p59
      $region14: #{basic_block_forward.3} parent=11 // pred_check_branch
        %170 = sbr.rel (%p168) target = $region16
      $region15: #{basic_block_forward.3} parent=11 // pred_region
        _
      $region16: #{basic_block_forward.3} parent=11 // pred_fallthru
        _
      // Predicated region
      $region17: #{basic_block_forward.3} parent=11 // pred_check
        %p171 = pneg %p80
      $region18: #{basic_block_forward.3} parent=11 // pred_check_branch
        %173 = sbr.rel (%p171) target = $region20
      $region19: #{basic_block_forward.3} parent=11 // pred_region
        _
      $region20: #{basic_block_forward.3} parent=11 // pred_fallthru
        _
      // Predicated region
      $region21: #{basic_block_forward.3} parent=11 // pred_check
        %p174 = pneg %p101
      $region22: #{basic_block_forward.3} parent=11 // pred_check_branch
        %176 = sbr.rel (%p174) target = $region24
      $region23: #{basic_block_forward.3} parent=11 // pred_region
        _
      $region24: #{basic_block_forward.3} parent=11 // pred_fallthru
        _
    $region12: #{basic_block_forward.3} parent=5 // pred_fallthru
      _
    %p177 = scmp.lt.s32.totalorder %s12, 2
    // Predicated region
    $region25: #{basic_block_forward.3} parent=5 // pred_check
      %p178 = pneg %p177
    $region26: #{basic_block_forward.3} parent=5 // pred_check_branch
      %180 = sbr.rel (%p178) target = $region28
    $region27: #{basic_block_forward.3} parent=5 // pred_region
      // Predicated region
      $region29: #{basic_block_forward.3} parent=27 // pred_check
        %p181 = pneg %p32
      $region30: #{basic_block_forward.3} parent=27 // pred_check_branch
        %183 = sbr.rel (%p181) target = $region32
      $region31: #{basic_block_forward.3} parent=27 // pred_region
        %p184 = scmp.lt.s32.totalorder %s12, 1
        %s185 = scalar_select %p184, %s12, 1
        %s186 = smul.addr %s185, 32
        %s187 = smul.addr %s186, 4
        %s188 = scalar_lea.vmem %s0, %s187
      $region32: #{basic_block_forward.3} parent=27 // pred_fallthru
        _
    $region28: #{basic_block_forward.3} parent=5 // pred_fallthru
      _
    %p189 = scmp.le.s32.totalorder 1, %s12
    %p190 = scmp.lt.s32.totalorder %s12, 3
    %p191 = pnand %p189, %p190
    %p192 = pneg %p191
    // Predicated region
    $region33: #{basic_block_forward.3} parent=5 // pred_check
      _
    $region34: #{basic_block_forward.3} parent=5 // pred_check_branch
      %194 = sbr.rel (%p191) target = $region36
    $region35: #{basic_block_forward.3} parent=5 // pred_region
      %s195 = ssub.s32 %s12, 1
      %p196 = scmp.lt.s32.totalorder %s17, 1
      %s197 = scalar_select %p196, %s17, 1
      %s198 = smul.addr %s197, 32
      %s199 = smul.addr %s198, 4
      %s200 = scalar_lea.vmem %s0, %s199
      %p201 = pneg %p38
      %p202 = pneg %p35
      %p203 = pneg %p59
      %p204 = pneg %p56
      %p205 = pneg %p80
      %p206 = pneg %p77
      %p207 = pneg %p101
      %p208 = pneg %p98
      %p209 = pneg %p127
      %p210 = pneg %p124
      %p211 = scmp.lt.s32.totalorder %s17, 1
      %s212 = scalar_select %p211, %s17, 1
      %s213 = smul.addr %s212, 32
      %s214 = smul.addr %s213, 4
      %s215 = scalar_lea.vmem %s4, %s214
      %p216 = pneg %p153
      %p217 = pneg %p150
      %p218 = scmp.lt.s32.totalorder %s17, 1
      %s219 = scalar_select %p218, %s17, 1
      %s220 = smul.addr %s219, 2
      %s221 = scalar_lea.vmem %s5, %s220
      %p222 = scmp.lt.s32.totalorder %s17, 1
      %s223 = scalar_select %p222, %s17, 1
      %s224 = smul.addr %s223, 32
      %s225 = smul.addr %s224, 4
      %s226 = scalar_lea.vmem %s0, %s225
      %p227 = scmp.lt.s32.totalorder %s17, 1
      %s228 = scalar_select %p227, %s17, 1
      %s229 = smul.addr %s228, 32
      %s230 = smul.addr %s229, 4
      %s231 = scalar_lea.vmem %s4, %s230
      %p232 = scmp.lt.s32.totalorder %s17, 1
      %s233 = scalar_select %p232, %s17, 1
      %s234 = smul.addr %s233, 2
      %s235 = scalar_lea.vmem %s5, %s234
      %v237 = vld [vmem:[%s226] sm:$0xf]
      %v238 = vld [vmem:[%s226 + $0x4] sm:$0xf]
      %v239 = vld [vmem:[%s226 + $0x8] sm:$0xf]
      %v240 = vld [vmem:[%s226 + $0xc] sm:$0xf]
      %v241 = vld [vmem:[%s226 + $0x10] sm:$0xf]
      %v242 = vld [vmem:[%s226 + $0x14] sm:$0xf]
      %v243 = vld [vmem:[%s226 + $0x18] sm:$0xf]
      %v244 = vld [vmem:[%s226 + $0x1c] sm:$0xf]
      %v245 = vld [vmem:[%s226 + $0x20] sm:$0xf]
      %v246 = vld [vmem:[%s226 + $0x24] sm:$0xf]
      %v247 = vld [vmem:[%s226 + $0x28] sm:$0xf]
      %v248 = vld [vmem:[%s226 + $0x2c] sm:$0xf]
      %v249 = vld [vmem:[%s226 + $0x30] sm:$0xf]
      %v250 = vld [vmem:[%s226 + $0x34] sm:$0xf]
      %v251 = vld [vmem:[%s226 + $0x38] sm:$0xf]
      %v252 = vld [vmem:[%s226 + $0x3c] sm:$0xf]
      %v253 = vld [vmem:[%s226 + $0x40] sm:$0xf]
      %v254 = vld [vmem:[%s226 + $0x44] sm:$0xf]
      %v255 = vld [vmem:[%s226 + $0x48] sm:$0xf]
      %v256 = vld [vmem:[%s226 + $0x4c] sm:$0xf]
      %v257 = vld [vmem:[%s226 + $0x50] sm:$0xf]
      %v258 = vld [vmem:[%s226 + $0x54] sm:$0xf]
      %v259 = vld [vmem:[%s226 + $0x58] sm:$0xf]
      %v260 = vld [vmem:[%s226 + $0x5c] sm:$0xf]
      %v261 = vld [vmem:[%s226 + $0x60] sm:$0xf]
      %v262 = vld [vmem:[%s226 + $0x64] sm:$0xf]
      %v263 = vld [vmem:[%s226 + $0x68] sm:$0xf]
      %v264 = vld [vmem:[%s226 + $0x6c] sm:$0xf]
      %v265 = vld [vmem:[%s226 + $0x70] sm:$0xf]
      %v266 = vld [vmem:[%s226 + $0x74] sm:$0xf]
      %v267 = vld [vmem:[%s226 + $0x78] sm:$0xf]
      %v268 = vld [vmem:[%s226 + $0x7c] sm:$0xf]
      %v269 = vunpack.c.l.bf16 %v237
      %v270 = vunpack.c.l.bf16 %v238
      %v271 = vunpack.c.l.bf16 %v239
      %v272 = vunpack.c.l.bf16 %v240
      %v273 = vunpack.c.l.bf16 %v241
      %v274 = vunpack.c.l.bf16 %v242
      %v275 = vunpack.c.l.bf16 %v243
      %v276 = vunpack.c.l.bf16 %v244
      %v277 = vunpack.c.l.bf16 %v245
      %v278 = vunpack.c.l.bf16 %v246
      %v279 = vunpack.c.l.bf16 %v247
      %v280 = vunpack.c.l.bf16 %v248
      %v281 = vunpack.c.l.bf16 %v249
      %v282 = vunpack.c.l.bf16 %v250
      %v283 = vunpack.c.l.bf16 %v251
      %v284 = vunpack.c.l.bf16 %v252
      %v285 = vunpack.c.l.bf16 %v253
      %v286 = vunpack.c.l.bf16 %v254
      %v287 = vunpack.c.l.bf16 %v255
      %v288 = vunpack.c.l.bf16 %v256
      %v289 = vunpack.c.l.bf16 %v257
      %v290 = vunpack.c.l.bf16 %v258
      %v291 = vunpack.c.l.bf16 %v259
      %v292 = vunpack.c.l.bf16 %v260
      %v293 = vunpack.c.l.bf16 %v261
      %v294 = vunpack.c.l.bf16 %v262
      %v295 = vunpack.c.l.bf16 %v263
      %v296 = vunpack.c.l.bf16 %v264
      %v297 = vunpack.c.l.bf16 %v265
      %v298 = vunpack.c.l.bf16 %v266
      %v299 = vunpack.c.l.bf16 %v267
      %v300 = vunpack.c.l.bf16 %v268
      %v301 = vld [vmem:[%s2] sm:$0x1]
      %v302 = vld [vmem:[%s3] sm:$0x1]
      %303 = vst [vmem:[#allocation2] sm:$0xf] 0
      %304 = vst [vmem:[#allocation2 + $0x4] sm:$0xf] 0
      %305 = vst [vmem:[#allocation2 + $0x8] sm:$0x1] 0
      %s306 = scalar_lea.vmem [#allocation2], 204
      %307 = vst [vmem:[%s306] sm:$0xf] 0
      %308 = vst [vmem:[%s306 + $0x4] sm:$0xf] 0
      %309 = vst [vmem:[%s306 + $0x8] sm:$0x1] 0
      %vm310 = vcmask 1040384
      %vm311 = vsmask.f32 256
      %vm312 = vmand %vm310, %vm311
      %v313 = vld [vmem:[#allocation2] sm:$0x1]
      %v314 = vsel %vm312, 0, %v313
      %315 = vst [vmem:[#allocation2] sm:$0x1] %v314
      %v316 = vld [vmem:[#allocation2 + $0xc] sm:$0x1]
      %v317 = vsel %vm312, 0, %v316
      %318 = vst [vmem:[#allocation2 + $0xc] sm:$0x1] %v317
      %v319 = vld [vmem:[#allocation2 + $0x18] sm:$0x1]
      %v320 = vsel %vm312, 0, %v319
      %321 = vst [vmem:[#allocation2 + $0x18] sm:$0x1] %v320
      %v322 = vld [vmem:[#allocation2 + $0x24] sm:$0x1]
      %v323 = vsel %vm312, 0, %v322
      %324 = vst [vmem:[#allocation2 + $0x24] sm:$0x1] %v323
      %v325 = vld [vmem:[#allocation2 + $0x30] sm:$0x1]
      %v326 = vsel %vm312, 0, %v325
      %327 = vst [vmem:[#allocation2 + $0x30] sm:$0x1] %v326
      %v328 = vld [vmem:[#allocation2 + $0x3c] sm:$0x1]
      %v329 = vsel %vm312, 0, %v328
      %330 = vst [vmem:[#allocation2 + $0x3c] sm:$0x1] %v329
      %v331 = vld [vmem:[#allocation2 + $0x48] sm:$0x1]
      %v332 = vsel %vm312, 0, %v331
      %333 = vst [vmem:[#allocation2 + $0x48] sm:$0x1] %v332
      %v334 = vld [vmem:[#allocation2 + $0x54] sm:$0x1]
      %v335 = vsel %vm312, 0, %v334
      %336 = vst [vmem:[#allocation2 + $0x54] sm:$0x1] %v335
      %v337 = vld [vmem:[#allocation2 + $0x60] sm:$0x1]
      %v338 = vsel %vm312, 0, %v337
      %339 = vst [vmem:[#allocation2 + $0x60] sm:$0x1] %v338
      %v340 = vld [vmem:[#allocation2 + $0x6c] sm:$0x1]
      %v341 = vsel %vm312, 0, %v340
      %342 = vst [vmem:[#allocation2 + $0x6c] sm:$0x1] %v341
      %v343 = vld [vmem:[#allocation2 + $0x78] sm:$0x1]
      %v344 = vsel %vm312, 0, %v343
      %345 = vst [vmem:[#allocation2 + $0x78] sm:$0x1] %v344
      %v346 = vld [vmem:[#allocation2 + $0x84] sm:$0x1]
      %v347 = vsel %vm312, 0, %v346
      %348 = vst [vmem:[#allocation2 + $0x84] sm:$0x1] %v347
      %v349 = vld [vmem:[#allocation2 + $0x90] sm:$0x1]
      %v350 = vsel %vm312, 0, %v349
      %351 = vst [vmem:[#allocation2 + $0x90] sm:$0x1] %v350
      %v352 = vld [vmem:[#allocation2 + $0x9c] sm:$0x1]
      %v353 = vsel %vm312, 0, %v352
      %354 = vst [vmem:[#allocation2 + $0x9c] sm:$0x1] %v353
      %v355 = vld [vmem:[#allocation2 + $0xa8] sm:$0x1]
      %v356 = vsel %vm312, 0, %v355
      %357 = vst [vmem:[#allocation2 + $0xa8] sm:$0x1] %v356
      %v358 = vld [vmem:[#allocation2 + $0xb4] sm:$0x1]
      %v359 = vsel %vm312, 0, %v358
      %360 = vst [vmem:[#allocation2 + $0xb4] sm:$0x1] %v359
      %v361 = vld [vmem:[#allocation2 + $0xc0] sm:$0x1]
      %v362 = vsel %vm312, 0, %v361
      %363 = vst [vmem:[#allocation2 + $0xc0] sm:$0x1] %v362
      %v364 = vld [vmem:[#allocation2 + $0xcc] sm:$0x1]
      %v365 = vsel %vm312, 0, %v364
      %366 = vst [vmem:[#allocation2 + $0xcc] sm:$0x1] %v365
      %vm367 = vsmask.f32 7938
      %vm368 = vmand %vm310, %vm367
      %v369 = vld [vmem:[#allocation2 + $0x8] sm:$0x1]
      %v370 = vsel %vm368, 0, %v369
      %371 = vst [vmem:[#allocation2 + $0x8] sm:$0x1] %v370
      %v372 = vld [vmem:[#allocation2 + $0x14] sm:$0x1]
      %v373 = vsel %vm368, 0, %v372
      %374 = vst [vmem:[#allocation2 + $0x14] sm:$0x1] %v373
      %v375 = vld [vmem:[#allocation2 + $0x20] sm:$0x1]
      %v376 = vsel %vm368, 0, %v375
      %377 = vst [vmem:[#allocation2 + $0x20] sm:$0x1] %v376
      %v378 = vld [vmem:[#allocation2 + $0x2c] sm:$0x1]
      %v379 = vsel %vm368, 0, %v378
      %380 = vst [vmem:[#allocation2 + $0x2c] sm:$0x1] %v379
      %v381 = vld [vmem:[#allocation2 + $0x38] sm:$0x1]
      %v382 = vsel %vm368, 0, %v381
      %383 = vst [vmem:[#allocation2 + $0x38] sm:$0x1] %v382
      %v384 = vld [vmem:[#allocation2 + $0x44] sm:$0x1]
      %v385 = vsel %vm368, 0, %v384
      %386 = vst [vmem:[#allocation2 + $0x44] sm:$0x1] %v385
      %v387 = vld [vmem:[#allocation2 + $0x50] sm:$0x1]
      %v388 = vsel %vm368, 0, %v387
      %389 = vst [vmem:[#allocation2 + $0x50] sm:$0x1] %v388
      %v390 = vld [vmem:[#allocation2 + $0x5c] sm:$0x1]
      %v391 = vsel %vm368, 0, %v390
      %392 = vst [vmem:[#allocation2 + $0x5c] sm:$0x1] %v391
      %v393 = vld [vmem:[#allocation2 + $0x68] sm:$0x1]
      %v394 = vsel %vm368, 0, %v393
      %395 = vst [vmem:[#allocation2 + $0x68] sm:$0x1] %v394
      %v396 = vld [vmem:[#allocation2 + $0x74] sm:$0x1]
      %v397 = vsel %vm368, 0, %v396
      %398 = vst [vmem:[#allocation2 + $0x74] sm:$0x1] %v397
      %v399 = vld [vmem:[#allocation2 + $0x80] sm:$0x1]
      %v400 = vsel %vm368, 0, %v399
      %401 = vst [vmem:[#allocation2 + $0x80] sm:$0x1] %v400
      %v402 = vld [vmem:[#allocation2 + $0x8c] sm:$0x1]
      %v403 = vsel %vm368, 0, %v402
      %404 = vst [vmem:[#allocation2 + $0x8c] sm:$0x1] %v403
      %v405 = vld [vmem:[#allocation2 + $0x98] sm:$0x1]
      %v406 = vsel %vm368, 0, %v405
      %407 = vst [vmem:[#allocation2 + $0x98] sm:$0x1] %v406
      %v408 = vld [vmem:[#allocation2 + $0xa4] sm:$0x1]
      %v409 = vsel %vm368, 0, %v408
      %410 = vst [vmem:[#allocation2 + $0xa4] sm:$0x1] %v409
      %v411 = vld [vmem:[#allocation2 + $0xb0] sm:$0x1]
      %v412 = vsel %vm368, 0, %v411
      %413 = vst [vmem:[#allocation2 + $0xb0] sm:$0x1] %v412
      %v414 = vld [vmem:[#allocation2 + $0xbc] sm:$0x1]
      %v415 = vsel %vm368, 0, %v414
      %416 = vst [vmem:[#allocation2 + $0xbc] sm:$0x1] %v415
      %v417 = vld [vmem:[#allocation2 + $0xc8] sm:$0x1]
      %v418 = vsel %vm368, 0, %v417
      %419 = vst [vmem:[#allocation2 + $0xc8] sm:$0x1] %v418
      %v420 = vld [vmem:[#allocation2 + $0xd4] sm:$0x1]
      %v421 = vsel %vm368, 0, %v420
      %422 = vst [vmem:[#allocation2 + $0xd4] sm:$0x1] %v421
      %v424 = vlaneseq
      %v425 = vshrl.u32 %v424, 7
      %v426 = vsub.s32 0, %v425
      %v427 = vrot.slane %v301, %v426
      %v429 = vmul.f32 %v269, %v427
      %v430 = vmul.f32 %v270, %v427
      %v431 = vmul.f32 %v271, %v427
      %v432 = vmul.f32 %v272, %v427
      %v433 = vmul.f32 %v273, %v427
      %v434 = vmul.f32 %v274, %v427
      %v435 = vmul.f32 %v275, %v427
      %v436 = vmul.f32 %v276, %v427
      %v437 = vmul.f32 %v277, %v427
      %v438 = vmul.f32 %v278, %v427
      %v439 = vmul.f32 %v279, %v427
      %v440 = vmul.f32 %v280, %v427
      %v441 = vmul.f32 %v281, %v427
      %v442 = vmul.f32 %v282, %v427
      %v443 = vmul.f32 %v283, %v427
      %v444 = vmul.f32 %v284, %v427
      %v445 = vmul.f32 %v285, %v427
      %v446 = vmul.f32 %v286, %v427
      %v447 = vmul.f32 %v287, %v427
      %v448 = vmul.f32 %v288, %v427
      %v449 = vmul.f32 %v289, %v427
      %v450 = vmul.f32 %v290, %v427
      %v451 = vmul.f32 %v291, %v427
      %v452 = vmul.f32 %v292, %v427
      %v453 = vmul.f32 %v293, %v427
      %v454 = vmul.f32 %v294, %v427
      %v455 = vmul.f32 %v295, %v427
      %v456 = vmul.f32 %v296, %v427
      %v457 = vmul.f32 %v297, %v427
      %v458 = vmul.f32 %v298, %v427
      %v459 = vmul.f32 %v299, %v427
      %v460 = vmul.f32 %v300, %v427
      %v462 = vlaneseq
      %v463 = vshrl.u32 %v462, 7
      %v464 = vsub.s32 0, %v463
      %v465 = vrot.slane %v302, %v464
      %v467 = vadd.f32 %v429, %v465
      %v468 = vadd.f32 %v430, %v465
      %v469 = vadd.f32 %v431, %v465
      %v470 = vadd.f32 %v432, %v465
      %v471 = vadd.f32 %v433, %v465
      %v472 = vadd.f32 %v434, %v465
      %v473 = vadd.f32 %v435, %v465
      %v474 = vadd.f32 %v436, %v465
      %v475 = vadd.f32 %v437, %v465
      %v476 = vadd.f32 %v438, %v465
      %v477 = vadd.f32 %v439, %v465
      %v478 = vadd.f32 %v440, %v465
      %v479 = vadd.f32 %v441, %v465
      %v480 = vadd.f32 %v442, %v465
      %v481 = vadd.f32 %v443, %v465
      %v482 = vadd.f32 %v444, %v465
      %v483 = vadd.f32 %v445, %v465
      %v484 = vadd.f32 %v446, %v465
      %v485 = vadd.f32 %v447, %v465
      %v486 = vadd.f32 %v448, %v465
      %v487 = vadd.f32 %v449, %v465
      %v488 = vadd.f32 %v450, %v465
      %v489 = vadd.f32 %v451, %v465
      %v490 = vadd.f32 %v452, %v465
      %v491 = vadd.f32 %v453, %v465
      %v492 = vadd.f32 %v454, %v465
      %v493 = vadd.f32 %v455, %v465
      %v494 = vadd.f32 %v456, %v465
      %v495 = vadd.f32 %v457, %v465
      %v496 = vadd.f32 %v458, %v465
      %v497 = vadd.f32 %v459, %v465
      %v498 = vadd.f32 %v460, %v465
      %v499 = vpack.c.bf16 %v468, %v467
      %v500 = vpack.c.bf16 %v470, %v469
      %v501 = vpack.c.bf16 %v472, %v471
      %v502 = vpack.c.bf16 %v474, %v473
      %v503 = vpack.c.bf16 %v476, %v475
      %v504 = vpack.c.bf16 %v478, %v477
      %v505 = vpack.c.bf16 %v480, %v479
      %v506 = vpack.c.bf16 %v482, %v481
      %v507 = vpack.c.bf16 %v484, %v483
      %v508 = vpack.c.bf16 %v486, %v485
      %v509 = vpack.c.bf16 %v488, %v487
      %v510 = vpack.c.bf16 %v490, %v489
      %v511 = vpack.c.bf16 %v492, %v491
      %v512 = vpack.c.bf16 %v494, %v493
      %v513 = vpack.c.bf16 %v496, %v495
      %v514 = vpack.c.bf16 %v498, %v497
      %v531 = vunpack.c.l.b16 %v499
      %v532 = vunpack.c.h.b16 %v499
      %v533 = vunpack.c.l.b16 %v500
      %v534 = vunpack.c.h.b16 %v500
      %v535 = vunpack.c.l.b16 %v501
      %v536 = vunpack.c.h.b16 %v501
      %v537 = vunpack.c.l.b16 %v502
      %v538 = vunpack.c.h.b16 %v502
      %v539 = vunpack.c.l.b16 %v503
      %v540 = vunpack.c.h.b16 %v503
      %v541 = vunpack.c.l.b16 %v504
      %v542 = vunpack.c.h.b16 %v504
      %v543 = vunpack.c.l.b16 %v505
      %v544 = vunpack.c.h.b16 %v505
      %v545 = vunpack.c.l.b16 %v506
      %v546 = vunpack.c.h.b16 %v506
      %v547 = vunpack.c.l.b16 %v507
      %v548 = vunpack.c.h.b16 %v507
      %v549 = vunpack.c.l.b16 %v508
      %v550 = vunpack.c.h.b16 %v508
      %v551 = vunpack.c.l.b16 %v509
      %v552 = vunpack.c.h.b16 %v509
      %v553 = vunpack.c.l.b16 %v510
      %v554 = vunpack.c.h.b16 %v510
      %v555 = vunpack.c.l.b16 %v511
      %v556 = vunpack.c.h.b16 %v511
      %v557 = vunpack.c.l.b16 %v512
      %v558 = vunpack.c.h.b16 %v512
      %v559 = vunpack.c.l.b16 %v513
      %v560 = vunpack.c.h.b16 %v513
      %v561 = vunpack.c.l.b16 %v514
      %v562 = vunpack.c.h.b16 %v514
      %v563 = vpack.c.b16 %v531, %v531
      %v564 = vpack.c.b16 %v532, %v532
      %v565 = vpack.c.b16 %v533, %v533
      %v566 = vpack.c.b16 %v534, %v534
      %v567 = vpack.c.b16 %v535, %v535
      %v568 = vpack.c.b16 %v536, %v536
      %v569 = vpack.c.b16 %v537, %v537
      %v570 = vpack.c.b16 %v538, %v538
      %v571 = vpack.c.b16 %v539, %v539
      %v572 = vpack.c.b16 %v540, %v540
      %v573 = vpack.c.b16 %v541, %v541
      %v574 = vpack.c.b16 %v542, %v542
      %v575 = vpack.c.b16 %v543, %v543
      %v576 = vpack.c.b16 %v544, %v544
      %v577 = vpack.c.b16 %v545, %v545
      %v578 = vpack.c.b16 %v546, %v546
      %v579 = vpack.c.b16 %v547, %v547
      %v580 = vpack.c.b16 %v548, %v548
      %v581 = vpack.c.b16 %v549, %v549
      %v582 = vpack.c.b16 %v550, %v550
      %v583 = vpack.c.b16 %v551, %v551
      %v584 = vpack.c.b16 %v552, %v552
      %v585 = vpack.c.b16 %v553, %v553
      %v586 = vpack.c.b16 %v554, %v554
      %v587 = vpack.c.b16 %v555, %v555
      %v588 = vpack.c.b16 %v556, %v556
      %v589 = vpack.c.b16 %v557, %v557
      %v590 = vpack.c.b16 %v558, %v558
      %v591 = vpack.c.b16 %v559, %v559
      %v592 = vpack.c.b16 %v560, %v560
      %v593 = vpack.c.b16 %v561, %v561
      %v594 = vpack.c.b16 %v562, %v562
      %vm595 = vsmask.f32 4368
      %vm596 = vmor %vm311, %vm595
      %v598 = vshrl.u32 %v563, 16
      %v600 = vrot.slane %v598, 7
      %v601 = vshll.u32 %v563, 16
      %v603 = vor.u32 %v600, %v601
      %v604 = vrot.slane %v600, 4
      %v606 = vshrl.u32 %v564, 16
      %v608 = vrot.slane %v606, 7
      %v609 = vshll.u32 %v564, 16
      %v611 = vor.u32 %v608, %v609
      %v612 = vsel %vm596, %v604, %v611
      %v613 = vrot.slane %v608, 4
      %v615 = vshrl.u32 %v565, 16
      %v617 = vrot.slane %v615, 7
      %v618 = vshll.u32 %v565, 16
      %v620 = vor.u32 %v617, %v618
      %v621 = vrot.slane %v617, 4
      %v623 = vshrl.u32 %v566, 16
      %v625 = vrot.slane %v623, 7
      %v626 = vshll.u32 %v566, 16
      %v628 = vor.u32 %v625, %v626
      %v629 = vsel %vm596, %v621, %v628
      %v630 = vrot.slane %v625, 4
      %v632 = vshrl.u32 %v567, 16
      %v634 = vrot.slane %v632, 7
      %v635 = vshll.u32 %v567, 16
      %v637 = vor.u32 %v634, %v635
      %v638 = vrot.slane %v634, 4
      %v640 = vshrl.u32 %v568, 16
      %v642 = vrot.slane %v640, 7
      %v643 = vshll.u32 %v568, 16
      %v645 = vor.u32 %v642, %v643
      %v646 = vsel %vm596, %v638, %v645
      %v647 = vrot.slane %v642, 4
      %v649 = vshrl.u32 %v569, 16
      %v651 = vrot.slane %v649, 7
      %v652 = vshll.u32 %v569, 16
      %v654 = vor.u32 %v651, %v652
      %v655 = vrot.slane %v651, 4
      %v657 = vshrl.u32 %v570, 16
      %v659 = vrot.slane %v657, 7
      %v660 = vshll.u32 %v570, 16
      %v662 = vor.u32 %v659, %v660
      %v663 = vsel %vm596, %v655, %v662
      %v664 = vrot.slane %v659, 4
      %v666 = vshrl.u32 %v571, 16
      %v668 = vrot.slane %v666, 7
      %v669 = vshll.u32 %v571, 16
      %v671 = vor.u32 %v668, %v669
      %v672 = vrot.slane %v668, 4
      %v674 = vshrl.u32 %v572, 16
      %v676 = vrot.slane %v674, 7
      %v677 = vshll.u32 %v572, 16
      %v679 = vor.u32 %v676, %v677
      %v680 = vsel %vm596, %v672, %v679
      %v681 = vrot.slane %v676, 4
      %v683 = vshrl.u32 %v573, 16
      %v685 = vrot.slane %v683, 7
      %v686 = vshll.u32 %v573, 16
      %v688 = vor.u32 %v685, %v686
      %v689 = vrot.slane %v685, 4
      %v691 = vshrl.u32 %v574, 16
      %v693 = vrot.slane %v691, 7
      %v694 = vshll.u32 %v574, 16
      %v696 = vor.u32 %v693, %v694
      %v697 = vsel %vm596, %v689, %v696
      %v698 = vrot.slane %v693, 4
      %v700 = vshrl.u32 %v575, 16
      %v702 = vrot.slane %v700, 7
      %v703 = vshll.u32 %v575, 16
      %v705 = vor.u32 %v702, %v703
      %v706 = vrot.slane %v702, 4
      %v708 = vshrl.u32 %v576, 16
      %v710 = vrot.slane %v708, 7
      %v711 = vshll.u32 %v576, 16
      %v713 = vor.u32 %v710, %v711
      %v714 = vsel %vm596, %v706, %v713
      %v715 = vrot.slane %v710, 4
      %v717 = vshrl.u32 %v577, 16
      %v719 = vrot.slane %v717, 7
      %v720 = vshll.u32 %v577, 16
      %v722 = vor.u32 %v719, %v720
      %v723 = vrot.slane %v719, 4
      %v725 = vshrl.u32 %v578, 16
      %v727 = vrot.slane %v725, 7
      %v728 = vshll.u32 %v578, 16
      %v730 = vor.u32 %v727, %v728
      %v731 = vsel %vm596, %v723, %v730
      %v732 = vrot.slane %v727, 4
      %v734 = vshrl.u32 %v579, 16
      %v736 = vrot.slane %v734, 7
      %v737 = vshll.u32 %v579, 16
      %v739 = vor.u32 %v736, %v737
      %v740 = vrot.slane %v736, 4
      %v742 = vshrl.u32 %v580, 16
      %v744 = vrot.slane %v742, 7
      %v745 = vshll.u32 %v580, 16
      %v747 = vor.u32 %v744, %v745
      %v748 = vsel %vm596, %v740, %v747
      %v749 = vrot.slane %v744, 4
      %v751 = vshrl.u32 %v581, 16
      %v753 = vrot.slane %v751, 7
      %v754 = vshll.u32 %v581, 16
      %v756 = vor.u32 %v753, %v754
      %v757 = vrot.slane %v753, 4
      %v759 = vshrl.u32 %v582, 16
      %v761 = vrot.slane %v759, 7
      %v762 = vshll.u32 %v582, 16
      %v764 = vor.u32 %v761, %v762
      %v765 = vsel %vm596, %v757, %v764
      %v766 = vrot.slane %v761, 4
      %v768 = vshrl.u32 %v583, 16
      %v770 = vrot.slane %v768, 7
      %v771 = vshll.u32 %v583, 16
      %v773 = vor.u32 %v770, %v771
      %v774 = vrot.slane %v770, 4
      %v776 = vshrl.u32 %v584, 16
      %v778 = vrot.slane %v776, 7
      %v779 = vshll.u32 %v584, 16
      %v781 = vor.u32 %v778, %v779
      %v782 = vsel %vm596, %v774, %v781
      %v783 = vrot.slane %v778, 4
      %v785 = vshrl.u32 %v585, 16
      %v787 = vrot.slane %v785, 7
      %v788 = vshll.u32 %v585, 16
      %v790 = vor.u32 %v787, %v788
      %v791 = vrot.slane %v787, 4
      %v793 = vshrl.u32 %v586, 16
      %v795 = vrot.slane %v793, 7
      %v796 = vshll.u32 %v586, 16
      %v798 = vor.u32 %v795, %v796
      %v799 = vsel %vm596, %v791, %v798
      %v800 = vrot.slane %v795, 4
      %v802 = vshrl.u32 %v587, 16
      %v804 = vrot.slane %v802, 7
      %v805 = vshll.u32 %v587, 16
      %v807 = vor.u32 %v804, %v805
      %v808 = vrot.slane %v804, 4
      %v810 = vshrl.u32 %v588, 16
      %v812 = vrot.slane %v810, 7
      %v813 = vshll.u32 %v588, 16
      %v815 = vor.u32 %v812, %v813
      %v816 = vsel %vm596, %v808, %v815
      %v817 = vrot.slane %v812, 4
      %v819 = vshrl.u32 %v589, 16
      %v821 = vrot.slane %v819, 7
      %v822 = vshll.u32 %v589, 16
      %v824 = vor.u32 %v821, %v822
      %v825 = vrot.slane %v821, 4
      %v827 = vshrl.u32 %v590, 16
      %v829 = vrot.slane %v827, 7
      %v830 = vshll.u32 %v590, 16
      %v832 = vor.u32 %v829, %v830
      %v833 = vsel %vm596, %v825, %v832
      %v834 = vrot.slane %v829, 4
      %v836 = vshrl.u32 %v591, 16
      %v838 = vrot.slane %v836, 7
      %v839 = vshll.u32 %v591, 16
      %v841 = vor.u32 %v838, %v839
      %v842 = vrot.slane %v838, 4
      %v844 = vshrl.u32 %v592, 16
      %v846 = vrot.slane %v844, 7
      %v847 = vshll.u32 %v592, 16
      %v849 = vor.u32 %v846, %v847
      %v850 = vsel %vm596, %v842, %v849
      %v851 = vrot.slane %v846, 4
      %v853 = vshrl.u32 %v593, 16
      %v855 = vrot.slane %v853, 7
      %v856 = vshll.u32 %v593, 16
      %v858 = vor.u32 %v855, %v856
      %v859 = vrot.slane %v855, 4
      %v861 = vshrl.u32 %v594, 16
      %v863 = vrot.slane %v861, 7
      %v864 = vshll.u32 %v594, 16
      %v866 = vor.u32 %v863, %v864
      %v867 = vsel %vm596, %v859, %v866
      %v868 = vrot.slane %v863, 4
      %s917 = scalar_lea.vmem [#allocation2], 12
      %vm918 = vcmask 1043456
      %vm919 = vmand %vm918, %vm367
      %v920 = vld [vmem:[%s917] sm:$0xf]
      %v921 = vsel %vm919, %v603, %v920
      %922 = vst [vmem:[%s917] sm:$0xf] %v921
      %923 = vst [vmem:[%s917 + $0x4] sm:$0xf] %v612
      %v924 = vld [vmem:[%s917 + $0x8] sm:$0x1]
      %v925 = vsel %vm312, %v613, %v924
      %926 = vst [vmem:[%s917 + $0x8] sm:$0x1] %v925
      %v927 = vld [vmem:[%s917 + $0xc] sm:$0xf]
      %v928 = vsel %vm919, %v620, %v927
      %929 = vst [vmem:[%s917 + $0xc] sm:$0xf] %v928
      %930 = vst [vmem:[%s917 + $0x10] sm:$0xf] %v629
      %v931 = vld [vmem:[%s917 + $0x14] sm:$0x1]
      %v932 = vsel %vm312, %v630, %v931
      %933 = vst [vmem:[%s917 + $0x14] sm:$0x1] %v932
      %v934 = vld [vmem:[%s917 + $0x18] sm:$0xf]
      %v935 = vsel %vm919, %v637, %v934
      %936 = vst [vmem:[%s917 + $0x18] sm:$0xf] %v935
      %937 = vst [vmem:[%s917 + $0x1c] sm:$0xf] %v646
      %v938 = vld [vmem:[%s917 + $0x20] sm:$0x1]
      %v939 = vsel %vm312, %v647, %v938
      %940 = vst [vmem:[%s917 + $0x20] sm:$0x1] %v939
      %v941 = vld [vmem:[%s917 + $0x24] sm:$0xf]
      %v942 = vsel %vm919, %v654, %v941
      %943 = vst [vmem:[%s917 + $0x24] sm:$0xf] %v942
      %944 = vst [vmem:[%s917 + $0x28] sm:$0xf] %v663
      %v945 = vld [vmem:[%s917 + $0x2c] sm:$0x1]
      %v946 = vsel %vm312, %v664, %v945
      %947 = vst [vmem:[%s917 + $0x2c] sm:$0x1] %v946
      %v948 = vld [vmem:[%s917 + $0x30] sm:$0xf]
      %v949 = vsel %vm919, %v671, %v948
      %950 = vst [vmem:[%s917 + $0x30] sm:$0xf] %v949
      %951 = vst [vmem:[%s917 + $0x34] sm:$0xf] %v680
      %v952 = vld [vmem:[%s917 + $0x38] sm:$0x1]
      %v953 = vsel %vm312, %v681, %v952
      %954 = vst [vmem:[%s917 + $0x38] sm:$0x1] %v953
      %v955 = vld [vmem:[%s917 + $0x3c] sm:$0xf]
      %v956 = vsel %vm919, %v688, %v955
      %957 = vst [vmem:[%s917 + $0x3c] sm:$0xf] %v956
      %958 = vst [vmem:[%s917 + $0x40] sm:$0xf] %v697
      %v959 = vld [vmem:[%s917 + $0x44] sm:$0x1]
      %v960 = vsel %vm312, %v698, %v959
      %961 = vst [vmem:[%s917 + $0x44] sm:$0x1] %v960
      %v962 = vld [vmem:[%s917 + $0x48] sm:$0xf]
      %v963 = vsel %vm919, %v705, %v962
      %964 = vst [vmem:[%s917 + $0x48] sm:$0xf] %v963
      %965 = vst [vmem:[%s917 + $0x4c] sm:$0xf] %v714
      %v966 = vld [vmem:[%s917 + $0x50] sm:$0x1]
      %v967 = vsel %vm312, %v715, %v966
      %968 = vst [vmem:[%s917 + $0x50] sm:$0x1] %v967
      %v969 = vld [vmem:[%s917 + $0x54] sm:$0xf]
      %v970 = vsel %vm919, %v722, %v969
      %971 = vst [vmem:[%s917 + $0x54] sm:$0xf] %v970
      %972 = vst [vmem:[%s917 + $0x58] sm:$0xf] %v731
      %v973 = vld [vmem:[%s917 + $0x5c] sm:$0x1]
      %v974 = vsel %vm312, %v732, %v973
      %975 = vst [vmem:[%s917 + $0x5c] sm:$0x1] %v974
      %v976 = vld [vmem:[%s917 + $0x60] sm:$0xf]
      %v977 = vsel %vm919, %v739, %v976
      %978 = vst [vmem:[%s917 + $0x60] sm:$0xf] %v977
      %979 = vst [vmem:[%s917 + $0x64] sm:$0xf] %v748
      %v980 = vld [vmem:[%s917 + $0x68] sm:$0x1]
      %v981 = vsel %vm312, %v749, %v980
      %982 = vst [vmem:[%s917 + $0x68] sm:$0x1] %v981
      %v983 = vld [vmem:[%s917 + $0x6c] sm:$0xf]
      %v984 = vsel %vm919, %v756, %v983
      %985 = vst [vmem:[%s917 + $0x6c] sm:$0xf] %v984
      %986 = vst [vmem:[%s917 + $0x70] sm:$0xf] %v765
      %v987 = vld [vmem:[%s917 + $0x74] sm:$0x1]
      %v988 = vsel %vm312, %v766, %v987
      %989 = vst [vmem:[%s917 + $0x74] sm:$0x1] %v988
      %v990 = vld [vmem:[%s917 + $0x78] sm:$0xf]
      %v991 = vsel %vm919, %v773, %v990
      %992 = vst [vmem:[%s917 + $0x78] sm:$0xf] %v991
      %993 = vst [vmem:[%s917 + $0x7c] sm:$0xf] %v782
      %v994 = vld [vmem:[%s917 + $0x80] sm:$0x1]
      %v995 = vsel %vm312, %v783, %v994
      %996 = vst [vmem:[%s917 + $0x80] sm:$0x1] %v995
      %v997 = vld [vmem:[%s917 + $0x84] sm:$0xf]
      %v998 = vsel %vm919, %v790, %v997
      %999 = vst [vmem:[%s917 + $0x84] sm:$0xf] %v998
      %1000 = vst [vmem:[%s917 + $0x88] sm:$0xf] %v799
      %v1001 = vld [vmem:[%s917 + $0x8c] sm:$0x1]
      %v1002 = vsel %vm312, %v800, %v1001
      %1003 = vst [vmem:[%s917 + $0x8c] sm:$0x1] %v1002
      %v1004 = vld [vmem:[%s917 + $0x90] sm:$0xf]
      %v1005 = vsel %vm919, %v807, %v1004
      %1006 = vst [vmem:[%s917 + $0x90] sm:$0xf] %v1005
      %1007 = vst [vmem:[%s917 + $0x94] sm:$0xf] %v816
      %v1008 = vld [vmem:[%s917 + $0x98] sm:$0x1]
      %v1009 = vsel %vm312, %v817, %v1008
      %1010 = vst [vmem:[%s917 + $0x98] sm:$0x1] %v1009
      %v1011 = vld [vmem:[%s917 + $0x9c] sm:$0xf]
      %v1012 = vsel %vm919, %v824, %v1011
      %1013 = vst [vmem:[%s917 + $0x9c] sm:$0xf] %v1012
      %1014 = vst [vmem:[%s917 + $0xa0] sm:$0xf] %v833
      %v1015 = vld [vmem:[%s917 + $0xa4] sm:$0x1]
      %v1016 = vsel %vm312, %v834, %v1015
      %1017 = vst [vmem:[%s917 + $0xa4] sm:$0x1] %v1016
      %v1018 = vld [vmem:[%s917 + $0xa8] sm:$0xf]
      %v1019 = vsel %vm919, %v841, %v1018
      %1020 = vst [vmem:[%s917 + $0xa8] sm:$0xf] %v1019
      %1021 = vst [vmem:[%s917 + $0xac] sm:$0xf] %v850
      %v1022 = vld [vmem:[%s917 + $0xb0] sm:$0x1]
      %v1023 = vsel %vm312, %v851, %v1022
      %1024 = vst [vmem:[%s917 + $0xb0] sm:$0x1] %v1023
      %v1025 = vld [vmem:[%s917 + $0xb4] sm:$0xf]
      %v1026 = vsel %vm919, %v858, %v1025
      %1027 = vst [vmem:[%s917 + $0xb4] sm:$0xf] %v1026
      %1028 = vst [vmem:[%s917 + $0xb8] sm:$0xf] %v867
      %v1029 = vld [vmem:[%s917 + $0xbc] sm:$0x1]
      %v1030 = vsel %vm312, %v868, %v1029
      %1031 = vst [vmem:[%s917 + $0xbc] sm:$0x1] %v1030
      %v1032 = vld [vmem:[#allocation2] sm:$0xf]
      %v1033 = vld [vmem:[#allocation2 + $0x4] sm:$0xf]
      %v1034 = vld [vmem:[#allocation2 + $0x8] sm:$0x1]
      %v1035 = vld [vmem:[#allocation2 + $0xc] sm:$0xf]
      %v1036 = vld [vmem:[#allocation2 + $0x10] sm:$0xf]
      %v1037 = vld [vmem:[#allocation2 + $0x14] sm:$0x1]
      %v1038 = vld [vmem:[#allocation2 + $0x18] sm:$0xf]
      %v1039 = vld [vmem:[#allocation2 + $0x1c] sm:$0xf]
      %v1040 = vld [vmem:[#allocation2 + $0x20] sm:$0x1]
      %v1041 = vld [vmem:[#allocation2 + $0x24] sm:$0xf]
      %v1042 = vld [vmem:[#allocation2 + $0x28] sm:$0xf]
      %v1043 = vld [vmem:[#allocation2 + $0x2c] sm:$0x1]
      %v1044 = vld [vmem:[#allocation2 + $0x30] sm:$0xf]
      %v1045 = vld [vmem:[#allocation2 + $0x34] sm:$0xf]
      %v1046 = vld [vmem:[#allocation2 + $0x38] sm:$0x1]
      %v1047 = vld [vmem:[#allocation2 + $0x3c] sm:$0xf]
      %v1048 = vld [vmem:[#allocation2 + $0x40] sm:$0xf]
      %v1049 = vld [vmem:[#allocation2 + $0x44] sm:$0x1]
      %v1050 = vld [vmem:[#allocation2 + $0x48] sm:$0xf]
      %v1051 = vld [vmem:[#allocation2 + $0x4c] sm:$0xf]
      %v1052 = vld [vmem:[#allocation2 + $0x50] sm:$0x1]
      %v1053 = vld [vmem:[#allocation2 + $0x54] sm:$0xf]
      %v1054 = vld [vmem:[#allocation2 + $0x58] sm:$0xf]
      %v1055 = vld [vmem:[#allocation2 + $0x5c] sm:$0x1]
      %v1056 = vld [vmem:[#allocation2 + $0x60] sm:$0xf]
      %v1057 = vld [vmem:[#allocation2 + $0x64] sm:$0xf]
      %v1058 = vld [vmem:[#allocation2 + $0x68] sm:$0x1]
      %v1059 = vld [vmem:[#allocation2 + $0x6c] sm:$0xf]
      %v1060 = vld [vmem:[#allocation2 + $0x70] sm:$0xf]
      %v1061 = vld [vmem:[#allocation2 + $0x74] sm:$0x1]
      %v1062 = vld [vmem:[#allocation2 + $0x78] sm:$0xf]
      %v1063 = vld [vmem:[#allocation2 + $0x7c] sm:$0xf]
      %v1064 = vld [vmem:[#allocation2 + $0x80] sm:$0x1]
      %v1065 = vld [vmem:[#allocation2 + $0x84] sm:$0xf]
      %v1066 = vld [vmem:[#allocation2 + $0x88] sm:$0xf]
      %v1067 = vld [vmem:[#allocation2 + $0x8c] sm:$0x1]
      %v1068 = vld [vmem:[#allocation2 + $0x90] sm:$0xf]
      %v1069 = vld [vmem:[#allocation2 + $0x94] sm:$0xf]
      %v1070 = vld [vmem:[#allocation2 + $0x98] sm:$0x1]
      %v1071 = vld [vmem:[#allocation2 + $0x9c] sm:$0xf]
      %v1072 = vld [vmem:[#allocation2 + $0xa0] sm:$0xf]
      %v1073 = vld [vmem:[#allocation2 + $0xa4] sm:$0x1]
      %v1074 = vld [vmem:[#allocation2 + $0xa8] sm:$0xf]
      %v1075 = vld [vmem:[#allocation2 + $0xac] sm:$0xf]
      %v1076 = vld [vmem:[#allocation2 + $0xb0] sm:$0x1]
      %v1077 = vld [vmem:[#allocation2 + $0xb4] sm:$0xf]
      %v1078 = vld [vmem:[#allocation2 + $0xb8] sm:$0xf]
      %v1079 = vld [vmem:[#allocation2 + $0xbc] sm:$0x1]
      %v1080 = vld [vmem:[#allocation2 + $0xc0] sm:$0xf]
      %v1081 = vld [vmem:[#allocation2 + $0xc4] sm:$0xf]
      %v1082 = vld [vmem:[#allocation2 + $0xc8] sm:$0x1]
      %v1083 = vld [vmem:[#allocation2 + $0xcc] sm:$0xf]
      %v1084 = vld [vmem:[#allocation2 + $0xd0] sm:$0xf]
      %v1085 = vld [vmem:[#allocation2 + $0xd4] sm:$0x1]
      %vm1086 = vsmask.f32 3328
      %vm1087 = vsmask.f32 7440
      %vm1088 = vmor %vm1086, %vm1087
      %v1090 = vshrl.u32 %v1032, 16
      %v1092 = vrot.slane %v1090, 4
      %v1093 = vshll.u32 %v1032, 16
      %v1095 = vrot.slane %v1093, 5
      %v1096 = vor.u32 %v1092, %v1095
      %v1097 = vrot.slane %v1096, 4
      %v1099 = vshll.u32 %v1033, 16
      %v1101 = vrot.slane %v1099, 5
      %v1102 = vsel %vm1088, %v1097, %v1101
      %v1103 = vshrl.u32 %v1033, 16
      %v1105 = vrot.slane %v1103, 4
      %v1106 = vor.u32 %v1105, %v1101
      %v1107 = vrot.slane %v1106, 4
      %v1109 = vshll.u32 %v1034, 16
      %v1111 = vrot.slane %v1109, 5
      %v1112 = vsel %vm1088, %v1107, %v1111
      %v1114 = vshrl.u32 %v1035, 16
      %v1116 = vrot.slane %v1114, 4
      %v1117 = vshll.u32 %v1035, 16
      %v1119 = vrot.slane %v1117, 5
      %v1120 = vor.u32 %v1116, %v1119
      %v1121 = vrot.slane %v1120, 4
      %v1123 = vshll.u32 %v1036, 16
      %v1125 = vrot.slane %v1123, 5
      %v1126 = vsel %vm1088, %v1121, %v1125
      %v1127 = vshrl.u32 %v1036, 16
      %v1129 = vrot.slane %v1127, 4
      %v1130 = vor.u32 %v1129, %v1125
      %v1131 = vrot.slane %v1130, 4
      %v1133 = vshll.u32 %v1037, 16
      %v1135 = vrot.slane %v1133, 5
      %v1136 = vsel %vm1088, %v1131, %v1135
      %v1138 = vshrl.u32 %v1038, 16
      %v1140 = vrot.slane %v1138, 4
      %v1141 = vshll.u32 %v1038, 16
      %v1143 = vrot.slane %v1141, 5
      %v1144 = vor.u32 %v1140, %v1143
      %v1145 = vrot.slane %v1144, 4
      %v1147 = vshll.u32 %v1039, 16
      %v1149 = vrot.slane %v1147, 5
      %v1150 = vsel %vm1088, %v1145, %v1149
      %v1151 = vshrl.u32 %v1039, 16
      %v1153 = vrot.slane %v1151, 4
      %v1154 = vor.u32 %v1153, %v1149
      %v1155 = vrot.slane %v1154, 4
      %v1157 = vshll.u32 %v1040, 16
      %v1159 = vrot.slane %v1157, 5
      %v1160 = vsel %vm1088, %v1155, %v1159
      %v1162 = vshrl.u32 %v1041, 16
      %v1164 = vrot.slane %v1162, 4
      %v1165 = vshll.u32 %v1041, 16
      %v1167 = vrot.slane %v1165, 5
      %v1168 = vor.u32 %v1164, %v1167
      %v1169 = vrot.slane %v1168, 4
      %v1171 = vshll.u32 %v1042, 16
      %v1173 = vrot.slane %v1171, 5
      %v1174 = vsel %vm1088, %v1169, %v1173
      %v1175 = vshrl.u32 %v1042, 16
      %v1177 = vrot.slane %v1175, 4
      %v1178 = vor.u32 %v1177, %v1173
      %v1179 = vrot.slane %v1178, 4
      %v1181 = vshll.u32 %v1043, 16
      %v1183 = vrot.slane %v1181, 5
      %v1184 = vsel %vm1088, %v1179, %v1183
      %v1186 = vshrl.u32 %v1044, 16
      %v1188 = vrot.slane %v1186, 4
      %v1189 = vshll.u32 %v1044, 16
      %v1191 = vrot.slane %v1189, 5
      %v1192 = vor.u32 %v1188, %v1191
      %v1193 = vrot.slane %v1192, 4
      %v1195 = vshll.u32 %v1045, 16
      %v1197 = vrot.slane %v1195, 5
      %v1198 = vsel %vm1088, %v1193, %v1197
      %v1199 = vshrl.u32 %v1045, 16
      %v1201 = vrot.slane %v1199, 4
      %v1202 = vor.u32 %v1201, %v1197
      %v1203 = vrot.slane %v1202, 4
      %v1205 = vshll.u32 %v1046, 16
      %v1207 = vrot.slane %v1205, 5
      %v1208 = vsel %vm1088, %v1203, %v1207
      %v1210 = vshrl.u32 %v1047, 16
      %v1212 = vrot.slane %v1210, 4
      %v1213 = vshll.u32 %v1047, 16
      %v1215 = vrot.slane %v1213, 5
      %v1216 = vor.u32 %v1212, %v1215
      %v1217 = vrot.slane %v1216, 4
      %v1219 = vshll.u32 %v1048, 16
      %v1221 = vrot.slane %v1219, 5
      %v1222 = vsel %vm1088, %v1217, %v1221
      %v1223 = vshrl.u32 %v1048, 16
      %v1225 = vrot.slane %v1223, 4
      %v1226 = vor.u32 %v1225, %v1221
      %v1227 = vrot.slane %v1226, 4
      %v1229 = vshll.u32 %v1049, 16
      %v1231 = vrot.slane %v1229, 5
      %v1232 = vsel %vm1088, %v1227, %v1231
      %v1234 = vshrl.u32 %v1050, 16
      %v1236 = vrot.slane %v1234, 4
      %v1237 = vshll.u32 %v1050, 16
      %v1239 = vrot.slane %v1237, 5
      %v1240 = vor.u32 %v1236, %v1239
      %v1241 = vrot.slane %v1240, 4
      %v1243 = vshll.u32 %v1051, 16
      %v1245 = vrot.slane %v1243, 5
      %v1246 = vsel %vm1088, %v1241, %v1245
      %v1247 = vshrl.u32 %v1051, 16
      %v1249 = vrot.slane %v1247, 4
      %v1250 = vor.u32 %v1249, %v1245
      %v1251 = vrot.slane %v1250, 4
      %v1253 = vshll.u32 %v1052, 16
      %v1255 = vrot.slane %v1253, 5
      %v1256 = vsel %vm1088, %v1251, %v1255
      %v1258 = vshrl.u32 %v1053, 16
      %v1260 = vrot.slane %v1258, 4
      %v1261 = vshll.u32 %v1053, 16
      %v1263 = vrot.slane %v1261, 5
      %v1264 = vor.u32 %v1260, %v1263
      %v1265 = vrot.slane %v1264, 4
      %v1267 = vshll.u32 %v1054, 16
      %v1269 = vrot.slane %v1267, 5
      %v1270 = vsel %vm1088, %v1265, %v1269
      %v1271 = vshrl.u32 %v1054, 16
      %v1273 = vrot.slane %v1271, 4
      %v1274 = vor.u32 %v1273, %v1269
      %v1275 = vrot.slane %v1274, 4
      %v1277 = vshll.u32 %v1055, 16
      %v1279 = vrot.slane %v1277, 5
      %v1280 = vsel %vm1088, %v1275, %v1279
      %v1282 = vshrl.u32 %v1056, 16
      %v1284 = vrot.slane %v1282, 4
      %v1285 = vshll.u32 %v1056, 16
      %v1287 = vrot.slane %v1285, 5
      %v1288 = vor.u32 %v1284, %v1287
      %v1289 = vrot.slane %v1288, 4
      %v1291 = vshll.u32 %v1057, 16
      %v1293 = vrot.slane %v1291, 5
      %v1294 = vsel %vm1088, %v1289, %v1293
      %v1295 = vshrl.u32 %v1057, 16
      %v1297 = vrot.slane %v1295, 4
      %v1298 = vor.u32 %v1297, %v1293
      %v1299 = vrot.slane %v1298, 4
      %v1301 = vshll.u32 %v1058, 16
      %v1303 = vrot.slane %v1301, 5
      %v1304 = vsel %vm1088, %v1299, %v1303
      %v1306 = vshrl.u32 %v1059, 16
      %v1308 = vrot.slane %v1306, 4
      %v1309 = vshll.u32 %v1059, 16
      %v1311 = vrot.slane %v1309, 5
      %v1312 = vor.u32 %v1308, %v1311
      %v1313 = vrot.slane %v1312, 4
      %v1315 = vshll.u32 %v1060, 16
      %v1317 = vrot.slane %v1315, 5
      %v1318 = vsel %vm1088, %v1313, %v1317
      %v1319 = vshrl.u32 %v1060, 16
      %v1321 = vrot.slane %v1319, 4
      %v1322 = vor.u32 %v1321, %v1317
      %v1323 = vrot.slane %v1322, 4
      %v1325 = vshll.u32 %v1061, 16
      %v1327 = vrot.slane %v1325, 5
      %v1328 = vsel %vm1088, %v1323, %v1327
      %v1330 = vshrl.u32 %v1062, 16
      %v1332 = vrot.slane %v1330, 4
      %v1333 = vshll.u32 %v1062, 16
      %v1335 = vrot.slane %v1333, 5
      %v1336 = vor.u32 %v1332, %v1335
      %v1337 = vrot.slane %v1336, 4
      %v1339 = vshll.u32 %v1063, 16
      %v1341 = vrot.slane %v1339, 5
      %v1342 = vsel %vm1088, %v1337, %v1341
      %v1343 = vshrl.u32 %v1063, 16
      %v1345 = vrot.slane %v1343, 4
      %v1346 = vor.u32 %v1345, %v1341
      %v1347 = vrot.slane %v1346, 4
      %v1349 = vshll.u32 %v1064, 16
      %v1351 = vrot.slane %v1349, 5
      %v1352 = vsel %vm1088, %v1347, %v1351
      %v1354 = vshrl.u32 %v1065, 16
      %v1356 = vrot.slane %v1354, 4
      %v1357 = vshll.u32 %v1065, 16
      %v1359 = vrot.slane %v1357, 5
      %v1360 = vor.u32 %v1356, %v1359
      %v1361 = vrot.slane %v1360, 4
      %v1363 = vshll.u32 %v1066, 16
      %v1365 = vrot.slane %v1363, 5
      %v1366 = vsel %vm1088, %v1361, %v1365
      %v1367 = vshrl.u32 %v1066, 16
      %v1369 = vrot.slane %v1367, 4
      %v1370 = vor.u32 %v1369, %v1365
      %v1371 = vrot.slane %v1370, 4
      %v1373 = vshll.u32 %v1067, 16
      %v1375 = vrot.slane %v1373, 5
      %v1376 = vsel %vm1088, %v1371, %v1375
      %v1378 = vshrl.u32 %v1068, 16
      %v1380 = vrot.slane %v1378, 4
      %v1381 = vshll.u32 %v1068, 16
      %v1383 = vrot.slane %v1381, 5
      %v1384 = vor.u32 %v1380, %v1383
      %v1385 = vrot.slane %v1384, 4
      %v1387 = vshll.u32 %v1069, 16
      %v1389 = vrot.slane %v1387, 5
      %v1390 = vsel %vm1088, %v1385, %v1389
      %v1391 = vshrl.u32 %v1069, 16
      %v1393 = vrot.slane %v1391, 4
      %v1394 = vor.u32 %v1393, %v1389
      %v1395 = vrot.slane %v1394, 4
      %v1397 = vshll.u32 %v1070, 16
      %v1399 = vrot.slane %v1397, 5
      %v1400 = vsel %vm1088, %v1395, %v1399
      %v1402 = vshrl.u32 %v1071, 16
      %v1404 = vrot.slane %v1402, 4
      %v1405 = vshll.u32 %v1071, 16
      %v1407 = vrot.slane %v1405, 5
      %v1408 = vor.u32 %v1404, %v1407
      %v1409 = vrot.slane %v1408, 4
      %v1411 = vshll.u32 %v1072, 16
      %v1413 = vrot.slane %v1411, 5
      %v1414 = vsel %vm1088, %v1409, %v1413
      %v1415 = vshrl.u32 %v1072, 16
      %v1417 = vrot.slane %v1415, 4
      %v1418 = vor.u32 %v1417, %v1413
      %v1419 = vrot.slane %v1418, 4
      %v1421 = vshll.u32 %v1073, 16
      %v1423 = vrot.slane %v1421, 5
      %v1424 = vsel %vm1088, %v1419, %v1423
      %v1426 = vshrl.u32 %v1074, 16
      %v1428 = vrot.slane %v1426, 4
      %v1429 = vshll.u32 %v1074, 16
      %v1431 = vrot.slane %v1429, 5
      %v1432 = vor.u32 %v1428, %v1431
      %v1433 = vrot.slane %v1432, 4
      %v1435 = vshll.u32 %v1075, 16
      %v1437 = vrot.slane %v1435, 5
      %v1438 = vsel %vm1088, %v1433, %v1437
      %v1439 = vshrl.u32 %v1075, 16
      %v1441 = vrot.slane %v1439, 4
      %v1442 = vor.u32 %v1441, %v1437
      %v1443 = vrot.slane %v1442, 4
      %v1445 = vshll.u32 %v1076, 16
      %v1447 = vrot.slane %v1445, 5
      %v1448 = vsel %vm1088, %v1443, %v1447
      %v1450 = vshrl.u32 %v1077, 16
      %v1452 = vrot.slane %v1450, 4
      %v1453 = vshll.u32 %v1077, 16
      %v1455 = vrot.slane %v1453, 5
      %v1456 = vor.u32 %v1452, %v1455
      %v1457 = vrot.slane %v1456, 4
      %v1459 = vshll.u32 %v1078, 16
      %v1461 = vrot.slane %v1459, 5
      %v1462 = vsel %vm1088, %v1457, %v1461
      %v1463 = vshrl.u32 %v1078, 16
      %v1465 = vrot.slane %v1463, 4
      %v1466 = vor.u32 %v1465, %v1461
      %v1467 = vrot.slane %v1466, 4
      %v1469 = vshll.u32 %v1079, 16
      %v1471 = vrot.slane %v1469, 5
      %v1472 = vsel %vm1088, %v1467, %v1471
      %vm1521 = vcmask 1042432
      %vm1522 = vcmask 1046532
      %vm1523 = vmor %vm1521, %vm1522
      %v1524 = vrot.slane %v1032, 5
      %v1525 = vrot.slane %v1524, 4
      %v1526 = vrot.slane %v1033, 5
      %v1527 = vsel %vm1523, %v1525, %v1526
      %v1528 = vrot.slane %v1526, 4
      %v1529 = vrot.slane %v1034, 5
      %v1530 = vsel %vm1523, %v1528, %v1529
      %v1531 = vrot.slane %v1035, 5
      %v1532 = vrot.slane %v1531, 4
      %v1533 = vrot.slane %v1036, 5
      %v1534 = vsel %vm1523, %v1532, %v1533
      %v1535 = vrot.slane %v1533, 4
      %v1536 = vrot.slane %v1037, 5
      %v1537 = vsel %vm1523, %v1535, %v1536
      %v1538 = vrot.slane %v1038, 5
      %v1539 = vrot.slane %v1538, 4
      %v1540 = vrot.slane %v1039, 5
      %v1541 = vsel %vm1523, %v1539, %v1540
      %v1542 = vrot.slane %v1540, 4
      %v1543 = vrot.slane %v1040, 5
      %v1544 = vsel %vm1523, %v1542, %v1543
      %v1545 = vrot.slane %v1041, 5
      %v1546 = vrot.slane %v1545, 4
      %v1547 = vrot.slane %v1042, 5
      %v1548 = vsel %vm1523, %v1546, %v1547
      %v1549 = vrot.slane %v1547, 4
      %v1550 = vrot.slane %v1043, 5
      %v1551 = vsel %vm1523, %v1549, %v1550
      %v1552 = vrot.slane %v1044, 5
      %v1553 = vrot.slane %v1552, 4
      %v1554 = vrot.slane %v1045, 5
      %v1555 = vsel %vm1523, %v1553, %v1554
      %v1556 = vrot.slane %v1554, 4
      %v1557 = vrot.slane %v1046, 5
      %v1558 = vsel %vm1523, %v1556, %v1557
      %v1559 = vrot.slane %v1047, 5
      %v1560 = vrot.slane %v1559, 4
      %v1561 = vrot.slane %v1048, 5
      %v1562 = vsel %vm1523, %v1560, %v1561
      %v1563 = vrot.slane %v1561, 4
      %v1564 = vrot.slane %v1049, 5
      %v1565 = vsel %vm1523, %v1563, %v1564
      %v1566 = vrot.slane %v1050, 5
      %v1567 = vrot.slane %v1566, 4
      %v1568 = vrot.slane %v1051, 5
      %v1569 = vsel %vm1523, %v1567, %v1568
      %v1570 = vrot.slane %v1568, 4
      %v1571 = vrot.slane %v1052, 5
      %v1572 = vsel %vm1523, %v1570, %v1571
      %v1573 = vrot.slane %v1053, 5
      %v1574 = vrot.slane %v1573, 4
      %v1575 = vrot.slane %v1054, 5
      %v1576 = vsel %vm1523, %v1574, %v1575
      %v1577 = vrot.slane %v1575, 4
      %v1578 = vrot.slane %v1055, 5
      %v1579 = vsel %vm1523, %v1577, %v1578
      %v1580 = vrot.slane %v1056, 5
      %v1581 = vrot.slane %v1580, 4
      %v1582 = vrot.slane %v1057, 5
      %v1583 = vsel %vm1523, %v1581, %v1582
      %v1584 = vrot.slane %v1582, 4
      %v1585 = vrot.slane %v1058, 5
      %v1586 = vsel %vm1523, %v1584, %v1585
      %v1587 = vrot.slane %v1059, 5
      %v1588 = vrot.slane %v1587, 4
      %v1589 = vrot.slane %v1060, 5
      %v1590 = vsel %vm1523, %v1588, %v1589
      %v1591 = vrot.slane %v1589, 4
      %v1592 = vrot.slane %v1061, 5
      %v1593 = vsel %vm1523, %v1591, %v1592
      %v1594 = vrot.slane %v1062, 5
      %v1595 = vrot.slane %v1594, 4
      %v1596 = vrot.slane %v1063, 5
      %v1597 = vsel %vm1523, %v1595, %v1596
      %v1598 = vrot.slane %v1596, 4
      %v1599 = vrot.slane %v1064, 5
      %v1600 = vsel %vm1523, %v1598, %v1599
      %v1601 = vrot.slane %v1065, 5
      %v1602 = vrot.slane %v1601, 4
      %v1603 = vrot.slane %v1066, 5
      %v1604 = vsel %vm1523, %v1602, %v1603
      %v1605 = vrot.slane %v1603, 4
      %v1606 = vrot.slane %v1067, 5
      %v1607 = vsel %vm1523, %v1605, %v1606
      %v1608 = vrot.slane %v1068, 5
      %v1609 = vrot.slane %v1608, 4
      %v1610 = vrot.slane %v1069, 5
      %v1611 = vsel %vm1523, %v1609, %v1610
      %v1612 = vrot.slane %v1610, 4
      %v1613 = vrot.slane %v1070, 5
      %v1614 = vsel %vm1523, %v1612, %v1613
      %v1615 = vrot.slane %v1071, 5
      %v1616 = vrot.slane %v1615, 4
      %v1617 = vrot.slane %v1072, 5
      %v1618 = vsel %vm1523, %v1616, %v1617
      %v1619 = vrot.slane %v1617, 4
      %v1620 = vrot.slane %v1073, 5
      %v1621 = vsel %vm1523, %v1619, %v1620
      %v1622 = vrot.slane %v1074, 5
      %v1623 = vrot.slane %v1622, 4
      %v1624 = vrot.slane %v1075, 5
      %v1625 = vsel %vm1523, %v1623, %v1624
      %v1626 = vrot.slane %v1624, 4
      %v1627 = vrot.slane %v1076, 5
      %v1628 = vsel %vm1523, %v1626, %v1627
      %v1629 = vrot.slane %v1077, 5
      %v1630 = vrot.slane %v1629, 4
      %v1631 = vrot.slane %v1078, 5
      %v1632 = vsel %vm1523, %v1630, %v1631
      %v1633 = vrot.slane %v1631, 4
      %v1634 = vrot.slane %v1079, 5
      %v1635 = vsel %vm1523, %v1633, %v1634
      %v1637 = vshrl.u32 %v1080, 16
      %v1639 = vrot.slane %v1637, 4
      %v1640 = vshll.u32 %v1080, 16
      %v1642 = vrot.slane %v1640, 5
      %v1643 = vor.u32 %v1639, %v1642
      %v1644 = vrot.slane %v1643, 4
      %v1646 = vshll.u32 %v1081, 16
      %v1648 = vrot.slane %v1646, 5
      %v1649 = vsel %vm1088, %v1644, %v1648
      %v1650 = vshrl.u32 %v1081, 16
      %v1652 = vrot.slane %v1650, 4
      %v1653 = vor.u32 %v1652, %v1648
      %v1654 = vrot.slane %v1653, 4
      %v1656 = vshll.u32 %v1082, 16
      %v1658 = vrot.slane %v1656, 5
      %v1659 = vsel %vm1088, %v1654, %v1658
      %v1663 = vrot.slane %v1080, 5
      %v1664 = vrot.slane %v1663, 4
      %v1665 = vrot.slane %v1081, 5
      %v1666 = vsel %vm1523, %v1664, %v1665
      %v1667 = vrot.slane %v1665, 4
      %v1668 = vrot.slane %v1082, 5
      %v1669 = vsel %vm1523, %v1667, %v1668
      %v1671 = vshrl.u32 %v1083, 16
      %v1673 = vrot.slane %v1671, 4
      %v1674 = vshll.u32 %v1083, 16
      %v1676 = vrot.slane %v1674, 5
      %v1677 = vor.u32 %v1673, %v1676
      %v1678 = vrot.slane %v1677, 4
      %v1680 = vshll.u32 %v1084, 16
      %v1682 = vrot.slane %v1680, 5
      %v1683 = vsel %vm1088, %v1678, %v1682
      %v1684 = vshrl.u32 %v1084, 16
      %v1686 = vrot.slane %v1684, 4
      %v1687 = vor.u32 %v1686, %v1682
      %v1688 = vrot.slane %v1687, 4
      %v1690 = vshll.u32 %v1085, 16
      %v1692 = vrot.slane %v1690, 5
      %v1693 = vsel %vm1088, %v1688, %v1692
      %v1697 = vrot.slane %v1083, 5
      %v1698 = vrot.slane %v1697, 4
      %v1699 = vrot.slane %v1084, 5
      %v1700 = vsel %vm1523, %v1698, %v1699
      %v1701 = vrot.slane %v1699, 4
      %v1702 = vrot.slane %v1085, 5
      %v1703 = vsel %vm1523, %v1701, %v1702
      %v1704 = vunpack.c.l.b16 %v1032
      %v1705 = vunpack.c.l.b16 %v1033
      %v1706 = vunpack.c.l.b16 %v1035
      %v1707 = vunpack.c.l.b16 %v1036
      %v1708 = vunpack.c.l.b16 %v1038
      %v1709 = vunpack.c.l.b16 %v1039
      %v1710 = vunpack.c.l.b16 %v1041
      %v1711 = vunpack.c.l.b16 %v1042
      %v1712 = vunpack.c.l.b16 %v1044
      %v1713 = vunpack.c.l.b16 %v1045
      %v1714 = vunpack.c.l.b16 %v1047
      %v1715 = vunpack.c.l.b16 %v1048
      %v1716 = vunpack.c.l.b16 %v1050
      %v1717 = vunpack.c.l.b16 %v1051
      %v1718 = vunpack.c.l.b16 %v1053
      %v1719 = vunpack.c.l.b16 %v1054
      %v1720 = vunpack.c.l.b16 %v1056
      %v1721 = vunpack.c.l.b16 %v1057
      %v1722 = vunpack.c.l.b16 %v1059
      %v1723 = vunpack.c.l.b16 %v1060
      %v1724 = vunpack.c.l.b16 %v1062
      %v1725 = vunpack.c.l.b16 %v1063
      %v1726 = vunpack.c.l.b16 %v1065
      %v1727 = vunpack.c.l.b16 %v1066
      %v1728 = vunpack.c.l.b16 %v1068
      %v1729 = vunpack.c.l.b16 %v1069
      %v1730 = vunpack.c.l.b16 %v1071
      %v1731 = vunpack.c.l.b16 %v1072
      %v1732 = vunpack.c.l.b16 %v1074
      %v1733 = vunpack.c.l.b16 %v1075
      %v1734 = vunpack.c.l.b16 %v1077
      %v1735 = vunpack.c.l.b16 %v1078
      %v1736 = vpack.c.b16 %v1705, %v1704
      %v1737 = vpack.c.b16 %v1707, %v1706
      %v1738 = vpack.c.b16 %v1709, %v1708
      %v1739 = vpack.c.b16 %v1711, %v1710
      %v1740 = vpack.c.b16 %v1713, %v1712
      %v1741 = vpack.c.b16 %v1715, %v1714
      %v1742 = vpack.c.b16 %v1717, %v1716
      %v1743 = vpack.c.b16 %v1719, %v1718
      %v1744 = vpack.c.b16 %v1721, %v1720
      %v1745 = vpack.c.b16 %v1723, %v1722
      %v1746 = vpack.c.b16 %v1725, %v1724
      %v1747 = vpack.c.b16 %v1727, %v1726
      %v1748 = vpack.c.b16 %v1729, %v1728
      %v1749 = vpack.c.b16 %v1731, %v1730
      %v1750 = vpack.c.b16 %v1733, %v1732
      %v1751 = vpack.c.b16 %v1735, %v1734
      %v1768 = vunpack.c.l.b16 %v1102
      %v1769 = vunpack.c.l.b16 %v1112
      %v1770 = vunpack.c.l.b16 %v1126
      %v1771 = vunpack.c.l.b16 %v1136
      %v1772 = vunpack.c.l.b16 %v1150
      %v1773 = vunpack.c.l.b16 %v1160
      %v1774 = vunpack.c.l.b16 %v1174
      %v1775 = vunpack.c.l.b16 %v1184
      %v1776 = vunpack.c.l.b16 %v1198
      %v1777 = vunpack.c.l.b16 %v1208
      %v1778 = vunpack.c.l.b16 %v1222
      %v1779 = vunpack.c.l.b16 %v1232
      %v1780 = vunpack.c.l.b16 %v1246
      %v1781 = vunpack.c.l.b16 %v1256
      %v1782 = vunpack.c.l.b16 %v1270
      %v1783 = vunpack.c.l.b16 %v1280
      %v1784 = vunpack.c.l.b16 %v1294
      %v1785 = vunpack.c.l.b16 %v1304
      %v1786 = vunpack.c.l.b16 %v1318
      %v1787 = vunpack.c.l.b16 %v1328
      %v1788 = vunpack.c.l.b16 %v1342
      %v1789 = vunpack.c.l.b16 %v1352
      %v1790 = vunpack.c.l.b16 %v1366
      %v1791 = vunpack.c.l.b16 %v1376
      %v1792 = vunpack.c.l.b16 %v1390
      %v1793 = vunpack.c.l.b16 %v1400
      %v1794 = vunpack.c.l.b16 %v1414
      %v1795 = vunpack.c.l.b16 %v1424
      %v1796 = vunpack.c.l.b16 %v1438
      %v1797 = vunpack.c.l.b16 %v1448
      %v1798 = vunpack.c.l.b16 %v1462
      %v1799 = vunpack.c.l.b16 %v1472
      %v1800 = vpack.c.b16 %v1769, %v1768
      %v1801 = vpack.c.b16 %v1771, %v1770
      %v1802 = vpack.c.b16 %v1773, %v1772
      %v1803 = vpack.c.b16 %v1775, %v1774
      %v1804 = vpack.c.b16 %v1777, %v1776
      %v1805 = vpack.c.b16 %v1779, %v1778
      %v1806 = vpack.c.b16 %v1781, %v1780
      %v1807 = vpack.c.b16 %v1783, %v1782
      %v1808 = vpack.c.b16 %v1785, %v1784
      %v1809 = vpack.c.b16 %v1787, %v1786
      %v1810 = vpack.c.b16 %v1789, %v1788
      %v1811 = vpack.c.b16 %v1791, %v1790
      %v1812 = vpack.c.b16 %v1793, %v1792
      %v1813 = vpack.c.b16 %v1795, %v1794
      %v1814 = vpack.c.b16 %v1797, %v1796
      %v1815 = vpack.c.b16 %v1799, %v1798
      %v1832 = vunpack.c.l.b16 %v1527
      %v1833 = vunpack.c.l.b16 %v1530
      %v1834 = vunpack.c.l.b16 %v1534
      %v1835 = vunpack.c.l.b16 %v1537
      %v1836 = vunpack.c.l.b16 %v1541
      %v1837 = vunpack.c.l.b16 %v1544
      %v1838 = vunpack.c.l.b16 %v1548
      %v1839 = vunpack.c.l.b16 %v1551
      %v1840 = vunpack.c.l.b16 %v1555
      %v1841 = vunpack.c.l.b16 %v1558
      %v1842 = vunpack.c.l.b16 %v1562
      %v1843 = vunpack.c.l.b16 %v1565
      %v1844 = vunpack.c.l.b16 %v1569
      %v1845 = vunpack.c.l.b16 %v1572
      %v1846 = vunpack.c.l.b16 %v1576
      %v1847 = vunpack.c.l.b16 %v1579
      %v1848 = vunpack.c.l.b16 %v1583
      %v1849 = vunpack.c.l.b16 %v1586
      %v1850 = vunpack.c.l.b16 %v1590
      %v1851 = vunpack.c.l.b16 %v1593
      %v1852 = vunpack.c.l.b16 %v1597
      %v1853 = vunpack.c.l.b16 %v1600
      %v1854 = vunpack.c.l.b16 %v1604
      %v1855 = vunpack.c.l.b16 %v1607
      %v1856 = vunpack.c.l.b16 %v1611
      %v1857 = vunpack.c.l.b16 %v1614
      %v1858 = vunpack.c.l.b16 %v1618
      %v1859 = vunpack.c.l.b16 %v1621
      %v1860 = vunpack.c.l.b16 %v1625
      %v1861 = vunpack.c.l.b16 %v1628
      %v1862 = vunpack.c.l.b16 %v1632
      %v1863 = vunpack.c.l.b16 %v1635
      %v1864 = vpack.c.b16 %v1833, %v1832
      %v1865 = vpack.c.b16 %v1835, %v1834
      %v1866 = vpack.c.b16 %v1837, %v1836
      %v1867 = vpack.c.b16 %v1839, %v1838
      %v1868 = vpack.c.b16 %v1841, %v1840
      %v1869 = vpack.c.b16 %v1843, %v1842
      %v1870 = vpack.c.b16 %v1845, %v1844
      %v1871 = vpack.c.b16 %v1847, %v1846
      %v1872 = vpack.c.b16 %v1849, %v1848
      %v1873 = vpack.c.b16 %v1851, %v1850
      %v1874 = vpack.c.b16 %v1853, %v1852
      %v1875 = vpack.c.b16 %v1855, %v1854
      %v1876 = vpack.c.b16 %v1857, %v1856
      %v1877 = vpack.c.b16 %v1859, %v1858
      %v1878 = vpack.c.b16 %v1861, %v1860
      %v1879 = vpack.c.b16 %v1863, %v1862
      %v1896 = vunpack.c.l.b16 %v1080
      %v1897 = vunpack.c.l.b16 %v1081
      %v1898 = vpack.c.b16 %v1897, %v1896
      %v1900 = vunpack.c.l.b16 %v1649
      %v1901 = vunpack.c.l.b16 %v1659
      %v1902 = vpack.c.b16 %v1901, %v1900
      %v1904 = vunpack.c.l.b16 %v1666
      %v1905 = vunpack.c.l.b16 %v1669
      %v1906 = vpack.c.b16 %v1905, %v1904
      %v1908 = vunpack.c.l.b16 %v1083
      %v1909 = vunpack.c.l.b16 %v1084
      %v1910 = vpack.c.b16 %v1909, %v1908
      %v1912 = vunpack.c.l.b16 %v1683
      %v1913 = vunpack.c.l.b16 %v1693
      %v1914 = vpack.c.b16 %v1913, %v1912
      %v1916 = vunpack.c.l.b16 %v1700
      %v1917 = vunpack.c.l.b16 %v1703
      %v1918 = vpack.c.b16 %v1917, %v1916
      %v1920 = vld [vmem:[%s1] sm:$0xf]
      %v1921 = vld [vmem:[%s1 + $0x4] sm:$0xf]
      %v1922 = vld [vmem:[%s1 + $0x8] sm:$0xf]
      %v1923 = vld [vmem:[%s1 + $0xc] sm:$0xf]
      %v1924 = vld [vmem:[%s1 + $0x10] sm:$0xf]
      %v1925 = vld [vmem:[%s1 + $0x14] sm:$0xf]
      %v1926 = vld [vmem:[%s1 + $0x18] sm:$0xf]
      %v1927 = vld [vmem:[%s1 + $0x1c] sm:$0xf]
      %v1928 = vld [vmem:[%s1 + $0x20] sm:$0xf]
      %v1929 = vld [vmem:[%s1 + $0x24] sm:$0xf]
      %v1930 = vld [vmem:[%s1 + $0x28] sm:$0xf]
      %v1931 = vld [vmem:[%s1 + $0x2c] sm:$0xf]
      %v1932 = vld [vmem:[%s1 + $0x30] sm:$0xf]
      %v1933 = vld [vmem:[%s1 + $0x34] sm:$0xf]
      %v1934 = vld [vmem:[%s1 + $0x38] sm:$0xf]
      %v1935 = vld [vmem:[%s1 + $0x3c] sm:$0xf]
      %v1936 = vld [vmem:[%s1 + $0x40] sm:$0xf]
      %v1937 = vld [vmem:[%s1 + $0x44] sm:$0xf]
      %v1938 = vld [vmem:[%s1 + $0x48] sm:$0xf]
      %v1939 = vld [vmem:[%s1 + $0x4c] sm:$0xf]
      %v1940 = vld [vmem:[%s1 + $0x50] sm:$0xf]
      %v1941 = vld [vmem:[%s1 + $0x54] sm:$0xf]
      %v1942 = vld [vmem:[%s1 + $0x58] sm:$0xf]
      %v1943 = vld [vmem:[%s1 + $0x5c] sm:$0xf]
      %v1944 = vld [vmem:[%s1 + $0x60] sm:$0xf]
      %v1945 = vld [vmem:[%s1 + $0x64] sm:$0xf]
      %v1946 = vld [vmem:[%s1 + $0x68] sm:$0xf]
      %v1947 = vld [vmem:[%s1 + $0x6c] sm:$0xf]
      %v1948 = vld [vmem:[%s1 + $0x70] sm:$0xf]
      %v1949 = vld [vmem:[%s1 + $0x74] sm:$0xf]
      %v1950 = vld [vmem:[%s1 + $0x78] sm:$0xf]
      %v1951 = vld [vmem:[%s1 + $0x7c] sm:$0xf]
      %v1952 = vld [vmem:[%s1 + $0x80] sm:$0xf]
      %v1953 = vld [vmem:[%s1 + $0x84] sm:$0xf]
      %v1954 = vld [vmem:[%s1 + $0x88] sm:$0xf]
      %v1955 = vld [vmem:[%s1 + $0x8c] sm:$0xf]
      %v1956 = vld [vmem:[%s1 + $0x90] sm:$0xf]
      %v1957 = vld [vmem:[%s1 + $0x94] sm:$0xf]
      %v1958 = vld [vmem:[%s1 + $0x98] sm:$0xf]
      %v1959 = vld [vmem:[%s1 + $0x9c] sm:$0xf]
      %v1960 = vld [vmem:[%s1 + $0xa0] sm:$0xf]
      %v1961 = vld [vmem:[%s1 + $0xa4] sm:$0xf]
      %v1962 = vld [vmem:[%s1 + $0xa8] sm:$0xf]
      %v1963 = vld [vmem:[%s1 + $0xac] sm:$0xf]
      %v1964 = vld [vmem:[%s1 + $0xb0] sm:$0xf]
      %v1965 = vld [vmem:[%s1 + $0xb4] sm:$0xf]
      %v1966 = vld [vmem:[%s1 + $0xb8] sm:$0xf]
      %v1967 = vld [vmem:[%s1 + $0xbc] sm:$0xf]
      %v1968 = vld [vmem:[%s1 + $0xc0] sm:$0xf]
      %v1969 = vld [vmem:[%s1 + $0xc4] sm:$0xf]
      %v1970 = vld [vmem:[%s1 + $0xc8] sm:$0xf]
      %v1971 = vld [vmem:[%s1 + $0xcc] sm:$0xf]
      %v1972 = vld [vmem:[%s1 + $0xd0] sm:$0xf]
      %v1973 = vld [vmem:[%s1 + $0xd4] sm:$0xf]
      %v1974 = vld [vmem:[%s1 + $0xd8] sm:$0xf]
      %v1975 = vld [vmem:[%s1 + $0xdc] sm:$0xf]
      %v1976 = vld [vmem:[%s1 + $0xe0] sm:$0xf]
      %v1977 = vld [vmem:[%s1 + $0xe4] sm:$0xf]
      %v1978 = vld [vmem:[%s1 + $0xe8] sm:$0xf]
      %v1979 = vld [vmem:[%s1 + $0xec] sm:$0xf]
      %v1980 = vld [vmem:[%s1 + $0xf0] sm:$0xf]
      %v1981 = vld [vmem:[%s1 + $0xf4] sm:$0xf]
      %v1982 = vld [vmem:[%s1 + $0xf8] sm:$0xf]
      %v1983 = vld [vmem:[%s1 + $0xfc] sm:$0xf]
      %v1984 = vld [vmem:[%s1 + $0x100] sm:$0xf]
      %v1985 = vld [vmem:[%s1 + $0x104] sm:$0xf]
      %v1986 = vld [vmem:[%s1 + $0x108] sm:$0xf]
      %v1987 = vld [vmem:[%s1 + $0x10c] sm:$0xf]
      %v1988 = vld [vmem:[%s1 + $0x110] sm:$0xf]
      %v1989 = vld [vmem:[%s1 + $0x114] sm:$0xf]
      %v1990 = vld [vmem:[%s1 + $0x118] sm:$0xf]
      %v1991 = vld [vmem:[%s1 + $0x11c] sm:$0xf]
      %v1992 = vld [vmem:[%s1 + $0x120] sm:$0xf]
      %v1993 = vld [vmem:[%s1 + $0x124] sm:$0xf]
      %v1994 = vld [vmem:[%s1 + $0x128] sm:$0xf]
      %v1995 = vld [vmem:[%s1 + $0x12c] sm:$0xf]
      %v1996 = vld [vmem:[%s1 + $0x130] sm:$0xf]
      %v1997 = vld [vmem:[%s1 + $0x134] sm:$0xf]
      %v1998 = vld [vmem:[%s1 + $0x138] sm:$0xf]
      %v1999 = vld [vmem:[%s1 + $0x13c] sm:$0xf]
      %v2000 = vld [vmem:[%s1 + $0x140] sm:$0xf]
      %v2001 = vld [vmem:[%s1 + $0x144] sm:$0xf]
      %v2002 = vld [vmem:[%s1 + $0x148] sm:$0xf]
      %v2003 = vld [vmem:[%s1 + $0x14c] sm:$0xf]
      %v2004 = vld [vmem:[%s1 + $0x150] sm:$0xf]
      %v2005 = vld [vmem:[%s1 + $0x154] sm:$0xf]
      %v2006 = vld [vmem:[%s1 + $0x158] sm:$0xf]
      %v2007 = vld [vmem:[%s1 + $0x15c] sm:$0xf]
      %v2008 = vld [vmem:[%s1 + $0x160] sm:$0xf]
      %v2009 = vld [vmem:[%s1 + $0x164] sm:$0xf]
      %v2010 = vld [vmem:[%s1 + $0x168] sm:$0xf]
      %v2011 = vld [vmem:[%s1 + $0x16c] sm:$0xf]
      %v2012 = vld [vmem:[%s1 + $0x170] sm:$0xf]
      %v2013 = vld [vmem:[%s1 + $0x174] sm:$0xf]
      %v2014 = vld [vmem:[%s1 + $0x178] sm:$0xf]
      %v2015 = vld [vmem:[%s1 + $0x17c] sm:$0xf]
      %v2016 = vld [vmem:[%s1 + $0x180] sm:$0xf]
      %v2017 = vld [vmem:[%s1 + $0x184] sm:$0xf]
      %v2018 = vld [vmem:[%s1 + $0x188] sm:$0xf]
      %v2019 = vld [vmem:[%s1 + $0x18c] sm:$0xf]
      %v2020 = vld [vmem:[%s1 + $0x190] sm:$0xf]
      %v2021 = vld [vmem:[%s1 + $0x194] sm:$0xf]
      %v2022 = vld [vmem:[%s1 + $0x198] sm:$0xf]
      %v2023 = vld [vmem:[%s1 + $0x19c] sm:$0xf]
      %v2024 = vld [vmem:[%s1 + $0x1a0] sm:$0xf]
      %v2025 = vld [vmem:[%s1 + $0x1a4] sm:$0xf]
      %v2026 = vld [vmem:[%s1 + $0x1a8] sm:$0xf]
      %v2027 = vld [vmem:[%s1 + $0x1ac] sm:$0xf]
      %v2028 = vld [vmem:[%s1 + $0x1b0] sm:$0xf]
      %v2029 = vld [vmem:[%s1 + $0x1b4] sm:$0xf]
      %v2030 = vld [vmem:[%s1 + $0x1b8] sm:$0xf]
      %v2031 = vld [vmem:[%s1 + $0x1bc] sm:$0xf]
      %v2032 = vld [vmem:[%s1 + $0x1c0] sm:$0xf]
      %v2033 = vld [vmem:[%s1 + $0x1c4] sm:$0xf]
      %v2034 = vld [vmem:[%s1 + $0x1c8] sm:$0xf]
      %v2035 = vld [vmem:[%s1 + $0x1cc] sm:$0xf]
      %v2036 = vld [vmem:[%s1 + $0x1d0] sm:$0xf]
      %v2037 = vld [vmem:[%s1 + $0x1d4] sm:$0xf]
      %v2038 = vld [vmem:[%s1 + $0x1d8] sm:$0xf]
      %v2039 = vld [vmem:[%s1 + $0x1dc] sm:$0xf]
      %v2040 = vld [vmem:[%s1 + $0x1e0] sm:$0xf]
      %v2041 = vld [vmem:[%s1 + $0x1e4] sm:$0xf]
      %v2042 = vld [vmem:[%s1 + $0x1e8] sm:$0xf]
      %v2043 = vld [vmem:[%s1 + $0x1ec] sm:$0xf]
      %v2044 = vld [vmem:[%s1 + $0x1f0] sm:$0xf]
      %v2045 = vld [vmem:[%s1 + $0x1f4] sm:$0xf]
      %v2046 = vld [vmem:[%s1 + $0x1f8] sm:$0xf]
      %v2047 = vld [vmem:[%s1 + $0x1fc] sm:$0xf]
      %v2048 = vld [vmem:[%s1 + $0x200] sm:$0xf]
      %v2049 = vld [vmem:[%s1 + $0x204] sm:$0xf]
      %v2050 = vld [vmem:[%s1 + $0x208] sm:$0xf]
      %v2051 = vld [vmem:[%s1 + $0x20c] sm:$0xf]
      %v2052 = vld [vmem:[%s1 + $0x210] sm:$0xf]
      %v2053 = vld [vmem:[%s1 + $0x214] sm:$0xf]
      %v2054 = vld [vmem:[%s1 + $0x218] sm:$0xf]
      %v2055 = vld [vmem:[%s1 + $0x21c] sm:$0xf]
      %v2056 = vld [vmem:[%s1 + $0x220] sm:$0xf]
      %v2057 = vld [vmem:[%s1 + $0x224] sm:$0xf]
      %v2058 = vld [vmem:[%s1 + $0x228] sm:$0xf]
      %v2059 = vld [vmem:[%s1 + $0x22c] sm:$0xf]
      %v2060 = vld [vmem:[%s1 + $0x230] sm:$0xf]
      %v2061 = vld [vmem:[%s1 + $0x234] sm:$0xf]
      %v2062 = vld [vmem:[%s1 + $0x238] sm:$0xf]
      %v2063 = vld [vmem:[%s1 + $0x23c] sm:$0xf]
      %v2208 = vunpack.c.l.b16 %v1920
      %v2209 = vunpack.c.l.b16 %v1921
      %v2210 = vunpack.c.l.b16 %v1922
      %v2211 = vunpack.c.l.b16 %v1923
      %v2212 = vunpack.c.l.b16 %v1924
      %v2213 = vunpack.c.l.b16 %v1925
      %v2214 = vunpack.c.l.b16 %v1926
      %v2215 = vunpack.c.l.b16 %v1927
      %v2216 = vunpack.c.l.b16 %v1928
      %v2217 = vunpack.c.l.b16 %v1929
      %v2218 = vunpack.c.l.b16 %v1930
      %v2219 = vunpack.c.l.b16 %v1931
      %v2220 = vunpack.c.l.b16 %v1932
      %v2221 = vunpack.c.l.b16 %v1933
      %v2222 = vunpack.c.l.b16 %v1934
      %v2223 = vunpack.c.l.b16 %v1935
      %v2224 = vunpack.c.l.b16 %v1936
      %v2225 = vunpack.c.l.b16 %v1937
      %v2226 = vunpack.c.l.b16 %v1938
      %v2227 = vunpack.c.l.b16 %v1939
      %v2228 = vunpack.c.l.b16 %v1940
      %v2229 = vunpack.c.l.b16 %v1941
      %v2230 = vunpack.c.l.b16 %v1942
      %v2231 = vunpack.c.l.b16 %v1943
      %v2232 = vunpack.c.l.b16 %v1944
      %v2233 = vunpack.c.l.b16 %v1945
      %v2234 = vunpack.c.l.b16 %v1946
      %v2235 = vunpack.c.l.b16 %v1947
      %v2236 = vunpack.c.l.b16 %v1948
      %v2237 = vunpack.c.l.b16 %v1949
      %v2238 = vunpack.c.l.b16 %v1950
      %v2239 = vunpack.c.l.b16 %v1951
      %v2240 = vunpack.c.l.b16 %v1952
      %v2241 = vunpack.c.l.b16 %v1953
      %v2242 = vunpack.c.l.b16 %v1954
      %v2243 = vunpack.c.l.b16 %v1955
      %v2244 = vunpack.c.l.b16 %v1956
      %v2245 = vunpack.c.l.b16 %v1957
      %v2246 = vunpack.c.l.b16 %v1958
      %v2247 = vunpack.c.l.b16 %v1959
      %v2248 = vunpack.c.l.b16 %v1960
      %v2249 = vunpack.c.l.b16 %v1961
      %v2250 = vunpack.c.l.b16 %v1962
      %v2251 = vunpack.c.l.b16 %v1963
      %v2252 = vunpack.c.l.b16 %v1964
      %v2253 = vunpack.c.l.b16 %v1965
      %v2254 = vunpack.c.l.b16 %v1966
      %v2255 = vunpack.c.l.b16 %v1967
      %v2256 = vunpack.c.l.b16 %v1968
      %v2257 = vunpack.c.l.b16 %v1969
      %v2258 = vunpack.c.l.b16 %v1970
      %v2259 = vunpack.c.l.b16 %v1971
      %v2260 = vunpack.c.l.b16 %v1972
      %v2261 = vunpack.c.l.b16 %v1973
      %v2262 = vunpack.c.l.b16 %v1974
      %v2263 = vunpack.c.l.b16 %v1975
      %v2264 = vunpack.c.l.b16 %v1976
      %v2265 = vunpack.c.l.b16 %v1977
      %v2266 = vunpack.c.l.b16 %v1978
      %v2267 = vunpack.c.l.b16 %v1979
      %v2268 = vunpack.c.l.b16 %v1980
      %v2269 = vunpack.c.l.b16 %v1981
      %v2270 = vunpack.c.l.b16 %v1982
      %v2271 = vunpack.c.l.b16 %v1983
      %v2272 = vunpack.c.l.b16 %v1984
      %v2273 = vunpack.c.l.b16 %v1985
      %v2274 = vunpack.c.l.b16 %v1986
      %v2275 = vunpack.c.l.b16 %v1987
      %v2276 = vunpack.c.l.b16 %v1988
      %v2277 = vunpack.c.l.b16 %v1989
      %v2278 = vunpack.c.l.b16 %v1990
      %v2279 = vunpack.c.l.b16 %v1991
      %v2280 = vunpack.c.l.b16 %v1992
      %v2281 = vunpack.c.l.b16 %v1993
      %v2282 = vunpack.c.l.b16 %v1994
      %v2283 = vunpack.c.l.b16 %v1995
      %v2284 = vunpack.c.l.b16 %v1996
      %v2285 = vunpack.c.l.b16 %v1997
      %v2286 = vunpack.c.l.b16 %v1998
      %v2287 = vunpack.c.l.b16 %v1999
      %v2288 = vunpack.c.l.b16 %v2000
      %v2289 = vunpack.c.l.b16 %v2001
      %v2290 = vunpack.c.l.b16 %v2002
      %v2291 = vunpack.c.l.b16 %v2003
      %v2292 = vunpack.c.l.b16 %v2004
      %v2293 = vunpack.c.l.b16 %v2005
      %v2294 = vunpack.c.l.b16 %v2006
      %v2295 = vunpack.c.l.b16 %v2007
      %v2296 = vunpack.c.l.b16 %v2008
      %v2297 = vunpack.c.l.b16 %v2009
      %v2298 = vunpack.c.l.b16 %v2010
      %v2299 = vunpack.c.l.b16 %v2011
      %v2300 = vunpack.c.l.b16 %v2012
      %v2301 = vunpack.c.l.b16 %v2013
      %v2302 = vunpack.c.l.b16 %v2014
      %v2303 = vunpack.c.l.b16 %v2015
      %v2304 = vunpack.c.l.b16 %v2016
      %v2305 = vunpack.c.l.b16 %v2017
      %v2306 = vunpack.c.l.b16 %v2018
      %v2307 = vunpack.c.l.b16 %v2019
      %v2308 = vunpack.c.l.b16 %v2020
      %v2309 = vunpack.c.l.b16 %v2021
      %v2310 = vunpack.c.l.b16 %v2022
      %v2311 = vunpack.c.l.b16 %v2023
      %v2312 = vunpack.c.l.b16 %v2024
      %v2313 = vunpack.c.l.b16 %v2025
      %v2314 = vunpack.c.l.b16 %v2026
      %v2315 = vunpack.c.l.b16 %v2027
      %v2316 = vunpack.c.l.b16 %v2028
      %v2317 = vunpack.c.l.b16 %v2029
      %v2318 = vunpack.c.l.b16 %v2030
      %v2319 = vunpack.c.l.b16 %v2031
      %v2320 = vunpack.c.l.b16 %v2032
      %v2321 = vunpack.c.l.b16 %v2033
      %v2322 = vunpack.c.l.b16 %v2034
      %v2323 = vunpack.c.l.b16 %v2035
      %v2324 = vunpack.c.l.b16 %v2036
      %v2325 = vunpack.c.l.b16 %v2037
      %v2326 = vunpack.c.l.b16 %v2038
      %v2327 = vunpack.c.l.b16 %v2039
      %v2328 = vunpack.c.l.b16 %v2040
      %v2329 = vunpack.c.l.b16 %v2041
      %v2330 = vunpack.c.l.b16 %v2042
      %v2331 = vunpack.c.l.b16 %v2043
      %v2332 = vunpack.c.l.b16 %v2044
      %v2333 = vunpack.c.l.b16 %v2045
      %v2334 = vunpack.c.l.b16 %v2046
      %v2335 = vunpack.c.l.b16 %v2047
      %v2336 = vunpack.c.l.b16 %v2048
      %v2337 = vunpack.c.l.b16 %v2049
      %v2338 = vunpack.c.l.b16 %v2050
      %v2339 = vunpack.c.l.b16 %v2051
      %v2340 = vunpack.c.l.b16 %v2052
      %v2341 = vunpack.c.l.b16 %v2053
      %v2342 = vunpack.c.l.b16 %v2054
      %v2343 = vunpack.c.l.b16 %v2055
      %v2344 = vunpack.c.l.b16 %v2056
      %v2345 = vunpack.c.l.b16 %v2057
      %v2346 = vunpack.c.l.b16 %v2058
      %v2347 = vunpack.c.l.b16 %v2059
      %v2348 = vunpack.c.l.b16 %v2060
      %v2349 = vunpack.c.l.b16 %v2061
      %v2350 = vunpack.c.l.b16 %v2062
      %v2351 = vunpack.c.l.b16 %v2063
      %v2352 = vpack.c.b16 %v2209, %v2208
      %v2353 = vpack.c.b16 %v2211, %v2210
      %v2354 = vpack.c.b16 %v2213, %v2212
      %v2355 = vpack.c.b16 %v2215, %v2214
      %v2356 = vpack.c.b16 %v2217, %v2216
      %v2357 = vpack.c.b16 %v2219, %v2218
      %v2358 = vpack.c.b16 %v2221, %v2220
      %v2359 = vpack.c.b16 %v2223, %v2222
      %v2360 = vpack.c.b16 %v2225, %v2224
      %v2361 = vpack.c.b16 %v2227, %v2226
      %v2362 = vpack.c.b16 %v2229, %v2228
      %v2363 = vpack.c.b16 %v2231, %v2230
      %v2364 = vpack.c.b16 %v2233, %v2232
      %v2365 = vpack.c.b16 %v2235, %v2234
      %v2366 = vpack.c.b16 %v2237, %v2236
      %v2367 = vpack.c.b16 %v2239, %v2238
      %v2368 = vpack.c.b16 %v2241, %v2240
      %v2369 = vpack.c.b16 %v2243, %v2242
      %v2370 = vpack.c.b16 %v2245, %v2244
      %v2371 = vpack.c.b16 %v2247, %v2246
      %v2372 = vpack.c.b16 %v2249, %v2248
      %v2373 = vpack.c.b16 %v2251, %v2250
      %v2374 = vpack.c.b16 %v2253, %v2252
      %v2375 = vpack.c.b16 %v2255, %v2254
      %v2376 = vpack.c.b16 %v2257, %v2256
      %v2377 = vpack.c.b16 %v2259, %v2258
      %v2378 = vpack.c.b16 %v2261, %v2260
      %v2379 = vpack.c.b16 %v2263, %v2262
      %v2380 = vpack.c.b16 %v2265, %v2264
      %v2381 = vpack.c.b16 %v2267, %v2266
      %v2382 = vpack.c.b16 %v2269, %v2268
      %v2383 = vpack.c.b16 %v2271, %v2270
      %v2384 = vpack.c.b16 %v2273, %v2272
      %v2385 = vpack.c.b16 %v2275, %v2274
      %v2386 = vpack.c.b16 %v2277, %v2276
      %v2387 = vpack.c.b16 %v2279, %v2278
      %v2388 = vpack.c.b16 %v2281, %v2280
      %v2389 = vpack.c.b16 %v2283, %v2282
      %v2390 = vpack.c.b16 %v2285, %v2284
      %v2391 = vpack.c.b16 %v2287, %v2286
      %v2392 = vpack.c.b16 %v2289, %v2288
      %v2393 = vpack.c.b16 %v2291, %v2290
      %v2394 = vpack.c.b16 %v2293, %v2292
      %v2395 = vpack.c.b16 %v2295, %v2294
      %v2396 = vpack.c.b16 %v2297, %v2296
      %v2397 = vpack.c.b16 %v2299, %v2298
      %v2398 = vpack.c.b16 %v2301, %v2300
      %v2399 = vpack.c.b16 %v2303, %v2302
      %v2400 = vpack.c.b16 %v2305, %v2304
      %v2401 = vpack.c.b16 %v2307, %v2306
      %v2402 = vpack.c.b16 %v2309, %v2308
      %v2403 = vpack.c.b16 %v2311, %v2310
      %v2404 = vpack.c.b16 %v2313, %v2312
      %v2405 = vpack.c.b16 %v2315, %v2314
      %v2406 = vpack.c.b16 %v2317, %v2316
      %v2407 = vpack.c.b16 %v2319, %v2318
      %v2408 = vpack.c.b16 %v2321, %v2320
      %v2409 = vpack.c.b16 %v2323, %v2322
      %v2410 = vpack.c.b16 %v2325, %v2324
      %v2411 = vpack.c.b16 %v2327, %v2326
      %v2412 = vpack.c.b16 %v2329, %v2328
      %v2413 = vpack.c.b16 %v2331, %v2330
      %v2414 = vpack.c.b16 %v2333, %v2332
      %v2415 = vpack.c.b16 %v2335, %v2334
      %v2416 = vpack.c.b16 %v2337, %v2336
      %v2417 = vpack.c.b16 %v2339, %v2338
      %v2418 = vpack.c.b16 %v2341, %v2340
      %v2419 = vpack.c.b16 %v2343, %v2342
      %v2420 = vpack.c.b16 %v2345, %v2344
      %v2421 = vpack.c.b16 %v2347, %v2346
      %v2422 = vpack.c.b16 %v2349, %v2348
      %v2423 = vpack.c.b16 %v2351, %v2350
      %2496 = vmatprep.subr.bf16.mxu0 0
      %2497 = vmatpush1.bf16.msra.mxu0 %v2359
      %2498 = vmatprep.subr.bf16.mxu0 0
      %2499 = vmatpush1.bf16.msra.mxu0 %v2358
      %2500 = vmatprep.subr.bf16.mxu0 0
      %2501 = vmatpush1.bf16.msra.mxu0 %v2357
      %2502 = vmatprep.subr.bf16.mxu0 0
      %2503 = vmatpush1.bf16.msra.mxu0 %v2356
      %2504 = vmatprep.subr.bf16.mxu0 0
      %2505 = vmatpush1.bf16.msra.mxu0 %v2355
      %2506 = vmatprep.subr.bf16.mxu0 0
      %2507 = vmatpush1.bf16.msra.mxu0 %v2354
      %2508 = vmatprep.subr.bf16.mxu0 0
      %2509 = vmatpush1.bf16.msra.mxu0 %v2353
      %2510 = vmatprep.subr.bf16.mxu0 0
      %2511 = vmatpush1.bf16.msra.mxu0 %v2352
      %2512 = vmatprep.subr.bf16.mxu0 0
      %2513 = vmatpush2.bf16.msra.mxu0 %v2367
      %2514 = vmatprep.subr.bf16.mxu0 0
      %2515 = vmatpush2.bf16.msra.mxu0 %v2366
      %2516 = vmatprep.subr.bf16.mxu0 0
      %2517 = vmatpush2.bf16.msra.mxu0 %v2365
      %2518 = vmatprep.subr.bf16.mxu0 0
      %2519 = vmatpush2.bf16.msra.mxu0 %v2364
      %2520 = vmatprep.subr.bf16.mxu0 0
      %2521 = vmatpush2.bf16.msra.mxu0 %v2363
      %2522 = vmatprep.subr.bf16.mxu0 0
      %2523 = vmatpush2.bf16.msra.mxu0 %v2362
      %2524 = vmatprep.subr.bf16.mxu0 0
      %2525 = vmatpush2.bf16.msra.mxu0 %v2361
      %2526 = vmatprep.subr.bf16.mxu0 0
      %2527 = vmatpush2.bf16.msra.mxu0 %v2360
      %2528 = vmatprep.mubr.bf16.mxu0 %v1800
      %2529 = vmatmul.mubr.bf16.gmra.mxu0 %v1736
      %v2530 = vpop.f32.mrf.mxu0
      %v2531 = vadd.f32 0.0, %v2530
      %v2532 = vpop.f32.mrf.mxu0
      %v2533 = vpop.f32.mrf.mxu0
      %v2534 = vadd.f32 0.0, %v2533
      %v2535 = vpop.f32.mrf.mxu0
      %2536 = vmatprep.mubr.bf16.mxu0 %v1801
      %2537 = vmatmul.mubr.bf16.gmra.mxu0 %v1737
      %v2538 = vpop.f32.mrf.mxu0
      %v2539 = vadd.f32 0.0, %v2538
      %v2540 = vpop.f32.mrf.mxu0
      %v2541 = vpop.f32.mrf.mxu0
      %v2542 = vadd.f32 0.0, %v2541
      %v2543 = vpop.f32.mrf.mxu0
      %2544 = vmatprep.mubr.bf16.mxu0 %v1802
      %2545 = vmatmul.mubr.bf16.gmra.mxu0 %v1738
      %v2546 = vpop.f32.mrf.mxu0
      %v2547 = vadd.f32 0.0, %v2546
      %v2548 = vpop.f32.mrf.mxu0
      %v2549 = vpop.f32.mrf.mxu0
      %v2550 = vadd.f32 0.0, %v2549
      %v2551 = vpop.f32.mrf.mxu0
      %2552 = vmatprep.mubr.bf16.mxu0 %v1803
      %2553 = vmatmul.mubr.bf16.gmra.mxu0 %v1739
      %v2554 = vpop.f32.mrf.mxu0
      %v2555 = vadd.f32 0.0, %v2554
      %v2556 = vpop.f32.mrf.mxu0
      %v2557 = vpop.f32.mrf.mxu0
      %v2558 = vadd.f32 0.0, %v2557
      %v2559 = vpop.f32.mrf.mxu0
      %2560 = vmatprep.mubr.bf16.mxu0 %v1804
      %2561 = vmatmul.mubr.bf16.gmra.mxu0 %v1740
      %v2562 = vpop.f32.mrf.mxu0
      %v2563 = vadd.f32 0.0, %v2562
      %v2564 = vpop.f32.mrf.mxu0
      %v2565 = vpop.f32.mrf.mxu0
      %v2566 = vadd.f32 0.0, %v2565
      %v2567 = vpop.f32.mrf.mxu0
      %2568 = vmatprep.mubr.bf16.mxu0 %v1805
      %2569 = vmatmul.mubr.bf16.gmra.mxu0 %v1741
      %v2570 = vpop.f32.mrf.mxu0
      %v2571 = vadd.f32 0.0, %v2570
      %v2572 = vpop.f32.mrf.mxu0
      %v2573 = vpop.f32.mrf.mxu0
      %v2574 = vadd.f32 0.0, %v2573
      %v2575 = vpop.f32.mrf.mxu0
      %2576 = vmatprep.mubr.bf16.mxu0 %v1806
      %2577 = vmatmul.mubr.bf16.gmra.mxu0 %v1742
      %v2578 = vpop.f32.mrf.mxu0
      %v2579 = vadd.f32 0.0, %v2578
      %v2580 = vpop.f32.mrf.mxu0
      %v2581 = vpop.f32.mrf.mxu0
      %v2582 = vadd.f32 0.0, %v2581
      %v2583 = vpop.f32.mrf.mxu0
      %2584 = vmatprep.mubr.bf16.mxu0 %v1807
      %2585 = vmatmul.mubr.bf16.gmra.mxu0 %v1743
      %v2586 = vpop.f32.mrf.mxu0
      %v2587 = vadd.f32 0.0, %v2586
      %v2588 = vpop.f32.mrf.mxu0
      %v2589 = vpop.f32.mrf.mxu0
      %v2590 = vadd.f32 0.0, %v2589
      %v2591 = vpop.f32.mrf.mxu0
      %2592 = vmatprep.mubr.bf16.mxu0 %v1808
      %2593 = vmatmul.mubr.bf16.gmra.mxu0 %v1744
      %v2594 = vpop.f32.mrf.mxu0
      %v2595 = vadd.f32 0.0, %v2594
      %v2596 = vpop.f32.mrf.mxu0
      %v2597 = vpop.f32.mrf.mxu0
      %v2598 = vadd.f32 0.0, %v2597
      %v2599 = vpop.f32.mrf.mxu0
      %2600 = vmatprep.mubr.bf16.mxu0 %v1809
      %2601 = vmatmul.mubr.bf16.gmra.mxu0 %v1745
      %v2602 = vpop.f32.mrf.mxu0
      %v2603 = vadd.f32 0.0, %v2602
      %v2604 = vpop.f32.mrf.mxu0
      %v2605 = vpop.f32.mrf.mxu0
      %v2606 = vadd.f32 0.0, %v2605
      %v2607 = vpop.f32.mrf.mxu0
      %2608 = vmatprep.mubr.bf16.mxu0 %v1810
      %2609 = vmatmul.mubr.bf16.gmra.mxu0 %v1746
      %v2610 = vpop.f32.mrf.mxu0
      %v2611 = vadd.f32 0.0, %v2610
      %v2612 = vpop.f32.mrf.mxu0
      %v2613 = vpop.f32.mrf.mxu0
      %v2614 = vadd.f32 0.0, %v2613
      %v2615 = vpop.f32.mrf.mxu0
      %2616 = vmatprep.mubr.bf16.mxu0 %v1811
      %2617 = vmatmul.mubr.bf16.gmra.mxu0 %v1747
      %v2618 = vpop.f32.mrf.mxu0
      %v2619 = vadd.f32 0.0, %v2618
      %v2620 = vpop.f32.mrf.mxu0
      %v2621 = vpop.f32.mrf.mxu0
      %v2622 = vadd.f32 0.0, %v2621
      %v2623 = vpop.f32.mrf.mxu0
      %2624 = vmatprep.mubr.bf16.mxu0 %v1812
      %2625 = vmatmul.mubr.bf16.gmra.mxu0 %v1748
      %v2626 = vpop.f32.mrf.mxu0
      %v2627 = vadd.f32 0.0, %v2626
      %v2628 = vpop.f32.mrf.mxu0
      %v2629 = vpop.f32.mrf.mxu0
      %v2630 = vadd.f32 0.0, %v2629
      %v2631 = vpop.f32.mrf.mxu0
      %2632 = vmatprep.mubr.bf16.mxu0 %v1813
      %2633 = vmatmul.mubr.bf16.gmra.mxu0 %v1749
      %v2634 = vpop.f32.mrf.mxu0
      %v2635 = vadd.f32 0.0, %v2634
      %v2636 = vpop.f32.mrf.mxu0
      %v2637 = vpop.f32.mrf.mxu0
      %v2638 = vadd.f32 0.0, %v2637
      %v2639 = vpop.f32.mrf.mxu0
      %2640 = vmatprep.mubr.bf16.mxu0 %v1814
      %2641 = vmatmul.mubr.bf16.gmra.mxu0 %v1750
      %v2642 = vpop.f32.mrf.mxu0
      %v2643 = vadd.f32 0.0, %v2642
      %v2644 = vpop.f32.mrf.mxu0
      %v2645 = vpop.f32.mrf.mxu0
      %v2646 = vadd.f32 0.0, %v2645
      %v2647 = vpop.f32.mrf.mxu0
      %2648 = vmatprep.mubr.bf16.mxu0 %v1815
      %2649 = vmatmul.mubr.bf16.gmra.mxu0 %v1751
      %v2650 = vpop.f32.mrf.mxu0
      %v2651 = vadd.f32 0.0, %v2650
      %v2652 = vpop.f32.mrf.mxu0
      %v2653 = vpop.f32.mrf.mxu0
      %v2654 = vadd.f32 0.0, %v2653
      %v2655 = vpop.f32.mrf.mxu0
      %2656 = vdwg.mxu0
      %2657 = vmatprep.subr.bf16.mxu0 0
      %2658 = vmatpush1.bf16.msra.mxu0 %v2375
      %2659 = vmatprep.subr.bf16.mxu0 0
      %2660 = vmatpush1.bf16.msra.mxu0 %v2374
      %2661 = vmatprep.subr.bf16.mxu0 0
      %2662 = vmatpush1.bf16.msra.mxu0 %v2373
      %2663 = vmatprep.subr.bf16.mxu0 0
      %2664 = vmatpush1.bf16.msra.mxu0 %v2372
      %2665 = vmatprep.subr.bf16.mxu0 0
      %2666 = vmatpush1.bf16.msra.mxu0 %v2371
      %2667 = vmatprep.subr.bf16.mxu0 0
      %2668 = vmatpush1.bf16.msra.mxu0 %v2370
      %2669 = vmatprep.subr.bf16.mxu0 0
      %2670 = vmatpush1.bf16.msra.mxu0 %v2369
      %2671 = vmatprep.subr.bf16.mxu0 0
      %2672 = vmatpush1.bf16.msra.mxu0 %v2368
      %2673 = vmatprep.subr.bf16.mxu0 0
      %2674 = vmatpush2.bf16.msra.mxu0 %v2383
      %2675 = vmatprep.subr.bf16.mxu0 0
      %2676 = vmatpush2.bf16.msra.mxu0 %v2382
      %2677 = vmatprep.subr.bf16.mxu0 0
      %2678 = vmatpush2.bf16.msra.mxu0 %v2381
      %2679 = vmatprep.subr.bf16.mxu0 0
      %2680 = vmatpush2.bf16.msra.mxu0 %v2380
      %2681 = vmatprep.subr.bf16.mxu0 0
      %2682 = vmatpush2.bf16.msra.mxu0 %v2379
      %2683 = vmatprep.subr.bf16.mxu0 0
      %2684 = vmatpush2.bf16.msra.mxu0 %v2378
      %2685 = vmatprep.subr.bf16.mxu0 0
      %2686 = vmatpush2.bf16.msra.mxu0 %v2377
      %2687 = vmatprep.subr.bf16.mxu0 0
      %2688 = vmatpush2.bf16.msra.mxu0 %v2376
      %2689 = vmatprep.mubr.bf16.mxu0 %v1737
      %2690 = vmatmul.mubr.bf16.gmra.mxu0 %v1864
      %v2691 = vpop.f32.mrf.mxu0
      %v2692 = vadd.f32 %v2531, %v2691
      %v2693 = vpop.f32.mrf.mxu0
      %v2694 = vpop.f32.mrf.mxu0
      %v2695 = vadd.f32 %v2534, %v2694
      %v2696 = vpop.f32.mrf.mxu0
      %2697 = vmatprep.mubr.bf16.mxu0 %v1738
      %2698 = vmatmul.mubr.bf16.gmra.mxu0 %v1865
      %v2699 = vpop.f32.mrf.mxu0
      %v2700 = vadd.f32 %v2539, %v2699
      %v2701 = vpop.f32.mrf.mxu0
      %v2702 = vpop.f32.mrf.mxu0
      %v2703 = vadd.f32 %v2542, %v2702
      %v2704 = vpop.f32.mrf.mxu0
      %2705 = vmatprep.mubr.bf16.mxu0 %v1739
      %2706 = vmatmul.mubr.bf16.gmra.mxu0 %v1866
      %v2707 = vpop.f32.mrf.mxu0
      %v2708 = vadd.f32 %v2547, %v2707
      %v2709 = vpop.f32.mrf.mxu0
      %v2710 = vpop.f32.mrf.mxu0
      %v2711 = vadd.f32 %v2550, %v2710
      %v2712 = vpop.f32.mrf.mxu0
      %2713 = vmatprep.mubr.bf16.mxu0 %v1740
      %2714 = vmatmul.mubr.bf16.gmra.mxu0 %v1867
      %v2715 = vpop.f32.mrf.mxu0
      %v2716 = vadd.f32 %v2555, %v2715
      %v2717 = vpop.f32.mrf.mxu0
      %v2718 = vpop.f32.mrf.mxu0
      %v2719 = vadd.f32 %v2558, %v2718
      %v2720 = vpop.f32.mrf.mxu0
      %2721 = vmatprep.mubr.bf16.mxu0 %v1741
      %2722 = vmatmul.mubr.bf16.gmra.mxu0 %v1868
      %v2723 = vpop.f32.mrf.mxu0
      %v2724 = vadd.f32 %v2563, %v2723
      %v2725 = vpop.f32.mrf.mxu0
      %v2726 = vpop.f32.mrf.mxu0
      %v2727 = vadd.f32 %v2566, %v2726
      %v2728 = vpop.f32.mrf.mxu0
      %2729 = vmatprep.mubr.bf16.mxu0 %v1742
      %2730 = vmatmul.mubr.bf16.gmra.mxu0 %v1869
      %v2731 = vpop.f32.mrf.mxu0
      %v2732 = vadd.f32 %v2571, %v2731
      %v2733 = vpop.f32.mrf.mxu0
      %v2734 = vpop.f32.mrf.mxu0
      %v2735 = vadd.f32 %v2574, %v2734
      %v2736 = vpop.f32.mrf.mxu0
      %2737 = vmatprep.mubr.bf16.mxu0 %v1743
      %2738 = vmatmul.mubr.bf16.gmra.mxu0 %v1870
      %v2739 = vpop.f32.mrf.mxu0
      %v2740 = vadd.f32 %v2579, %v2739
      %v2741 = vpop.f32.mrf.mxu0
      %v2742 = vpop.f32.mrf.mxu0
      %v2743 = vadd.f32 %v2582, %v2742
      %v2744 = vpop.f32.mrf.mxu0
      %2745 = vmatprep.mubr.bf16.mxu0 %v1744
      %2746 = vmatmul.mubr.bf16.gmra.mxu0 %v1871
      %v2747 = vpop.f32.mrf.mxu0
      %v2748 = vadd.f32 %v2587, %v2747
      %v2749 = vpop.f32.mrf.mxu0
      %v2750 = vpop.f32.mrf.mxu0
      %v2751 = vadd.f32 %v2590, %v2750
      %v2752 = vpop.f32.mrf.mxu0
      %2753 = vmatprep.mubr.bf16.mxu0 %v1745
      %2754 = vmatmul.mubr.bf16.gmra.mxu0 %v1872
      %v2755 = vpop.f32.mrf.mxu0
      %v2756 = vadd.f32 %v2595, %v2755
      %v2757 = vpop.f32.mrf.mxu0
      %v2758 = vpop.f32.mrf.mxu0
      %v2759 = vadd.f32 %v2598, %v2758
      %v2760 = vpop.f32.mrf.mxu0
      %2761 = vmatprep.mubr.bf16.mxu0 %v1746
      %2762 = vmatmul.mubr.bf16.gmra.mxu0 %v1873
      %v2763 = vpop.f32.mrf.mxu0
      %v2764 = vadd.f32 %v2603, %v2763
      %v2765 = vpop.f32.mrf.mxu0
      %v2766 = vpop.f32.mrf.mxu0
      %v2767 = vadd.f32 %v2606, %v2766
      %v2768 = vpop.f32.mrf.mxu0
      %2769 = vmatprep.mubr.bf16.mxu0 %v1747
      %2770 = vmatmul.mubr.bf16.gmra.mxu0 %v1874
      %v2771 = vpop.f32.mrf.mxu0
      %v2772 = vadd.f32 %v2611, %v2771
      %v2773 = vpop.f32.mrf.mxu0
      %v2774 = vpop.f32.mrf.mxu0
      %v2775 = vadd.f32 %v2614, %v2774
      %v2776 = vpop.f32.mrf.mxu0
      %2777 = vmatprep.mubr.bf16.mxu0 %v1748
      %2778 = vmatmul.mubr.bf16.gmra.mxu0 %v1875
      %v2779 = vpop.f32.mrf.mxu0
      %v2780 = vadd.f32 %v2619, %v2779
      %v2781 = vpop.f32.mrf.mxu0
      %v2782 = vpop.f32.mrf.mxu0
      %v2783 = vadd.f32 %v2622, %v2782
      %v2784 = vpop.f32.mrf.mxu0
      %2785 = vmatprep.mubr.bf16.mxu0 %v1749
      %2786 = vmatmul.mubr.bf16.gmra.mxu0 %v1876
      %v2787 = vpop.f32.mrf.mxu0
      %v2788 = vadd.f32 %v2627, %v2787
      %v2789 = vpop.f32.mrf.mxu0
      %v2790 = vpop.f32.mrf.mxu0
      %v2791 = vadd.f32 %v2630, %v2790
      %v2792 = vpop.f32.mrf.mxu0
      %2793 = vmatprep.mubr.bf16.mxu0 %v1750
      %2794 = vmatmul.mubr.bf16.gmra.mxu0 %v1877
      %v2795 = vpop.f32.mrf.mxu0
      %v2796 = vadd.f32 %v2635, %v2795
      %v2797 = vpop.f32.mrf.mxu0
      %v2798 = vpop.f32.mrf.mxu0
      %v2799 = vadd.f32 %v2638, %v2798
      %v2800 = vpop.f32.mrf.mxu0
      %2801 = vmatprep.mubr.bf16.mxu0 %v1751
      %2802 = vmatmul.mubr.bf16.gmra.mxu0 %v1878
      %v2803 = vpop.f32.mrf.mxu0
      %v2804 = vadd.f32 %v2643, %v2803
      %v2805 = vpop.f32.mrf.mxu0
      %v2806 = vpop.f32.mrf.mxu0
      %v2807 = vadd.f32 %v2646, %v2806
      %v2808 = vpop.f32.mrf.mxu0
      %2809 = vmatprep.mubr.bf16.mxu0 %v1898
      %2810 = vmatmul.mubr.bf16.gmra.mxu0 %v1879
      %v2811 = vpop.f32.mrf.mxu0
      %v2812 = vadd.f32 %v2651, %v2811
      %v2813 = vpop.f32.mrf.mxu0
      %v2814 = vpop.f32.mrf.mxu0
      %v2815 = vadd.f32 %v2654, %v2814
      %v2816 = vpop.f32.mrf.mxu0
      %2817 = vdwg.mxu0
      %2818 = vmatprep.subr.bf16.mxu0 0
      %2819 = vmatpush1.bf16.msra.mxu0 %v2391
      %2820 = vmatprep.subr.bf16.mxu0 0
      %2821 = vmatpush1.bf16.msra.mxu0 %v2390
      %2822 = vmatprep.subr.bf16.mxu0 0
      %2823 = vmatpush1.bf16.msra.mxu0 %v2389
      %2824 = vmatprep.subr.bf16.mxu0 0
      %2825 = vmatpush1.bf16.msra.mxu0 %v2388
      %2826 = vmatprep.subr.bf16.mxu0 0
      %2827 = vmatpush1.bf16.msra.mxu0 %v2387
      %2828 = vmatprep.subr.bf16.mxu0 0
      %2829 = vmatpush1.bf16.msra.mxu0 %v2386
      %2830 = vmatprep.subr.bf16.mxu0 0
      %2831 = vmatpush1.bf16.msra.mxu0 %v2385
      %2832 = vmatprep.subr.bf16.mxu0 0
      %2833 = vmatpush1.bf16.msra.mxu0 %v2384
      %2834 = vmatprep.subr.bf16.mxu0 0
      %2835 = vmatpush2.bf16.msra.mxu0 %v2399
      %2836 = vmatprep.subr.bf16.mxu0 0
      %2837 = vmatpush2.bf16.msra.mxu0 %v2398
      %2838 = vmatprep.subr.bf16.mxu0 0
      %2839 = vmatpush2.bf16.msra.mxu0 %v2397
      %2840 = vmatprep.subr.bf16.mxu0 0
      %2841 = vmatpush2.bf16.msra.mxu0 %v2396
      %2842 = vmatprep.subr.bf16.mxu0 0
      %2843 = vmatpush2.bf16.msra.mxu0 %v2395
      %2844 = vmatprep.subr.bf16.mxu0 0
      %2845 = vmatpush2.bf16.msra.mxu0 %v2394
      %2846 = vmatprep.subr.bf16.mxu0 0
      %2847 = vmatpush2.bf16.msra.mxu0 %v2393
      %2848 = vmatprep.subr.bf16.mxu0 0
      %2849 = vmatpush2.bf16.msra.mxu0 %v2392
      %2850 = vmatprep.mubr.bf16.mxu0 %v1865
      %2851 = vmatmul.mubr.bf16.gmra.mxu0 %v1801
      %v2852 = vpop.f32.mrf.mxu0
      %v2853 = vadd.f32 %v2692, %v2852
      %v2854 = vpop.f32.mrf.mxu0
      %v2855 = vpop.f32.mrf.mxu0
      %v2856 = vadd.f32 %v2695, %v2855
      %v2857 = vpop.f32.mrf.mxu0
      %2858 = vmatprep.mubr.bf16.mxu0 %v1866
      %2859 = vmatmul.mubr.bf16.gmra.mxu0 %v1802
      %v2860 = vpop.f32.mrf.mxu0
      %v2861 = vadd.f32 %v2700, %v2860
      %v2862 = vpop.f32.mrf.mxu0
      %v2863 = vpop.f32.mrf.mxu0
      %v2864 = vadd.f32 %v2703, %v2863
      %v2865 = vpop.f32.mrf.mxu0
      %2866 = vmatprep.mubr.bf16.mxu0 %v1867
      %2867 = vmatmul.mubr.bf16.gmra.mxu0 %v1803
      %v2868 = vpop.f32.mrf.mxu0
      %v2869 = vadd.f32 %v2708, %v2868
      %v2870 = vpop.f32.mrf.mxu0
      %v2871 = vpop.f32.mrf.mxu0
      %v2872 = vadd.f32 %v2711, %v2871
      %v2873 = vpop.f32.mrf.mxu0
      %2874 = vmatprep.mubr.bf16.mxu0 %v1868
      %2875 = vmatmul.mubr.bf16.gmra.mxu0 %v1804
      %v2876 = vpop.f32.mrf.mxu0
      %v2877 = vadd.f32 %v2716, %v2876
      %v2878 = vpop.f32.mrf.mxu0
      %v2879 = vpop.f32.mrf.mxu0
      %v2880 = vadd.f32 %v2719, %v2879
      %v2881 = vpop.f32.mrf.mxu0
      %2882 = vmatprep.mubr.bf16.mxu0 %v1869
      %2883 = vmatmul.mubr.bf16.gmra.mxu0 %v1805
      %v2884 = vpop.f32.mrf.mxu0
      %v2885 = vadd.f32 %v2724, %v2884
      %v2886 = vpop.f32.mrf.mxu0
      %v2887 = vpop.f32.mrf.mxu0
      %v2888 = vadd.f32 %v2727, %v2887
      %v2889 = vpop.f32.mrf.mxu0
      %2890 = vmatprep.mubr.bf16.mxu0 %v1870
      %2891 = vmatmul.mubr.bf16.gmra.mxu0 %v1806
      %v2892 = vpop.f32.mrf.mxu0
      %v2893 = vadd.f32 %v2732, %v2892
      %v2894 = vpop.f32.mrf.mxu0
      %v2895 = vpop.f32.mrf.mxu0
      %v2896 = vadd.f32 %v2735, %v2895
      %v2897 = vpop.f32.mrf.mxu0
      %2898 = vmatprep.mubr.bf16.mxu0 %v1871
      %2899 = vmatmul.mubr.bf16.gmra.mxu0 %v1807
      %v2900 = vpop.f32.mrf.mxu0
      %v2901 = vadd.f32 %v2740, %v2900
      %v2902 = vpop.f32.mrf.mxu0
      %v2903 = vpop.f32.mrf.mxu0
      %v2904 = vadd.f32 %v2743, %v2903
      %v2905 = vpop.f32.mrf.mxu0
      %2906 = vmatprep.mubr.bf16.mxu0 %v1872
      %2907 = vmatmul.mubr.bf16.gmra.mxu0 %v1808
      %v2908 = vpop.f32.mrf.mxu0
      %v2909 = vadd.f32 %v2748, %v2908
      %v2910 = vpop.f32.mrf.mxu0
      %v2911 = vpop.f32.mrf.mxu0
      %v2912 = vadd.f32 %v2751, %v2911
      %v2913 = vpop.f32.mrf.mxu0
      %2914 = vmatprep.mubr.bf16.mxu0 %v1873
      %2915 = vmatmul.mubr.bf16.gmra.mxu0 %v1809
      %v2916 = vpop.f32.mrf.mxu0
      %v2917 = vadd.f32 %v2756, %v2916
      %v2918 = vpop.f32.mrf.mxu0
      %v2919 = vpop.f32.mrf.mxu0
      %v2920 = vadd.f32 %v2759, %v2919
      %v2921 = vpop.f32.mrf.mxu0
      %2922 = vmatprep.mubr.bf16.mxu0 %v1874
      %2923 = vmatmul.mubr.bf16.gmra.mxu0 %v1810
      %v2924 = vpop.f32.mrf.mxu0
      %v2925 = vadd.f32 %v2764, %v2924
      %v2926 = vpop.f32.mrf.mxu0
      %v2927 = vpop.f32.mrf.mxu0
      %v2928 = vadd.f32 %v2767, %v2927
      %v2929 = vpop.f32.mrf.mxu0
      %2930 = vmatprep.mubr.bf16.mxu0 %v1875
      %2931 = vmatmul.mubr.bf16.gmra.mxu0 %v1811
      %v2932 = vpop.f32.mrf.mxu0
      %v2933 = vadd.f32 %v2772, %v2932
      %v2934 = vpop.f32.mrf.mxu0
      %v2935 = vpop.f32.mrf.mxu0
      %v2936 = vadd.f32 %v2775, %v2935
      %v2937 = vpop.f32.mrf.mxu0
      %2938 = vmatprep.mubr.bf16.mxu0 %v1876
      %2939 = vmatmul.mubr.bf16.gmra.mxu0 %v1812
      %v2940 = vpop.f32.mrf.mxu0
      %v2941 = vadd.f32 %v2780, %v2940
      %v2942 = vpop.f32.mrf.mxu0
      %v2943 = vpop.f32.mrf.mxu0
      %v2944 = vadd.f32 %v2783, %v2943
      %v2945 = vpop.f32.mrf.mxu0
      %2946 = vmatprep.mubr.bf16.mxu0 %v1877
      %2947 = vmatmul.mubr.bf16.gmra.mxu0 %v1813
      %v2948 = vpop.f32.mrf.mxu0
      %v2949 = vadd.f32 %v2788, %v2948
      %v2950 = vpop.f32.mrf.mxu0
      %v2951 = vpop.f32.mrf.mxu0
      %v2952 = vadd.f32 %v2791, %v2951
      %v2953 = vpop.f32.mrf.mxu0
      %2954 = vmatprep.mubr.bf16.mxu0 %v1878
      %2955 = vmatmul.mubr.bf16.gmra.mxu0 %v1814
      %v2956 = vpop.f32.mrf.mxu0
      %v2957 = vadd.f32 %v2796, %v2956
      %v2958 = vpop.f32.mrf.mxu0
      %v2959 = vpop.f32.mrf.mxu0
      %v2960 = vadd.f32 %v2799, %v2959
      %v2961 = vpop.f32.mrf.mxu0
      %2962 = vmatprep.mubr.bf16.mxu0 %v1879
      %2963 = vmatmul.mubr.bf16.gmra.mxu0 %v1815
      %v2964 = vpop.f32.mrf.mxu0
      %v2965 = vadd.f32 %v2804, %v2964
      %v2966 = vpop.f32.mrf.mxu0
      %v2967 = vpop.f32.mrf.mxu0
      %v2968 = vadd.f32 %v2807, %v2967
      %v2969 = vpop.f32.mrf.mxu0
      %2970 = vmatprep.mubr.bf16.mxu0 %v1906
      %2971 = vmatmul.mubr.bf16.gmra.mxu0 %v1902
      %v2972 = vpop.f32.mrf.mxu0
      %v2973 = vadd.f32 %v2812, %v2972
      %v2974 = vpop.f32.mrf.mxu0
      %v2975 = vpop.f32.mrf.mxu0
      %v2976 = vadd.f32 %v2815, %v2975
      %v2977 = vpop.f32.mrf.mxu0
      %2978 = vdwg.mxu0
      %2979 = vmatprep.subr.bf16.mxu0 0
      %2980 = vmatpush1.bf16.msra.mxu0 %v2407
      %2981 = vmatprep.subr.bf16.mxu0 0
      %2982 = vmatpush1.bf16.msra.mxu0 %v2406
      %2983 = vmatprep.subr.bf16.mxu0 0
      %2984 = vmatpush1.bf16.msra.mxu0 %v2405
      %2985 = vmatprep.subr.bf16.mxu0 0
      %2986 = vmatpush1.bf16.msra.mxu0 %v2404
      %2987 = vmatprep.subr.bf16.mxu0 0
      %2988 = vmatpush1.bf16.msra.mxu0 %v2403
      %2989 = vmatprep.subr.bf16.mxu0 0
      %2990 = vmatpush1.bf16.msra.mxu0 %v2402
      %2991 = vmatprep.subr.bf16.mxu0 0
      %2992 = vmatpush1.bf16.msra.mxu0 %v2401
      %2993 = vmatprep.subr.bf16.mxu0 0
      %2994 = vmatpush1.bf16.msra.mxu0 %v2400
      %2995 = vmatprep.subr.bf16.mxu0 0
      %2996 = vmatpush2.bf16.msra.mxu0 %v2415
      %2997 = vmatprep.subr.bf16.mxu0 0
      %2998 = vmatpush2.bf16.msra.mxu0 %v2414
      %2999 = vmatprep.subr.bf16.mxu0 0
      %3000 = vmatpush2.bf16.msra.mxu0 %v2413
      %3001 = vmatprep.subr.bf16.mxu0 0
      %3002 = vmatpush2.bf16.msra.mxu0 %v2412
      %3003 = vmatprep.subr.bf16.mxu0 0
      %3004 = vmatpush2.bf16.msra.mxu0 %v2411
      %3005 = vmatprep.subr.bf16.mxu0 0
      %3006 = vmatpush2.bf16.msra.mxu0 %v2410
      %3007 = vmatprep.subr.bf16.mxu0 0
      %3008 = vmatpush2.bf16.msra.mxu0 %v2409
      %3009 = vmatprep.subr.bf16.mxu0 0
      %3010 = vmatpush2.bf16.msra.mxu0 %v2408
      %3011 = vmatprep.mubr.bf16.mxu0 %v1802
      %3012 = vmatmul.mubr.bf16.gmra.mxu0 %v1738
      %v3013 = vpop.f32.mrf.mxu0
      %v3014 = vadd.f32 %v2853, %v3013
      %v3015 = vpop.f32.mrf.mxu0
      %v3016 = vpop.f32.mrf.mxu0
      %v3017 = vadd.f32 %v2856, %v3016
      %v3018 = vpop.f32.mrf.mxu0
      %3019 = vmatprep.mubr.bf16.mxu0 %v1803
      %3020 = vmatmul.mubr.bf16.gmra.mxu0 %v1739
      %v3021 = vpop.f32.mrf.mxu0
      %v3022 = vadd.f32 %v2861, %v3021
      %v3023 = vpop.f32.mrf.mxu0
      %v3024 = vpop.f32.mrf.mxu0
      %v3025 = vadd.f32 %v2864, %v3024
      %v3026 = vpop.f32.mrf.mxu0
      %3027 = vmatprep.mubr.bf16.mxu0 %v1804
      %3028 = vmatmul.mubr.bf16.gmra.mxu0 %v1740
      %v3029 = vpop.f32.mrf.mxu0
      %v3030 = vadd.f32 %v2869, %v3029
      %v3031 = vpop.f32.mrf.mxu0
      %v3032 = vpop.f32.mrf.mxu0
      %v3033 = vadd.f32 %v2872, %v3032
      %v3034 = vpop.f32.mrf.mxu0
      %3035 = vmatprep.mubr.bf16.mxu0 %v1805
      %3036 = vmatmul.mubr.bf16.gmra.mxu0 %v1741
      %v3037 = vpop.f32.mrf.mxu0
      %v3038 = vadd.f32 %v2877, %v3037
      %v3039 = vpop.f32.mrf.mxu0
      %v3040 = vpop.f32.mrf.mxu0
      %v3041 = vadd.f32 %v2880, %v3040
      %v3042 = vpop.f32.mrf.mxu0
      %3043 = vmatprep.mubr.bf16.mxu0 %v1806
      %3044 = vmatmul.mubr.bf16.gmra.mxu0 %v1742
      %v3045 = vpop.f32.mrf.mxu0
      %v3046 = vadd.f32 %v2885, %v3045
      %v3047 = vpop.f32.mrf.mxu0
      %v3048 = vpop.f32.mrf.mxu0
      %v3049 = vadd.f32 %v2888, %v3048
      %v3050 = vpop.f32.mrf.mxu0
      %3051 = vmatprep.mubr.bf16.mxu0 %v1807
      %3052 = vmatmul.mubr.bf16.gmra.mxu0 %v1743
      %v3053 = vpop.f32.mrf.mxu0
      %v3054 = vadd.f32 %v2893, %v3053
      %v3055 = vpop.f32.mrf.mxu0
      %v3056 = vpop.f32.mrf.mxu0
      %v3057 = vadd.f32 %v2896, %v3056
      %v3058 = vpop.f32.mrf.mxu0
      %3059 = vmatprep.mubr.bf16.mxu0 %v1808
      %3060 = vmatmul.mubr.bf16.gmra.mxu0 %v1744
      %v3061 = vpop.f32.mrf.mxu0
      %v3062 = vadd.f32 %v2901, %v3061
      %v3063 = vpop.f32.mrf.mxu0
      %v3064 = vpop.f32.mrf.mxu0
      %v3065 = vadd.f32 %v2904, %v3064
      %v3066 = vpop.f32.mrf.mxu0
      %3067 = vmatprep.mubr.bf16.mxu0 %v1809
      %3068 = vmatmul.mubr.bf16.gmra.mxu0 %v1745
      %v3069 = vpop.f32.mrf.mxu0
      %v3070 = vadd.f32 %v2909, %v3069
      %v3071 = vpop.f32.mrf.mxu0
      %v3072 = vpop.f32.mrf.mxu0
      %v3073 = vadd.f32 %v2912, %v3072
      %v3074 = vpop.f32.mrf.mxu0
      %3075 = vmatprep.mubr.bf16.mxu0 %v1810
      %3076 = vmatmul.mubr.bf16.gmra.mxu0 %v1746
      %v3077 = vpop.f32.mrf.mxu0
      %v3078 = vadd.f32 %v2917, %v3077
      %v3079 = vpop.f32.mrf.mxu0
      %v3080 = vpop.f32.mrf.mxu0
      %v3081 = vadd.f32 %v2920, %v3080
      %v3082 = vpop.f32.mrf.mxu0
      %3083 = vmatprep.mubr.bf16.mxu0 %v1811
      %3084 = vmatmul.mubr.bf16.gmra.mxu0 %v1747
      %v3085 = vpop.f32.mrf.mxu0
      %v3086 = vadd.f32 %v2925, %v3085
      %v3087 = vpop.f32.mrf.mxu0
      %v3088 = vpop.f32.mrf.mxu0
      %v3089 = vadd.f32 %v2928, %v3088
      %v3090 = vpop.f32.mrf.mxu0
      %3091 = vmatprep.mubr.bf16.mxu0 %v1812
      %3092 = vmatmul.mubr.bf16.gmra.mxu0 %v1748
      %v3093 = vpop.f32.mrf.mxu0
      %v3094 = vadd.f32 %v2933, %v3093
      %v3095 = vpop.f32.mrf.mxu0
      %v3096 = vpop.f32.mrf.mxu0
      %v3097 = vadd.f32 %v2936, %v3096
      %v3098 = vpop.f32.mrf.mxu0
      %3099 = vmatprep.mubr.bf16.mxu0 %v1813
      %3100 = vmatmul.mubr.bf16.gmra.mxu0 %v1749
      %v3101 = vpop.f32.mrf.mxu0
      %v3102 = vadd.f32 %v2941, %v3101
      %v3103 = vpop.f32.mrf.mxu0
      %v3104 = vpop.f32.mrf.mxu0
      %v3105 = vadd.f32 %v2944, %v3104
      %v3106 = vpop.f32.mrf.mxu0
      %3107 = vmatprep.mubr.bf16.mxu0 %v1814
      %3108 = vmatmul.mubr.bf16.gmra.mxu0 %v1750
      %v3109 = vpop.f32.mrf.mxu0
      %v3110 = vadd.f32 %v2949, %v3109
      %v3111 = vpop.f32.mrf.mxu0
      %v3112 = vpop.f32.mrf.mxu0
      %v3113 = vadd.f32 %v2952, %v3112
      %v3114 = vpop.f32.mrf.mxu0
      %3115 = vmatprep.mubr.bf16.mxu0 %v1815
      %3116 = vmatmul.mubr.bf16.gmra.mxu0 %v1751
      %v3117 = vpop.f32.mrf.mxu0
      %v3118 = vadd.f32 %v2957, %v3117
      %v3119 = vpop.f32.mrf.mxu0
      %v3120 = vpop.f32.mrf.mxu0
      %v3121 = vadd.f32 %v2960, %v3120
      %v3122 = vpop.f32.mrf.mxu0
      %3123 = vmatprep.mubr.bf16.mxu0 %v1902
      %3124 = vmatmul.mubr.bf16.gmra.mxu0 %v1898
      %v3125 = vpop.f32.mrf.mxu0
      %v3126 = vadd.f32 %v2965, %v3125
      %v3127 = vpop.f32.mrf.mxu0
      %v3128 = vpop.f32.mrf.mxu0
      %v3129 = vadd.f32 %v2968, %v3128
      %v3130 = vpop.f32.mrf.mxu0
      %3131 = vmatprep.mubr.bf16.mxu0 %v1914
      %3132 = vmatmul.mubr.bf16.gmra.mxu0 %v1910
      %v3133 = vpop.f32.mrf.mxu0
      %v3134 = vadd.f32 %v2973, %v3133
      %v3135 = vpop.f32.mrf.mxu0
      %v3136 = vpop.f32.mrf.mxu0
      %v3137 = vadd.f32 %v2976, %v3136
      %v3138 = vpop.f32.mrf.mxu0
      %3139 = vdwg.mxu0
      %3140 = vmatprep.subr.bf16.mxu0 0
      %3141 = vmatpush1.bf16.msra.mxu0 %v2423
      %3142 = vmatprep.subr.bf16.mxu0 0
      %3143 = vmatpush1.bf16.msra.mxu0 %v2422
      %3144 = vmatprep.subr.bf16.mxu0 0
      %3145 = vmatpush1.bf16.msra.mxu0 %v2421
      %3146 = vmatprep.subr.bf16.mxu0 0
      %3147 = vmatpush1.bf16.msra.mxu0 %v2420
      %3148 = vmatprep.subr.bf16.mxu0 0
      %3149 = vmatpush1.bf16.msra.mxu0 %v2419
      %3150 = vmatprep.subr.bf16.mxu0 0
      %3151 = vmatpush1.bf16.msra.mxu0 %v2418
      %3152 = vmatprep.subr.bf16.mxu0 0
      %3153 = vmatpush1.bf16.msra.mxu0 %v2417
      %3154 = vmatprep.subr.bf16.mxu0 0
      %3155 = vmatpush1.bf16.msra.mxu0 %v2416
      %3156 = vmatprep.subr.bf16.mxu0 0
      %3157 = vmatpush2.bf16.msra.mxu0 0
      %3158 = vmatprep.subr.bf16.mxu0 0
      %3159 = vmatpush2.bf16.msra.mxu0 0
      %3160 = vmatprep.subr.bf16.mxu0 0
      %3161 = vmatpush2.bf16.msra.mxu0 0
      %3162 = vmatprep.subr.bf16.mxu0 0
      %3163 = vmatpush2.bf16.msra.mxu0 0
      %3164 = vmatprep.subr.bf16.mxu0 0
      %3165 = vmatpush2.bf16.msra.mxu0 0
      %3166 = vmatprep.subr.bf16.mxu0 0
      %3167 = vmatpush2.bf16.msra.mxu0 0
      %3168 = vmatprep.subr.bf16.mxu0 0
      %3169 = vmatpush2.bf16.msra.mxu0 0
      %3170 = vmatprep.subr.bf16.mxu0 0
      %3171 = vmatpush2.bf16.msra.mxu0 0
      %3172 = vmatprep.mubr.bf16.mxu0 0
      %3173 = vmatmul.mubr.bf16.gmra.mxu0 %v1866
      %v3174 = vpop.f32.mrf.mxu0
      %v3175 = vadd.f32 %v3014, %v3174
      %v3176 = vpop.f32.mrf.mxu0
      %v3177 = vpop.f32.mrf.mxu0
      %v3178 = vadd.f32 %v3017, %v3177
      %v3179 = vpop.f32.mrf.mxu0
      %3180 = vmatprep.mubr.bf16.mxu0 0
      %3181 = vmatmul.mubr.bf16.gmra.mxu0 %v1867
      %v3182 = vpop.f32.mrf.mxu0
      %v3183 = vadd.f32 %v3022, %v3182
      %v3184 = vpop.f32.mrf.mxu0
      %v3185 = vpop.f32.mrf.mxu0
      %v3186 = vadd.f32 %v3025, %v3185
      %v3187 = vpop.f32.mrf.mxu0
      %3188 = vmatprep.mubr.bf16.mxu0 0
      %3189 = vmatmul.mubr.bf16.gmra.mxu0 %v1868
      %v3190 = vpop.f32.mrf.mxu0
      %v3191 = vadd.f32 %v3030, %v3190
      %v3192 = vpop.f32.mrf.mxu0
      %v3193 = vpop.f32.mrf.mxu0
      %v3194 = vadd.f32 %v3033, %v3193
      %v3195 = vpop.f32.mrf.mxu0
      %3196 = vmatprep.mubr.bf16.mxu0 0
      %3197 = vmatmul.mubr.bf16.gmra.mxu0 %v1869
      %v3198 = vpop.f32.mrf.mxu0
      %v3199 = vadd.f32 %v3038, %v3198
      %v3200 = vpop.f32.mrf.mxu0
      %v3201 = vpop.f32.mrf.mxu0
      %v3202 = vadd.f32 %v3041, %v3201
      %v3203 = vpop.f32.mrf.mxu0
      %3204 = vmatprep.mubr.bf16.mxu0 0
      %3205 = vmatmul.mubr.bf16.gmra.mxu0 %v1870
      %v3206 = vpop.f32.mrf.mxu0
      %v3207 = vadd.f32 %v3046, %v3206
      %v3208 = vpop.f32.mrf.mxu0
      %v3209 = vpop.f32.mrf.mxu0
      %v3210 = vadd.f32 %v3049, %v3209
      %v3211 = vpop.f32.mrf.mxu0
      %3212 = vmatprep.mubr.bf16.mxu0 0
      %3213 = vmatmul.mubr.bf16.gmra.mxu0 %v1871
      %v3214 = vpop.f32.mrf.mxu0
      %v3215 = vadd.f32 %v3054, %v3214
      %v3216 = vpop.f32.mrf.mxu0
      %v3217 = vpop.f32.mrf.mxu0
      %v3218 = vadd.f32 %v3057, %v3217
      %v3219 = vpop.f32.mrf.mxu0
      %3220 = vmatprep.mubr.bf16.mxu0 0
      %3221 = vmatmul.mubr.bf16.gmra.mxu0 %v1872
      %v3222 = vpop.f32.mrf.mxu0
      %v3223 = vadd.f32 %v3062, %v3222
      %v3224 = vpop.f32.mrf.mxu0
      %v3225 = vpop.f32.mrf.mxu0
      %v3226 = vadd.f32 %v3065, %v3225
      %v3227 = vpop.f32.mrf.mxu0
      %3228 = vmatprep.mubr.bf16.mxu0 0
      %3229 = vmatmul.mubr.bf16.gmra.mxu0 %v1873
      %v3230 = vpop.f32.mrf.mxu0
      %v3231 = vadd.f32 %v3070, %v3230
      %v3232 = vpop.f32.mrf.mxu0
      %v3233 = vpop.f32.mrf.mxu0
      %v3234 = vadd.f32 %v3073, %v3233
      %v3235 = vpop.f32.mrf.mxu0
      %3236 = vmatprep.mubr.bf16.mxu0 0
      %3237 = vmatmul.mubr.bf16.gmra.mxu0 %v1874
      %v3238 = vpop.f32.mrf.mxu0
      %v3239 = vadd.f32 %v3078, %v3238
      %v3240 = vpop.f32.mrf.mxu0
      %v3241 = vpop.f32.mrf.mxu0
      %v3242 = vadd.f32 %v3081, %v3241
      %v3243 = vpop.f32.mrf.mxu0
      %3244 = vmatprep.mubr.bf16.mxu0 0
      %3245 = vmatmul.mubr.bf16.gmra.mxu0 %v1875
      %v3246 = vpop.f32.mrf.mxu0
      %v3247 = vadd.f32 %v3086, %v3246
      %v3248 = vpop.f32.mrf.mxu0
      %v3249 = vpop.f32.mrf.mxu0
      %v3250 = vadd.f32 %v3089, %v3249
      %v3251 = vpop.f32.mrf.mxu0
      %3252 = vmatprep.mubr.bf16.mxu0 0
      %3253 = vmatmul.mubr.bf16.gmra.mxu0 %v1876
      %v3254 = vpop.f32.mrf.mxu0
      %v3255 = vadd.f32 %v3094, %v3254
      %v3256 = vpop.f32.mrf.mxu0
      %v3257 = vpop.f32.mrf.mxu0
      %v3258 = vadd.f32 %v3097, %v3257
      %v3259 = vpop.f32.mrf.mxu0
      %3260 = vmatprep.mubr.bf16.mxu0 0
      %3261 = vmatmul.mubr.bf16.gmra.mxu0 %v1877
      %v3262 = vpop.f32.mrf.mxu0
      %v3263 = vadd.f32 %v3102, %v3262
      %v3264 = vpop.f32.mrf.mxu0
      %v3265 = vpop.f32.mrf.mxu0
      %v3266 = vadd.f32 %v3105, %v3265
      %v3267 = vpop.f32.mrf.mxu0
      %3268 = vmatprep.mubr.bf16.mxu0 0
      %3269 = vmatmul.mubr.bf16.gmra.mxu0 %v1878
      %v3270 = vpop.f32.mrf.mxu0
      %v3271 = vadd.f32 %v3110, %v3270
      %v3272 = vpop.f32.mrf.mxu0
      %v3273 = vpop.f32.mrf.mxu0
      %v3274 = vadd.f32 %v3113, %v3273
      %v3275 = vpop.f32.mrf.mxu0
      %3276 = vmatprep.mubr.bf16.mxu0 0
      %3277 = vmatmul.mubr.bf16.gmra.mxu0 %v1879
      %v3278 = vpop.f32.mrf.mxu0
      %v3279 = vadd.f32 %v3118, %v3278
      %v3280 = vpop.f32.mrf.mxu0
      %v3281 = vpop.f32.mrf.mxu0
      %v3282 = vadd.f32 %v3121, %v3281
      %v3283 = vpop.f32.mrf.mxu0
      %3284 = vmatprep.mubr.bf16.mxu0 0
      %3285 = vmatmul.mubr.bf16.gmra.mxu0 %v1906
      %v3286 = vpop.f32.mrf.mxu0
      %v3287 = vadd.f32 %v3126, %v3286
      %v3288 = vpop.f32.mrf.mxu0
      %v3289 = vpop.f32.mrf.mxu0
      %v3290 = vadd.f32 %v3129, %v3289
      %v3291 = vpop.f32.mrf.mxu0
      %3292 = vmatprep.mubr.bf16.mxu0 0
      %3293 = vmatmul.mubr.bf16.gmra.mxu0 %v1918
      %v3294 = vpop.f32.mrf.mxu0
      %v3295 = vadd.f32 %v3134, %v3294
      %v3296 = vpop.f32.mrf.mxu0
      %v3297 = vpop.f32.mrf.mxu0
      %v3298 = vadd.f32 %v3137, %v3297
      %v3299 = vpop.f32.mrf.mxu0
      %3300 = vdwg.mxu0
      %v3301 = vmul.f32 %v3175, 0.5
      %v3302 = vmul.f32 %v3178, 0.5
      %v3303 = vmul.f32 %v3183, 0.5
      %v3304 = vmul.f32 %v3186, 0.5
      %v3305 = vmul.f32 %v3191, 0.5
      %v3306 = vmul.f32 %v3194, 0.5
      %v3307 = vmul.f32 %v3199, 0.5
      %v3308 = vmul.f32 %v3202, 0.5
      %v3309 = vmul.f32 %v3207, 0.5
      %v3310 = vmul.f32 %v3210, 0.5
      %v3311 = vmul.f32 %v3215, 0.5
      %v3312 = vmul.f32 %v3218, 0.5
      %v3313 = vmul.f32 %v3223, 0.5
      %v3314 = vmul.f32 %v3226, 0.5
      %v3315 = vmul.f32 %v3231, 0.5
      %v3316 = vmul.f32 %v3234, 0.5
      %v3317 = vmul.f32 %v3239, 0.5
      %v3318 = vmul.f32 %v3242, 0.5
      %v3319 = vmul.f32 %v3247, 0.5
      %v3320 = vmul.f32 %v3250, 0.5
      %v3321 = vmul.f32 %v3255, 0.5
      %v3322 = vmul.f32 %v3258, 0.5
      %v3323 = vmul.f32 %v3263, 0.5
      %v3324 = vmul.f32 %v3266, 0.5
      %v3325 = vmul.f32 %v3271, 0.5
      %v3326 = vmul.f32 %v3274, 0.5
      %v3327 = vmul.f32 %v3279, 0.5
      %v3328 = vmul.f32 %v3282, 0.5
      %v3329 = vmul.f32 %v3287, 0.5
      %v3330 = vmul.f32 %v3290, 0.5
      %v3331 = vmul.f32 %v3295, 0.5
      %v3332 = vmul.f32 %v3298, 0.5
      %v3333 = vmul.f32 %v3175, 0.70710677
      %v3334 = vmul.f32 %v3178, 0.70710677
      %v3335 = vmul.f32 %v3183, 0.70710677
      %v3336 = vmul.f32 %v3186, 0.70710677
      %v3337 = vmul.f32 %v3191, 0.70710677
      %v3338 = vmul.f32 %v3194, 0.70710677
      %v3339 = vmul.f32 %v3199, 0.70710677
      %v3340 = vmul.f32 %v3202, 0.70710677
      %v3341 = vmul.f32 %v3207, 0.70710677
      %v3342 = vmul.f32 %v3210, 0.70710677
      %v3343 = vmul.f32 %v3215, 0.70710677
      %v3344 = vmul.f32 %v3218, 0.70710677
      %v3345 = vmul.f32 %v3223, 0.70710677
      %v3346 = vmul.f32 %v3226, 0.70710677
      %v3347 = vmul.f32 %v3231, 0.70710677
      %v3348 = vmul.f32 %v3234, 0.70710677
      %v3349 = vmul.f32 %v3239, 0.70710677
      %v3350 = vmul.f32 %v3242, 0.70710677
      %v3351 = vmul.f32 %v3247, 0.70710677
      %v3352 = vmul.f32 %v3250, 0.70710677
      %v3353 = vmul.f32 %v3255, 0.70710677
      %v3354 = vmul.f32 %v3258, 0.70710677
      %v3355 = vmul.f32 %v3263, 0.70710677
      %v3356 = vmul.f32 %v3266, 0.70710677
      %v3357 = vmul.f32 %v3271, 0.70710677
      %v3358 = vmul.f32 %v3274, 0.70710677
      %v3359 = vmul.f32 %v3279, 0.70710677
      %v3360 = vmul.f32 %v3282, 0.70710677
      %v3361 = vmul.f32 %v3287, 0.70710677
      %v3362 = vmul.f32 %v3290, 0.70710677
      %v3363 = vmul.f32 %v3295, 0.70710677
      %v3364 = vmul.f32 %v3298, 0.70710677
      %v3365 = verf.f32.pop %v3333
      %v3366 = verf.f32.pop %v3334
      %v3367 = verf.f32.pop %v3335
      %v3368 = verf.f32.pop %v3336
      %v3369 = verf.f32.pop %v3337
      %v3370 = verf.f32.pop %v3338
      %v3371 = verf.f32.pop %v3339
      %v3372 = verf.f32.pop %v3340
      %v3373 = verf.f32.pop %v3341
      %v3374 = verf.f32.pop %v3342
      %v3375 = verf.f32.pop %v3343
      %v3376 = verf.f32.pop %v3344
      %v3377 = verf.f32.pop %v3345
      %v3378 = verf.f32.pop %v3346
      %v3379 = verf.f32.pop %v3347
      %v3380 = verf.f32.pop %v3348
      %v3381 = verf.f32.pop %v3349
      %v3382 = verf.f32.pop %v3350
      %v3383 = verf.f32.pop %v3351
      %v3384 = verf.f32.pop %v3352
      %v3385 = verf.f32.pop %v3353
      %v3386 = verf.f32.pop %v3354
      %v3387 = verf.f32.pop %v3355
      %v3388 = verf.f32.pop %v3356
      %v3389 = verf.f32.pop %v3357
      %v3390 = verf.f32.pop %v3358
      %v3391 = verf.f32.pop %v3359
      %v3392 = verf.f32.pop %v3360
      %v3393 = verf.f32.pop %v3361
      %v3394 = verf.f32.pop %v3362
      %v3395 = verf.f32.pop %v3363
      %v3396 = verf.f32.pop %v3364
      %v3397 = vadd.f32 %v3365, 1.0
      %v3398 = vadd.f32 %v3366, 1.0
      %v3399 = vadd.f32 %v3367, 1.0
      %v3400 = vadd.f32 %v3368, 1.0
      %v3401 = vadd.f32 %v3369, 1.0
      %v3402 = vadd.f32 %v3370, 1.0
      %v3403 = vadd.f32 %v3371, 1.0
      %v3404 = vadd.f32 %v3372, 1.0
      %v3405 = vadd.f32 %v3373, 1.0
      %v3406 = vadd.f32 %v3374, 1.0
      %v3407 = vadd.f32 %v3375, 1.0
      %v3408 = vadd.f32 %v3376, 1.0
      %v3409 = vadd.f32 %v3377, 1.0
      %v3410 = vadd.f32 %v3378, 1.0
      %v3411 = vadd.f32 %v3379, 1.0
      %v3412 = vadd.f32 %v3380, 1.0
      %v3413 = vadd.f32 %v3381, 1.0
      %v3414 = vadd.f32 %v3382, 1.0
      %v3415 = vadd.f32 %v3383, 1.0
      %v3416 = vadd.f32 %v3384, 1.0
      %v3417 = vadd.f32 %v3385, 1.0
      %v3418 = vadd.f32 %v3386, 1.0
      %v3419 = vadd.f32 %v3387, 1.0
      %v3420 = vadd.f32 %v3388, 1.0
      %v3421 = vadd.f32 %v3389, 1.0
      %v3422 = vadd.f32 %v3390, 1.0
      %v3423 = vadd.f32 %v3391, 1.0
      %v3424 = vadd.f32 %v3392, 1.0
      %v3425 = vadd.f32 %v3393, 1.0
      %v3426 = vadd.f32 %v3394, 1.0
      %v3427 = vadd.f32 %v3395, 1.0
      %v3428 = vadd.f32 %v3396, 1.0
      %v3429 = vmul.f32 %v3301, %v3397
      %v3430 = vmul.f32 %v3302, %v3398
      %v3431 = vmul.f32 %v3303, %v3399
      %v3432 = vmul.f32 %v3304, %v3400
      %v3433 = vmul.f32 %v3305, %v3401
      %v3434 = vmul.f32 %v3306, %v3402
      %v3435 = vmul.f32 %v3307, %v3403
      %v3436 = vmul.f32 %v3308, %v3404
      %v3437 = vmul.f32 %v3309, %v3405
      %v3438 = vmul.f32 %v3310, %v3406
      %v3439 = vmul.f32 %v3311, %v3407
      %v3440 = vmul.f32 %v3312, %v3408
      %v3441 = vmul.f32 %v3313, %v3409
      %v3442 = vmul.f32 %v3314, %v3410
      %v3443 = vmul.f32 %v3315, %v3411
      %v3444 = vmul.f32 %v3316, %v3412
      %v3445 = vmul.f32 %v3317, %v3413
      %v3446 = vmul.f32 %v3318, %v3414
      %v3447 = vmul.f32 %v3319, %v3415
      %v3448 = vmul.f32 %v3320, %v3416
      %v3449 = vmul.f32 %v3321, %v3417
      %v3450 = vmul.f32 %v3322, %v3418
      %v3451 = vmul.f32 %v3323, %v3419
      %v3452 = vmul.f32 %v3324, %v3420
      %v3453 = vmul.f32 %v3325, %v3421
      %v3454 = vmul.f32 %v3326, %v3422
      %v3455 = vmul.f32 %v3327, %v3423
      %v3456 = vmul.f32 %v3328, %v3424
      %v3457 = vmul.f32 %v3329, %v3425
      %v3458 = vmul.f32 %v3330, %v3426
      %v3459 = vmul.f32 %v3331, %v3427
      %v3460 = vmul.f32 %v3332, %v3428
      %v3461 = vadd.f32 %v3429, %v3430
      %v3462 = vadd.f32 %v3461, %v3431
      %v3463 = vadd.f32 %v3462, %v3432
      %v3464 = vadd.f32 %v3463, %v3433
      %v3465 = vadd.f32 %v3464, %v3434
      %v3466 = vadd.f32 %v3465, %v3435
      %v3467 = vadd.f32 %v3466, %v3436
      %v3468 = vadd.f32 %v3467, %v3437
      %v3469 = vadd.f32 %v3468, %v3438
      %v3470 = vadd.f32 %v3469, %v3439
      %v3471 = vadd.f32 %v3470, %v3440
      %v3472 = vadd.f32 %v3471, %v3441
      %v3473 = vadd.f32 %v3472, %v3442
      %v3474 = vadd.f32 %v3473, %v3443
      %v3475 = vadd.f32 %v3474, %v3444
      %v3476 = vadd.f32 %v3475, %v3445
      %v3477 = vadd.f32 %v3476, %v3446
      %v3478 = vadd.f32 %v3477, %v3447
      %v3479 = vadd.f32 %v3478, %v3448
      %v3480 = vadd.f32 %v3479, %v3449
      %v3481 = vadd.f32 %v3480, %v3450
      %v3482 = vadd.f32 %v3481, %v3451
      %v3483 = vadd.f32 %v3482, %v3452
      %v3484 = vadd.f32 %v3483, %v3453
      %v3485 = vadd.f32 %v3484, %v3454
      %v3486 = vadd.f32 %v3485, %v3455
      %v3487 = vadd.f32 %v3486, %v3456
      %v3488 = vadd.f32 %v3487, %v3457
      %v3489 = vadd.f32 %v3488, %v3458
      %v3490 = vadd.f32 %v3489, %v3459
      %v3491 = vadd.f32 %v3490, %v3460
      %v3492 = vrot.slane %v3491, 4
      %v3493 = vadd.f32 %v3491, %v3492
      %v3494 = vrot.slane %v3493, 2
      %v3495 = vadd.f32 %v3493, %v3494
      %v3496 = vrot.slane %v3495, 1
      %v3497 = vadd.f32 %v3495, %v3496
      %v3498 = vmul.f32 %v3497, 0.00390625
      %v3499 = vsub.f32 %v3429, %v3498
      %v3500 = vsub.f32 %v3430, %v3498
      %v3501 = vsub.f32 %v3431, %v3498
      %v3502 = vsub.f32 %v3432, %v3498
      %v3503 = vsub.f32 %v3433, %v3498
      %v3504 = vsub.f32 %v3434, %v3498
      %v3505 = vsub.f32 %v3435, %v3498
      %v3506 = vsub.f32 %v3436, %v3498
      %v3507 = vsub.f32 %v3437, %v3498
      %v3508 = vsub.f32 %v3438, %v3498
      %v3509 = vsub.f32 %v3439, %v3498
      %v3510 = vsub.f32 %v3440, %v3498
      %v3511 = vsub.f32 %v3441, %v3498
      %v3512 = vsub.f32 %v3442, %v3498
      %v3513 = vsub.f32 %v3443, %v3498
      %v3514 = vsub.f32 %v3444, %v3498
      %v3515 = vsub.f32 %v3445, %v3498
      %v3516 = vsub.f32 %v3446, %v3498
      %v3517 = vsub.f32 %v3447, %v3498
      %v3518 = vsub.f32 %v3448, %v3498
      %v3519 = vsub.f32 %v3449, %v3498
      %v3520 = vsub.f32 %v3450, %v3498
      %v3521 = vsub.f32 %v3451, %v3498
      %v3522 = vsub.f32 %v3452, %v3498
      %v3523 = vsub.f32 %v3453, %v3498
      %v3524 = vsub.f32 %v3454, %v3498
      %v3525 = vsub.f32 %v3455, %v3498
      %v3526 = vsub.f32 %v3456, %v3498
      %v3527 = vsub.f32 %v3457, %v3498
      %v3528 = vsub.f32 %v3458, %v3498
      %v3529 = vsub.f32 %v3459, %v3498
      %v3530 = vsub.f32 %v3460, %v3498
      %v3531 = vmul.f32 %v3499, %v3499
      %v3532 = vmul.f32 %v3500, %v3500
      %v3533 = vmul.f32 %v3501, %v3501
      %v3534 = vmul.f32 %v3502, %v3502
      %v3535 = vmul.f32 %v3503, %v3503
      %v3536 = vmul.f32 %v3504, %v3504
      %v3537 = vmul.f32 %v3505, %v3505
      %v3538 = vmul.f32 %v3506, %v3506
      %v3539 = vmul.f32 %v3507, %v3507
      %v3540 = vmul.f32 %v3508, %v3508
      %v3541 = vmul.f32 %v3509, %v3509
      %v3542 = vmul.f32 %v3510, %v3510
      %v3543 = vmul.f32 %v3511, %v3511
      %v3544 = vmul.f32 %v3512, %v3512
      %v3545 = vmul.f32 %v3513, %v3513
      %v3546 = vmul.f32 %v3514, %v3514
      %v3547 = vmul.f32 %v3515, %v3515
      %v3548 = vmul.f32 %v3516, %v3516
      %v3549 = vmul.f32 %v3517, %v3517
      %v3550 = vmul.f32 %v3518, %v3518
      %v3551 = vmul.f32 %v3519, %v3519
      %v3552 = vmul.f32 %v3520, %v3520
      %v3553 = vmul.f32 %v3521, %v3521
      %v3554 = vmul.f32 %v3522, %v3522
      %v3555 = vmul.f32 %v3523, %v3523
      %v3556 = vmul.f32 %v3524, %v3524
      %v3557 = vmul.f32 %v3525, %v3525
      %v3558 = vmul.f32 %v3526, %v3526
      %v3559 = vmul.f32 %v3527, %v3527
      %v3560 = vmul.f32 %v3528, %v3528
      %v3561 = vmul.f32 %v3529, %v3529
      %v3562 = vmul.f32 %v3530, %v3530
      %v3563 = vadd.f32 %v3531, %v3532
      %v3564 = vadd.f32 %v3563, %v3533
      %v3565 = vadd.f32 %v3564, %v3534
      %v3566 = vadd.f32 %v3565, %v3535
      %v3567 = vadd.f32 %v3566, %v3536
      %v3568 = vadd.f32 %v3567, %v3537
      %v3569 = vadd.f32 %v3568, %v3538
      %v3570 = vadd.f32 %v3569, %v3539
      %v3571 = vadd.f32 %v3570, %v3540
      %v3572 = vadd.f32 %v3571, %v3541
      %v3573 = vadd.f32 %v3572, %v3542
      %v3574 = vadd.f32 %v3573, %v3543
      %v3575 = vadd.f32 %v3574, %v3544
      %v3576 = vadd.f32 %v3575, %v3545
      %v3577 = vadd.f32 %v3576, %v3546
      %v3578 = vadd.f32 %v3577, %v3547
      %v3579 = vadd.f32 %v3578, %v3548
      %v3580 = vadd.f32 %v3579, %v3549
      %v3581 = vadd.f32 %v3580, %v3550
      %v3582 = vadd.f32 %v3581, %v3551
      %v3583 = vadd.f32 %v3582, %v3552
      %v3584 = vadd.f32 %v3583, %v3553
      %v3585 = vadd.f32 %v3584, %v3554
      %v3586 = vadd.f32 %v3585, %v3555
      %v3587 = vadd.f32 %v3586, %v3556
      %v3588 = vadd.f32 %v3587, %v3557
      %v3589 = vadd.f32 %v3588, %v3558
      %v3590 = vadd.f32 %v3589, %v3559
      %v3591 = vadd.f32 %v3590, %v3560
      %v3592 = vadd.f32 %v3591, %v3561
      %v3593 = vadd.f32 %v3592, %v3562
      %v3594 = vrot.slane %v3593, 4
      %v3595 = vadd.f32 %v3593, %v3594
      %v3596 = vrot.slane %v3595, 2
      %v3597 = vadd.f32 %v3595, %v3596
      %v3598 = vrot.slane %v3597, 1
      %v3599 = vadd.f32 %v3597, %v3598
      %vm3600 = vcmask 1040384
      %v3601 = vsel %vm3600, %v3497, %v3599
      %3602 = vst [vmem:[%s235] sm:$0x3] %v3601
      %v3603 = vpack.c.bf16 %v3430, %v3429
      %v3604 = vpack.c.bf16 %v3432, %v3431
      %v3605 = vpack.c.bf16 %v3434, %v3433
      %v3606 = vpack.c.bf16 %v3436, %v3435
      %v3607 = vpack.c.bf16 %v3438, %v3437
      %v3608 = vpack.c.bf16 %v3440, %v3439
      %v3609 = vpack.c.bf16 %v3442, %v3441
      %v3610 = vpack.c.bf16 %v3444, %v3443
      %v3611 = vpack.c.bf16 %v3446, %v3445
      %v3612 = vpack.c.bf16 %v3448, %v3447
      %v3613 = vpack.c.bf16 %v3450, %v3449
      %v3614 = vpack.c.bf16 %v3452, %v3451
      %v3615 = vpack.c.bf16 %v3454, %v3453
      %v3616 = vpack.c.bf16 %v3456, %v3455
      %v3617 = vpack.c.bf16 %v3458, %v3457
      %v3618 = vpack.c.bf16 %v3460, %v3459
      %v3635 = vunpack.c.l.b16 %v3603
      %v3636 = vunpack.c.h.b16 %v3603
      %v3637 = vunpack.c.l.b16 %v3604
      %v3638 = vunpack.c.h.b16 %v3604
      %v3639 = vunpack.c.l.b16 %v3605
      %v3640 = vunpack.c.h.b16 %v3605
      %v3641 = vunpack.c.l.b16 %v3606
      %v3642 = vunpack.c.h.b16 %v3606
      %v3643 = vunpack.c.l.b16 %v3607
      %v3644 = vunpack.c.h.b16 %v3607
      %v3645 = vunpack.c.l.b16 %v3608
      %v3646 = vunpack.c.h.b16 %v3608
      %v3647 = vunpack.c.l.b16 %v3609
      %v3648 = vunpack.c.h.b16 %v3609
      %v3649 = vunpack.c.l.b16 %v3610
      %v3650 = vunpack.c.h.b16 %v3610
      %v3651 = vunpack.c.l.b16 %v3611
      %v3652 = vunpack.c.h.b16 %v3611
      %v3653 = vunpack.c.l.b16 %v3612
      %v3654 = vunpack.c.h.b16 %v3612
      %v3655 = vunpack.c.l.b16 %v3613
      %v3656 = vunpack.c.h.b16 %v3613
      %v3657 = vunpack.c.l.b16 %v3614
      %v3658 = vunpack.c.h.b16 %v3614
      %v3659 = vunpack.c.l.b16 %v3615
      %v3660 = vunpack.c.h.b16 %v3615
      %v3661 = vunpack.c.l.b16 %v3616
      %v3662 = vunpack.c.h.b16 %v3616
      %v3663 = vunpack.c.l.b16 %v3617
      %v3664 = vunpack.c.h.b16 %v3617
      %v3665 = vunpack.c.l.b16 %v3618
      %v3666 = vunpack.c.h.b16 %v3618
      %v3667 = vpack.c.b16 %v3635, %v3635
      %v3668 = vpack.c.b16 %v3636, %v3636
      %v3669 = vpack.c.b16 %v3637, %v3637
      %v3670 = vpack.c.b16 %v3638, %v3638
      %v3671 = vpack.c.b16 %v3639, %v3639
      %v3672 = vpack.c.b16 %v3640, %v3640
      %v3673 = vpack.c.b16 %v3641, %v3641
      %v3674 = vpack.c.b16 %v3642, %v3642
      %v3675 = vpack.c.b16 %v3643, %v3643
      %v3676 = vpack.c.b16 %v3644, %v3644
      %v3677 = vpack.c.b16 %v3645, %v3645
      %v3678 = vpack.c.b16 %v3646, %v3646
      %v3679 = vpack.c.b16 %v3647, %v3647
      %v3680 = vpack.c.b16 %v3648, %v3648
      %v3681 = vpack.c.b16 %v3649, %v3649
      %v3682 = vpack.c.b16 %v3650, %v3650
      %v3683 = vpack.c.b16 %v3651, %v3651
      %v3684 = vpack.c.b16 %v3652, %v3652
      %v3685 = vpack.c.b16 %v3653, %v3653
      %v3686 = vpack.c.b16 %v3654, %v3654
      %v3687 = vpack.c.b16 %v3655, %v3655
      %v3688 = vpack.c.b16 %v3656, %v3656
      %v3689 = vpack.c.b16 %v3657, %v3657
      %v3690 = vpack.c.b16 %v3658, %v3658
      %v3691 = vpack.c.b16 %v3659, %v3659
      %v3692 = vpack.c.b16 %v3660, %v3660
      %v3693 = vpack.c.b16 %v3661, %v3661
      %v3694 = vpack.c.b16 %v3662, %v3662
      %v3695 = vpack.c.b16 %v3663, %v3663
      %v3696 = vpack.c.b16 %v3664, %v3664
      %v3697 = vpack.c.b16 %v3665, %v3665
      %v3698 = vpack.c.b16 %v3666, %v3666
      %3731 = vst [vmem:[%s231] sm:$0xf] %v3667
      %3732 = vst [vmem:[%s231 + $0x4] sm:$0xf] %v3668
      %3733 = vst [vmem:[%s231 + $0x8] sm:$0xf] %v3669
      %3734 = vst [vmem:[%s231 + $0xc] sm:$0xf] %v3670
      %3735 = vst [vmem:[%s231 + $0x10] sm:$0xf] %v3671
      %3736 = vst [vmem:[%s231 + $0x14] sm:$0xf] %v3672
      %3737 = vst [vmem:[%s231 + $0x18] sm:$0xf] %v3673
      %3738 = vst [vmem:[%s231 + $0x1c] sm:$0xf] %v3674
      %3739 = vst [vmem:[%s231 + $0x20] sm:$0xf] %v3675
      %3740 = vst [vmem:[%s231 + $0x24] sm:$0xf] %v3676
      %3741 = vst [vmem:[%s231 + $0x28] sm:$0xf] %v3677
      %3742 = vst [vmem:[%s231 + $0x2c] sm:$0xf] %v3678
      %3743 = vst [vmem:[%s231 + $0x30] sm:$0xf] %v3679
      %3744 = vst [vmem:[%s231 + $0x34] sm:$0xf] %v3680
      %3745 = vst [vmem:[%s231 + $0x38] sm:$0xf] %v3681
      %3746 = vst [vmem:[%s231 + $0x3c] sm:$0xf] %v3682
      %3747 = vst [vmem:[%s231 + $0x40] sm:$0xf] %v3683
      %3748 = vst [vmem:[%s231 + $0x44] sm:$0xf] %v3684
      %3749 = vst [vmem:[%s231 + $0x48] sm:$0xf] %v3685
      %3750 = vst [vmem:[%s231 + $0x4c] sm:$0xf] %v3686
      %3751 = vst [vmem:[%s231 + $0x50] sm:$0xf] %v3687
      %3752 = vst [vmem:[%s231 + $0x54] sm:$0xf] %v3688
      %3753 = vst [vmem:[%s231 + $0x58] sm:$0xf] %v3689
      %3754 = vst [vmem:[%s231 + $0x5c] sm:$0xf] %v3690
      %3755 = vst [vmem:[%s231 + $0x60] sm:$0xf] %v3691
      %3756 = vst [vmem:[%s231 + $0x64] sm:$0xf] %v3692
      %3757 = vst [vmem:[%s231 + $0x68] sm:$0xf] %v3693
      %3758 = vst [vmem:[%s231 + $0x6c] sm:$0xf] %v3694
      %3759 = vst [vmem:[%s231 + $0x70] sm:$0xf] %v3695
      %3760 = vst [vmem:[%s231 + $0x74] sm:$0xf] %v3696
      %3761 = vst [vmem:[%s231 + $0x78] sm:$0xf] %v3697
      %3762 = vst [vmem:[%s231 + $0x7c] sm:$0xf] %v3698
      %p3763 = scmp.lt.s32.totalorder %s17, 1
      %s3764 = scalar_select %p3763, %s17, 1
      %s3765 = smul.addr %s3764, 32
      %s3766 = smul.addr %s3765, 4
      %s3767 = scalar_lea.vmem %s4, %s3766
      %p3768 = scmp.lt.s32.totalorder %s17, 1
      %s3769 = scalar_select %p3768, %s17, 1
      %s3770 = smul.addr %s3769, 2
      %s3771 = scalar_lea.vmem %s5, %s3770
      // Predicated region
      $region37: #{basic_block_forward.3} parent=35 // pred_check
        %p3772 = pneg %p124
      $region38: #{basic_block_forward.3} parent=35 // pred_check_branch
        %3774 = sbr.rel (%p3772) target = $region40
      $region39: #{basic_block_forward.3} parent=35 // pred_region
        _
      $region40: #{basic_block_forward.3} parent=35 // pred_fallthru
        _
      // Predicated region
      $region41: #{basic_block_forward.3} parent=35 // pred_check
        %p3775 = pneg %p150
      $region42: #{basic_block_forward.3} parent=35 // pred_check_branch
        %3777 = sbr.rel (%p3775) target = $region44
      $region43: #{basic_block_forward.3} parent=35 // pred_region
        _
      $region44: #{basic_block_forward.3} parent=35 // pred_fallthru
        _
    $region36: #{basic_block_forward.3} parent=5 // pred_fallthru
      _
    %p3778 = scmp.le.s32.totalorder 2, %s12
    // Predicated region
    $region45: #{basic_block_forward.3} parent=5 // pred_check
      %p3779 = pneg %p3778
    $region46: #{basic_block_forward.3} parent=5 // pred_check_branch
      %3781 = sbr.rel (%p3779) target = $region48
    $region47: #{basic_block_forward.3} parent=5 // pred_region
      %s3782 = ssub.s32 %s12, 2
      // Predicated region
      $region49: #{basic_block_forward.3} parent=47 // pred_check
        %p3783 = pneg %p130
      $region50: #{basic_block_forward.3} parent=47 // pred_check_branch
        %3785 = sbr.rel (%p3783) target = $region52
      $region51: #{basic_block_forward.3} parent=47 // pred_region
        %p3786 = scmp.lt.s32.totalorder %s18, 1
        %s3787 = scalar_select %p3786, %s18, 1
        %s3788 = smul.addr %s3787, 32
        %s3789 = smul.addr %s3788, 4
        %s3790 = scalar_lea.vmem %s4, %s3789
      $region52: #{basic_block_forward.3} parent=47 // pred_fallthru
        _
      // Predicated region
      $region53: #{basic_block_forward.3} parent=47 // pred_check
        %p3791 = pneg %p156
      $region54: #{basic_block_forward.3} parent=47 // pred_check_branch
        %3793 = sbr.rel (%p3791) target = $region56
      $region55: #{basic_block_forward.3} parent=47 // pred_region
        %p3794 = scmp.lt.s32.totalorder %s18, 1
        %s3795 = scalar_select %p3794, %s18, 1
        %s3796 = smul.addr %s3795, 2
        %s3797 = scalar_lea.vmem %s5, %s3796
      $region56: #{basic_block_forward.3} parent=47 // pred_fallthru
        _
    $region48: #{basic_block_forward.3} parent=5 // pred_fallthru
      _
  $region6: #{basic_block_forward.3} parent=0 // loop_footer
    %s16 = sadd.s32 1, %s12
  $region7: #{basic_block_forward.3} parent=0 // loop_footer_branch
    %11 = sbr.rel target = $region3
  $region8: #{basic_block_forward.3} parent=0 // loop_exit
    _

</llo_original>
